<compile_context>
chip_gen: v7x
topology: tpu7x:2x2x1
jax: 0.10.0
libtpu: 0.0.40
codegen_flags: <defaults>
</compile_context>

<pallas_src>
import math
from functools import partial

import jax
import jax.numpy as jnp
import numpy as np
from jax import lax
from jax.experimental import pallas as pl
from jax.experimental.pallas import tpu as pltpu

_NEG_INF = -1e30


def _vmem_limit_bytes():
    """Generation-aware VMEM limit (v5e/v6e: ~108 MiB, v7x: ~54 MiB), with a safe fallback."""
    try:
        info = pltpu.get_tpu_info()
        cap = int(getattr(info, "vmem_capacity_bytes", 64 * 1024 * 1024))
    except Exception:
        cap = 64 * 1024 * 1024
    return max(32 * 1024 * 1024, min(int(cap * 0.85), 112 * 1024 * 1024))


# ----------------------------- elementwise helpers (f32) -----------------------------

def _erf(x, recip=None):
    # Abramowitz & Stegun 7.1.26 polynomial (|abs err| < 1.5e-7); matches nn.GELU()'s erf.
    a1, a2, a3, a4, a5 = 0.254829592, -0.284496736, 1.421413741, -1.453152027, 1.061405429
    p = 0.3275911
    sgn = jnp.where(x >= 0.0, 1.0, -1.0)
    ax = jnp.abs(x)
    u = 1.0 + p * ax
    t = recip(u) if recip is not None else 1.0 / u
    poly = ((((a5 * t + a4) * t + a3) * t + a2) * t + a1) * t
    return sgn * (1.0 - poly * jnp.exp(-ax * ax))


def _gelu(x, recip=None):
    return 0.5 * x * (1.0 + _erf(x * (1.0 / math.sqrt(2.0)), recip))


def _layer_norm(v, w, b, eps=1e-5):
    mu = jnp.mean(v, axis=-1, keepdims=True)
    var = jnp.mean((v - mu) ** 2, axis=-1, keepdims=True)
    return (v - mu) * lax.rsqrt(var + eps) * w + b


# ------------------- skew (relative-position shift), two implementations -------------------
# Per row r (query index i = r mod T):  out[r, j] = qer[r, (j + T - 1 - i) mod T],
# i.e. a right-rotation of row r by (1 + i) mod T.  Wrapped (j > i) entries are causally masked.

def _skew_roll(qer2, seq_len):
    del seq_len
    return pltpu.roll(qer2, shift=1, axis=1, stride=1, stride_axis=0)  # one XLU op


def _skew_barrel(qer2, seq_len):
    # log2(T)-step barrel rotation; guaranteed correct on any backend (fallback only).
    T = seq_len
    R = qer2.shape[0]
    row = lax.broadcasted_iota(jnp.int32, (R, 1), 0) % T
    amt = (T - 1) - row
    y = qer2
    b = 0
    while (1 << b) < T:
        s = 1 << b
        rolled = jnp.concatenate([y[:, s:], y[:, :s]], axis=1)
        y = jnp.where(((amt >> b) & 1) == 1, rolled, y)
        b += 1
    return y


_ROLL_PROBE_CACHE = {}


def _roll_skew_is_supported(seq_len):
    """Verify pltpu.roll's strided-rotate semantics on-device (tiny probe, cached per T)."""
    if seq_len in _ROLL_PROBE_CACHE:
        return _ROLL_PROBE_CACHE[seq_len]
    T = seq_len
    rows = max(2 * T, 8)
    x_np = np.arange(rows * T, dtype=np.float32).reshape(rows, T)

    def k(x_ref, o_ref):
        o_ref[...] = _skew_roll(x_ref[...], T)

    try:
        y = pl.pallas_call(
            k, out_shape=jax.ShapeDtypeStruct((rows, T), jnp.float32)
        )(jnp.asarray(x_np))
        y = np.asarray(jax.device_get(y))
        want = np.stack([np.roll(x_np[r], (1 + r) % T) for r in range(rows)])
        ok = bool(np.array_equal(y, want))
    except Exception:
        ok = False
    _ROLL_PROBE_CACHE[seq_len] = ok
    return ok


# ----------------------------- fused transformer-stack kernel -----------------------------

def _stack_kernel(x_ref, mask_ref, ln1w_ref, ln1b_ref, wqkv_ref, bqkv_ref, ert_ref,
                  wo_ref, bo_ref, ln2w_ref, ln2b_ref, w1_ref, b1_ref, w2_ref, b2_ref,
                  o_ref, res_ref, *, n_heads, use_roll):
    layer = pl.program_id(1)
    n_layers = pl.num_programs(1)

    # Layer 0: seed the resident f32 residual-stream scratch from the embeddings.
    @pl.when(layer == 0)
    def _():
        res_ref[...] = x_ref[...]

    x = res_ref[...]                                   # (Bt, T, D) f32, resident across depth
    Bt, T, D = x.shape
    H = n_heads
    hd = D // H
    bf16, f32 = jnp.bfloat16, jnp.float32
    scale = 1.0 / math.sqrt(hd)

    # ---------------- attention branch: x = x + Wo(attn(ln1(x))) ----------------
    xn = _layer_norm(x, ln1w_ref[0], ln1b_ref[0])
    xb = xn.reshape(Bt * T, D).astype(bf16)
    # One fused (Bt*T, D) @ (D, 3D) matmul for Q|K|V (no per-head broadcast of xn).
    qkv = jnp.dot(xb, wqkv_ref[0], preferred_element_type=f32) + bqkv_ref[0]   # (Bt*T, 3D)
    q2 = qkv[:, :D] * scale            # pre-scale Q: covers both QK^T and Q Er^T terms
    k2 = qkv[:, D:2 * D]
    v2 = qkv[:, 2 * D:]

    def head_stack(m):                 # (Bt*T, D) -> (Bt*H, T, hd) bf16, heads on leading axis
        # Static slices; lane-aligned (free) when hd % 128 == 0, small relayouts otherwise.
        return jnp.stack([m[bb * T:(bb + 1) * T, h * hd:(h + 1) * hd]
                          for bb in range(Bt) for h in range(H)]).astype(bf16)

    q = head_stack(q2)
    k = head_stack(k2)
    v = head_stack(v2)

    scores = jnp.einsum("hqd,hkd->hqk", q, k, preferred_element_type=f32)      # (Bt*H, T, T)
    qer = jnp.dot(q.reshape(Bt * H * T, hd), ert_ref[0],
                  preferred_element_type=f32)                                  # (Bt*H*T, T)
    skew = _skew_roll(qer, T) if use_roll else _skew_barrel(qer, T)
    srel = skew.reshape(Bt * H, T, T)

    att = scores + srel + mask_ref[...]                 # additive causal mask (0 / -1e30)
    att = att - jnp.max(att, axis=-1, keepdims=True)
    p = jnp.exp(att)
    l = jnp.sum(p, axis=-1, keepdims=True)              # (Bt*H, T, 1)
    ctx = jnp.einsum("hqk,hkd->hqd", p.astype(bf16), v,
                     preferred_element_type=f32)         # (Bt*H, T, hd), unnormalized
    ctx = (ctx * pl.reciprocal(l, approx=True)).astype(bf16)   # normalize AFTER PV (EUP recip)

    # Merge heads along lanes -> one big (Bt*T, D) @ (D, D) output projection.
    ctx2 = jnp.concatenate(
        [jnp.concatenate([ctx[bb * H + h] for h in range(H)], axis=-1) for bb in range(Bt)],
        axis=0)                                          # (Bt*T, D) bf16
    y = jnp.dot(ctx2, wo_ref[0], preferred_element_type=f32) + bo_ref[0]       # (Bt*T, D)
    x = x + y.reshape(Bt, T, D)

    # ---------------- MLP branch: x = x + W2 gelu(W1 ln2(x)) ----------------
    xn2 = _layer_norm(x, ln2w_ref[0], ln2b_ref[0]).reshape(Bt * T, D).astype(bf16)
    h1 = _gelu(jnp.dot(xn2, w1_ref[0], preferred_element_type=f32) + b1_ref[0],
               recip=lambda u: pl.reciprocal(u, approx=True))
    h2 = jnp.dot(h1.astype(bf16), w2_ref[0], preferred_element_type=f32) + b2_ref[0]
    x = x + h2.reshape(Bt, T, D)

    res_ref[...] = x                                     # carry stays f32 in VMEM

    @pl.when(layer == n_layers - 1)
    def _():
        o_ref[...] = x.astype(o_ref.dtype)               # single bf16 HBM writeback


def transformer_stack(x, sp, n_heads, use_roll, batch_block=None):
    B, T, D = x.shape
    assert D % n_heads == 0
    depth = sp["ln1_w"].shape[0]
    if batch_block is None:
        # Amortizes per-layer weight DMA over Bt batch rows; tune larger on v5e/v6e (128 MiB
        # VMEM), keep small on v7x (64 MiB) and let megacore split the batch-block grid axis.
        batch_block = 2 if B % 2 == 0 else 1
    Bt = batch_block
    assert B % Bt == 0, (B, Bt)

    weights = (sp["ln1_w"], sp["ln1_b"], sp["w_qkv"], sp["b_qkv"], sp["er_t"],
               sp["wo"], sp["bo"], sp["ln2_w"], sp["ln2_b"],
               sp["w1"], sp["b1"], sp["w2"], sp["b2"])

    def layer_spec(a):
        zeros = (0,) * (a.ndim - 1)
        return pl.BlockSpec((1,) + a.shape[1:], lambda b, l, _z=zeros: (l,) + _z)

    xio_spec = pl.BlockSpec((Bt, T, D), lambda b, l: (b, 0, 0))
    mask_spec = pl.BlockSpec((T, T), lambda b, l: (0, 0))   # constant block -> fetched once

    return pl.pallas_call(
        partial(_stack_kernel, n_heads=n_heads, use_roll=use_roll),
        out_shape=jax.ShapeDtypeStruct((B, T, D), jnp.bfloat16),
        grid_spec=pltpu.PrefetchScalarGridSpec(
            num_scalar_prefetch=0,
            grid=(B // Bt, depth),            # depth innermost: next layer's weights prefetched
            in_specs=[xio_spec, mask_spec] + [layer_spec(w) for w in weights],
            out_specs=pl.BlockSpec((Bt, T, D), lambda b, l: (b, 0, 0)),
            scratch_shapes=[pltpu.VMEM((Bt, T, D), jnp.float32)],   # resident f32 residual
        ),
        compiler_params=pltpu.CompilerParams(
            dimension_semantics=("parallel", "arbitrary"),
            vmem_limit_bytes=_vmem_limit_bytes(),
        ),
    )(x, sp["attn_mask"], *weights)


# ----------------------------- final vocab projection (V-tiled) -----------------------------

def _final_linear_kernel(x_ref, w_ref, b_ref, o_ref):
    o_ref[0] = (jnp.dot(x_ref[0], w_ref[...], preferred_element_type=jnp.float32)
                + b_ref[...]).astype(o_ref.dtype)


def final_linear(x_bf16, w_bf16, b, tile_v=1024):
    B, T, D = x_bf16.shape
    V = w_bf16.shape[1]
    tv = V if V <= tile_v else tile_v     # prefer V (or tv) a multiple of 128 for real vocabs
    nv = pl.cdiv(V, tv)
    return pl.pallas_call(
        _final_linear_kernel,
        out_shape=jax.ShapeDtypeStruct((B, T, V), jnp.bfloat16),   # bf16 logits: halve HBM store
        grid_spec=pltpu.PrefetchScalarGridSpec(
            num_scalar_prefetch=0,
            grid=(B, nv),
            in_specs=[pl.BlockSpec((1, T, D), lambda b, j: (b, 0, 0)),
                      pl.BlockSpec((D, tv), lambda b, j: (0, j)),
                      pl.BlockSpec((1, tv), lambda b, j: (0, j))],
            out_specs=pl.BlockSpec((1, T, tv), lambda b, j: (b, 0, j)),
        ),
        compiler_params=pltpu.CompilerParams(
            dimension_semantics=("parallel", "parallel"),
            vmem_limit_bytes=_vmem_limit_bytes(),
        ),
    )(x_bf16, w_bf16, b)


# ----------------------------- parameter plumbing -----------------------------

def init_params(key, emb_dim, emb_num, block_size, n_heads, depth):
    # Deterministic synthetic init mimicking minGPT-style _init_weights:
    # weights ~ N(0, 0.02), biases = 0, LayerNorm weight=1 / bias=0, Er ~ N(0, 1).
    hd = emb_dim // n_heads
    keys = iter(jax.random.split(key, 2 + depth * 7))

    def linw(fan_in, fan_out):
        return jax.random.normal(next(keys), (fan_in, fan_out), jnp.float32) * 0.02

    params = {
        "block_size": block_size,
        "tok_emb": jax.random.normal(next(keys), (emb_num, emb_dim), jnp.float32) * 0.02,
        "lin_w": linw(emb_dim, emb_num),
        "lin_b": jnp.zeros((1, emb_num), jnp.float32),
        "layers": [],
    }
    for _ in range(depth):
        lp = {
            "ln1_w": jnp.ones((1, emb_dim), jnp.float32),
            "ln1_b": jnp.zeros((1, emb_dim), jnp.float32),
            "wq": linw(emb_dim, emb_dim), "bq": jnp.zeros((1, emb_dim), jnp.float32),
            "wk": linw(emb_dim, emb_dim), "bk": jnp.zeros((1, emb_dim), jnp.float32),
            "wv": linw(emb_dim, emb_dim), "bv": jnp.zeros((1, emb_dim), jnp.float32),
            "er": jax.random.normal(next(keys), (block_size, hd), jnp.float32),
            "wo": linw(emb_dim, emb_dim), "bo": jnp.zeros((1, emb_dim), jnp.float32),
            "ln2_w": jnp.ones((1, emb_dim), jnp.float32),
            "ln2_b": jnp.zeros((1, emb_dim), jnp.float32),
            "w1": linw(emb_dim, 4 * emb_dim), "b1": jnp.zeros((1, 4 * emb_dim), jnp.float32),
            "w2": linw(4 * emb_dim, emb_dim), "b2": jnp.zeros((1, emb_dim), jnp.float32),
        }
        params["layers"].append(lp)
    return params


def prepare_stacked_params(params, seq_len):
    """One-time weight prep (hoisted out of the forward): stack per-layer weights along a
    leading depth axis, fuse Q|K|V columns, cast matmul weights to bf16, and precompute the
    additive causal mask for this sequence length."""
    bs = params["block_size"]
    T = seq_len
    bf16 = jnp.bfloat16

    def stack(fn):
        return jnp.stack([fn(lp) for lp in params["layers"]])

    i = np.arange(T)[:, None]
    j = np.arange(T)[None, :]
    mask = jnp.asarray(np.where(j <= i, 0.0, _NEG_INF).astype(np.float32))

    return {
        "tok_emb": params["tok_emb"],
        "attn_mask": mask,                                                     # (T, T) additive
        "ln1_w": stack(lambda lp: lp["ln1_w"]),
        "ln1_b": stack(lambda lp: lp["ln1_b"]),
        "w_qkv": stack(lambda lp: jnp.concatenate(
            [lp["wq"], lp["wk"], lp["wv"]], axis=1).astype(bf16)),             # (depth, D, 3D)
        "b_qkv": stack(lambda lp: jnp.concatenate(
            [lp["bq"], lp["bk"], lp["bv"]], axis=1)),                          # (depth, 1, 3D)
        "er_t": stack(lambda lp: lp["er"][bs - T:, :].T.astype(bf16)),         # (depth, hd, T)
        "wo": stack(lambda lp: lp["wo"].astype(bf16)),                         # (depth, D, D)
        "bo": stack(lambda lp: lp["bo"]),
        "ln2_w": stack(lambda lp: lp["ln2_w"]),
        "ln2_b": stack(lambda lp: lp["ln2_b"]),
        "w1": stack(lambda lp: lp["w1"].astype(bf16)),
        "b1": stack(lambda lp: lp["b1"]),
        "w2": stack(lambda lp: lp["w2"].astype(bf16)),
        "b2": stack(lambda lp: lp["b2"]),
        "lin_w": params["lin_w"].astype(bf16),
        "lin_b": params["lin_b"],
    }


@partial(jax.jit, static_argnames=("n_heads", "use_roll", "batch_block"))
def rel_emb_transformer_forward(tokens, sp, *, n_heads, use_roll, batch_block=None):
    # TODO(synk): nn.Dropout(0.1) is identity here (eval-mode forward).
    x = jnp.take(sp["tok_emb"], tokens, axis=0).astype(jnp.float32)   # embedding (JAX glue)
    x = transformer_stack(x, sp, n_heads, use_roll, batch_block)      # (B, T, D) bf16
    return final_linear(x, sp["lin_w"], sp["lin_b"])                  # (B, T, V) bf16


# ----------------------------- pure-JAX reference (same math) -----------------------------

def reference_forward(tokens, params, n_heads):
    """Pure-JAX mirror of the model math (bf16 matmul operands, f32 elsewhere)."""
    bs = params["block_size"]
    T = tokens.shape[1]
    D = params["tok_emb"].shape[1]
    H, hd = n_heads, D // n_heads
    bf16, f32 = jnp.bfloat16, jnp.float32

    i_idx = jnp.arange(T)[:, None]
    j_idx = jnp.arange(T)[None, :]
    causal = j_idx <= i_idx
    rel_idx = jnp.clip(jnp.broadcast_to(j_idx - i_idx + T - 1, (T, T)), 0, T - 1)

    def dot(a, w):
        return jnp.dot(a.astype(bf16), w.astype(bf16), preferred_element_type=f32)

    x = jnp.take(params["tok_emb"], tokens, axis=0).astype(f32)
    for lp in params["layers"]:
        er = lp["er"][bs - T:, :]

        def block(xe, lp=lp, er=er):
            xn = _layer_norm(xe, lp["ln1_w"], lp["ln1_b"])
            q = dot(xn, lp["wq"]) + lp["bq"]
            k = dot(xn, lp["wk"]) + lp["bk"]
            v = dot(xn, lp["wv"]) + lp["bv"]
            outs = []
            for h in range(H):
                sl = slice(h * hd, (h + 1) * hd)
                qh, kh, vh = q[:, sl], k[:, sl], v[:, sl]
                s = dot(qh, kh.T)
                qer = dot(qh, er.T)
                srel = jnp.take_along_axis(qer, rel_idx, axis=1)
                att = jnp.where(causal, (s + srel) * f32(1.0 / math.sqrt(hd)), f32(_NEG_INF))
                att = att - att.max(-1, keepdims=True)
                p = jnp.exp(att)
                p = p * (1.0 / p.sum(-1, keepdims=True))
                outs.append(dot(p, vh))
            y = dot(jnp.concatenate(outs, axis=-1), lp["wo"]) + lp["bo"]
            xe = xe + y
            xn2 = _layer_norm(xe, lp["ln2_w"], lp["ln2_b"])
            h1 = _gelu(dot(xn2, lp["w1"]) + lp["b1"])
            return xe + dot(h1, lp["w2"]) + lp["b2"]

        x = jax.vmap(block)(x)

    return jnp.dot(x.astype(bf16), params["lin_w"].astype(bf16),
                   preferred_element_type=f32) + params["lin_b"]


if __name__ == "__main__":
    emb_dim, emb_num, block_size, n_heads, depth = 32, 64, 8, 2, 5
    key = jax.random.PRNGKey(0)
    pkey, tkey = jax.random.split(key)
    params = init_params(pkey, emb_dim, emb_num, block_size, n_heads, depth)
    tokens = jax.random.randint(tkey, (2, block_size), 0, emb_num, dtype=jnp.int32)

    T = tokens.shape[1]
    use_roll = _roll_skew_is_supported(T)          # cached on-device semantics probe
    sp = prepare_stacked_params(params, T)         # one-time weight prep (hoisted)

    logits = rel_emb_transformer_forward(tokens, sp, n_heads=n_heads, use_roll=use_roll)
    logits = jax.block_until_ready(logits)
    assert logits.shape == (2, block_size, emb_num), logits.shape
    logits_f32 = np.asarray(jax.device_get(logits.astype(jnp.float32)))
    assert np.all(np.isfinite(logits_f32))

    ref = jax.block_until_ready(reference_forward(tokens, params, n_heads))
    np.testing.assert_allclose(logits_f32, np.asarray(ref), rtol=2e-2, atol=2e-3)
    print("KERNEL_OK")
</pallas_src>

<mosaic_0001>
module attributes {stable_mosaic.version = 11 : i64} {
  func.func @k(%arg0: memref<16x8xf32, #tpu.memory_space<vmem>>, %arg1: memref<16x8xf32, #tpu.memory_space<vmem>>) attributes {dimension_semantics = [], scalar_prefetch = 0 : i64, scratch_operands = 0 : i64, tpu.core_type = #tpu.core_type<tc>} {
    %c0 = arith.constant 0 : index
    %c0_0 = arith.constant 0 : index
    %0 = vector.load %arg0[%c0, %c0_0] : memref<16x8xf32, #tpu.memory_space<vmem>>, vector<16x8xf32>
    %c1_i32 = arith.constant 1 : i32
    %1 = tpu.dynamic_rotate %0 by %c1_i32 dim 1 {stride = 1 : si32, stride_dimension = 0 : si32} : vector<16x8xf32>, i32 -> vector<16x8xf32>
    %c0_1 = arith.constant 0 : index
    %c0_2 = arith.constant 0 : index
    %2 = vector.load %arg1[%c0_1, %c0_2] : memref<16x8xf32, #tpu.memory_space<vmem>>, vector<16x8xf32>
    tpu.vector_store %arg1[%c0_1, %c0_2], %1 {strides = array<i32>} : memref<16x8xf32, #tpu.memory_space<vmem>>, vector<16x8xf32>,
    return
  }
}

module attributes {stable_mosaic.version = 11 : i64} {
  func.func @_final_linear_kernel(%arg0: i32, %arg1: i32, %arg2: memref<1x8x32xbf16, #tpu.memory_space<vmem>>, %arg3: memref<32x64xbf16, #tpu.memory_space<vmem>>, %arg4: memref<1x64xf32, #tpu.memory_space<vmem>>, %arg5: memref<1x8x64xbf16, #tpu.memory_space<vmem>>) attributes {dimension_semantics = [#tpu.dimension_semantics<parallel>, #tpu.dimension_semantics<parallel>], iteration_bounds = array<i64: 2, 1>, scalar_prefetch = 0 : i64, scratch_operands = 0 : i64, tpu.core_type = #tpu.core_type<tc>, window_params = [{transform_indices = @transform_0, window_bounds = array<i64: 1, 8, 32>}, {transform_indices = @transform_1, window_bounds = array<i64: 32, 64>}, {transform_indices = @transform_2, window_bounds = array<i64: 1, 64>}, {transform_indices = @transform_3, window_bounds = array<i64: 1, 8, 64>}]} {
    %c0 = arith.constant 0 : index
    %c0_0 = arith.constant 0 : index
    %c0_1 = arith.constant 0 : index
    %0 = vector.load %arg2[%c0, %c0_0, %c0_1] : memref<1x8x32xbf16, #tpu.memory_space<vmem>>, vector<1x8x32xbf16>
    %1 = vector.shape_cast %0 : vector<1x8x32xbf16> to vector<8x32xbf16>
    %c0_2 = arith.constant 0 : index
    %c0_3 = arith.constant 0 : index
    %2 = vector.load %arg3[%c0_2, %c0_3] : memref<32x64xbf16, #tpu.memory_space<vmem>>, vector<32x64xbf16>
    %cst = arith.constant dense<0.000000e+00> : vector<8x64xf32>
    %3 = tpu.matmul %1, %2, %cst {dimension_numbers = #tpu.dot_dimension_numbers<[1], [0], [0], [1], [0, 0, 1, 1], [], []>} : vector<8x32xbf16>, vector<32x64xbf16>, vector<8x64xf32> -> vector<8x64xf32>
    %c0_4 = arith.constant 0 : index
    %c0_5 = arith.constant 0 : index
    %4 = vector.load %arg4[%c0_4, %c0_5] : memref<1x64xf32, #tpu.memory_space<vmem>>, vector<1x64xf32>
    %5 = vector.broadcast %4 : vector<1x64xf32> to vector<8x64xf32>
    %6 = arith.addf %3, %5 : vector<8x64xf32>
    %7 = arith.truncf %6 : vector<8x64xf32> to vector<8x64xbf16>
    %c0_6 = arith.constant 0 : index
    %c0_7 = arith.constant 0 : index
    %c0_8 = arith.constant 0 : index
    %8 = vector.load %arg5[%c0_6, %c0_7, %c0_8] : memref<1x8x64xbf16, #tpu.memory_space<vmem>>, vector<1x8x64xbf16>
    %9 = vector.shape_cast %8 : vector<1x8x64xbf16> to vector<8x64xbf16>
    %10 = vector.shape_cast %7 : vector<8x64xbf16> to vector<1x8x64xbf16>
    tpu.vector_store %arg5[%c0_6, %c0_7, %c0_8], %10 {strides = array<i32>} : memref<1x8x64xbf16, #tpu.memory_space<vmem>>, vector<1x8x64xbf16>,
    return
  }
  func.func @transform_0(%arg0: i32, %arg1: i32) -> (i32, i32, i32) {
    %c0_i32 = arith.constant 0 : i32
    %c0_i32_0 = arith.constant 0 : i32
    %c0_i32_1 = arith.constant 0 : i32
    return %arg0, %c0_i32, %c0_i32_0 : i32, i32, i32
  }
  func.func @transform_1(%arg0: i32, %arg1: i32) -> (i32, i32) {
    %c0_i32 = arith.constant 0 : i32
    %c0_i32_0 = arith.constant 0 : i32
    return %c0_i32, %arg1 : i32, i32
  }
  func.func @transform_2(%arg0: i32, %arg1: i32) -> (i32, i32) {
    %c0_i32 = arith.constant 0 : i32
    %c0_i32_0 = arith.constant 0 : i32
    return %c0_i32, %arg1 : i32, i32
  }
  func.func @transform_3(%arg0: i32, %arg1: i32) -> (i32, i32, i32) {
    %c0_i32 = arith.constant 0 : i32
    %c0_i32_0 = arith.constant 0 : i32
    return %arg0, %c0_i32, %arg1 : i32, i32, i32
  }
}

module attributes {stable_mosaic.version = 11 : i64} {
  func.func @_stack_kernel(%arg0: i32, %arg1: i32, %arg2: memref<2x8x32xf32, #tpu.memory_space<vmem>>, %arg3: memref<8x8xf32, #tpu.memory_space<vmem>>, %arg4: memref<1x1x32xf32, #tpu.memory_space<vmem>>, %arg5: memref<1x1x32xf32, #tpu.memory_space<vmem>>, %arg6: memref<1x32x96xbf16, #tpu.memory_space<vmem>>, %arg7: memref<1x1x96xf32, #tpu.memory_space<vmem>>, %arg8: memref<1x16x8xbf16, #tpu.memory_space<vmem>>, %arg9: memref<1x32x32xbf16, #tpu.memory_space<vmem>>, %arg10: memref<1x1x32xf32, #tpu.memory_space<vmem>>, %arg11: memref<1x1x32xf32, #tpu.memory_space<vmem>>, %arg12: memref<1x1x32xf32, #tpu.memory_space<vmem>>, %arg13: memref<1x32x128xbf16, #tpu.memory_space<vmem>>, %arg14: memref<1x1x128xf32, #tpu.memory_space<vmem>>, %arg15: memref<1x128x32xbf16, #tpu.memory_space<vmem>>, %arg16: memref<1x1x32xf32, #tpu.memory_space<vmem>>, %arg17: memref<2x8x32xbf16, #tpu.memory_space<vmem>>, %arg18: memref<2x8x32xf32, #tpu.memory_space<vmem>>) attributes {dimension_semantics = [#tpu.dimension_semantics<parallel>, #tpu.dimension_semantics<arbitrary>], iteration_bounds = array<i64: 1, 5>, scalar_prefetch = 0 : i64, scratch_operands = 1 : i64, tpu.core_type = #tpu.core_type<tc>, window_params = [{transform_indices = @transform_0, window_bounds = array<i64: 2, 8, 32>}, {pipeline_mode = #tpu.pipeline_mode<synchronous>, transform_indices = @transform_1, window_bounds = array<i64: 8, 8>}, {transform_indices = @transform_2, window_bounds = array<i64: 1, 1, 32>}, {transform_indices = @transform_3, window_bounds = array<i64: 1, 1, 32>}, {transform_indices = @transform_4, window_bounds = array<i64: 1, 32, 96>}, {transform_indices = @transform_5, window_bounds = array<i64: 1, 1, 96>}, {transform_indices = @transform_6, window_bounds = array<i64: 1, 16, 8>}, {transform_indices = @transform_7, window_bounds = array<i64: 1, 32, 32>}, {transform_indices = @transform_8, window_bounds = array<i64: 1, 1, 32>}, {transform_indices = @transform_9, window_bounds = array<i64: 1, 1, 32>}, {transform_indices = @transform_10, window_bounds = array<i64: 1, 1, 32>}, {transform_indices = @transform_11, window_bounds = array<i64: 1, 32, 128>}, {transform_indices = @transform_12, window_bounds = array<i64: 1, 1, 128>}, {transform_indices = @transform_13, window_bounds = array<i64: 1, 128, 32>}, {transform_indices = @transform_14, window_bounds = array<i64: 1, 1, 32>}, {transform_indices = @transform_15, window_bounds = array<i64: 2, 8, 32>}]} {
    %c0_i32 = arith.constant 0 : i32
    %0 = arith.cmpi eq, %arg1, %c0_i32 : i32
    %1 = arith.extui %0 : i1 to i32
    %c0_i32_0 = arith.constant 0 : i32
    %2 = arith.cmpi ne, %1, %c0_i32_0 : i32
    scf.if %2 {
      %c0_94 = arith.constant 0 : index
      %c0_95 = arith.constant 0 : index
      %c0_96 = arith.constant 0 : index
      %266 = vector.load %arg2[%c0_94, %c0_95, %c0_96] : memref<2x8x32xf32, #tpu.memory_space<vmem>>, vector<2x8x32xf32>
      %c0_97 = arith.constant 0 : index
      %c0_98 = arith.constant 0 : index
      %c0_99 = arith.constant 0 : index
      %267 = vector.load %arg18[%c0_97, %c0_98, %c0_99] : memref<2x8x32xf32, #tpu.memory_space<vmem>>, vector<2x8x32xf32>
      tpu.vector_store %arg18[%c0_97, %c0_98, %c0_99], %266 {strides = array<i32>} : memref<2x8x32xf32, #tpu.memory_space<vmem>>, vector<2x8x32xf32>,
    } else {
    }
    %c0 = arith.constant 0 : index
    %c0_1 = arith.constant 0 : index
    %c0_2 = arith.constant 0 : index
    %3 = vector.load %arg18[%c0, %c0_1, %c0_2] : memref<2x8x32xf32, #tpu.memory_space<vmem>>, vector<2x8x32xf32>
    %c0_3 = arith.constant 0 : index
    %c0_4 = arith.constant 0 : index
    %c0_5 = arith.constant 0 : index
    %4 = vector.load %arg4[%c0_3, %c0_4, %c0_5] : memref<1x1x32xf32, #tpu.memory_space<vmem>>, vector<1x1x32xf32>
    %5 = vector.shape_cast %4 : vector<1x1x32xf32> to vector<1x32xf32>
    %c0_6 = arith.constant 0 : index
    %c0_7 = arith.constant 0 : index
    %c0_8 = arith.constant 0 : index
    %6 = vector.load %arg5[%c0_6, %c0_7, %c0_8] : memref<1x1x32xf32, #tpu.memory_space<vmem>>, vector<1x1x32xf32>
    %7 = vector.shape_cast %6 : vector<1x1x32xf32> to vector<1x32xf32>
    %cst = arith.constant dense<0.000000e+00> : vector<2x8xf32>
    %8 = vector.multi_reduction <add>, %3, %cst [2] : vector<2x8x32xf32> to vector<2x8xf32>
    %9 = vector.shape_cast %8 : vector<2x8xf32> to vector<2x8x1xf32>
    %cst_9 = arith.constant 3.200000e+01 : f32
    %10 = vector.broadcast %cst_9 : f32 to vector<2x8x1xf32>
    %11 = arith.divf %9, %10 : vector<2x8x1xf32>
    %12 = vector.broadcast %11 : vector<2x8x1xf32> to vector<2x8x32xf32>
    %13 = arith.subf %3, %12 : vector<2x8x32xf32>
    %14 = arith.mulf %13, %13 : vector<2x8x32xf32>
    %cst_10 = arith.constant dense<0.000000e+00> : vector<2x8xf32>
    %15 = vector.multi_reduction <add>, %14, %cst_10 [2] : vector<2x8x32xf32> to vector<2x8xf32>
    %16 = vector.shape_cast %15 : vector<2x8xf32> to vector<2x8x1xf32>
    %cst_11 = arith.constant 3.200000e+01 : f32
    %17 = vector.broadcast %cst_11 : f32 to vector<2x8x1xf32>
    %18 = arith.divf %16, %17 : vector<2x8x1xf32>
    %19 = vector.broadcast %11 : vector<2x8x1xf32> to vector<2x8x32xf32>
    %20 = arith.subf %3, %19 : vector<2x8x32xf32>
    %cst_12 = arith.constant 9.99999974E-6 : f32
    %21 = vector.broadcast %cst_12 : f32 to vector<2x8x1xf32>
    %22 = arith.addf %18, %21 : vector<2x8x1xf32>
    %23 = math.rsqrt %22 : vector<2x8x1xf32>
    %24 = vector.broadcast %23 : vector<2x8x1xf32> to vector<2x8x32xf32>
    %25 = arith.mulf %20, %24 : vector<2x8x32xf32>
    %26 = vector.shape_cast %5 : vector<1x32xf32> to vector<1x1x32xf32>
    %27 = vector.broadcast %26 : vector<1x1x32xf32> to vector<2x8x32xf32>
    %28 = arith.mulf %25, %27 : vector<2x8x32xf32>
    %29 = vector.shape_cast %7 : vector<1x32xf32> to vector<1x1x32xf32>
    %30 = vector.broadcast %29 : vector<1x1x32xf32> to vector<2x8x32xf32>
    %31 = arith.addf %28, %30 : vector<2x8x32xf32>
    %32 = vector.shape_cast %31 : vector<2x8x32xf32> to vector<16x32xf32>
    %33 = arith.truncf %32 : vector<16x32xf32> to vector<16x32xbf16>
    %c0_13 = arith.constant 0 : index
    %c0_14 = arith.constant 0 : index
    %c0_15 = arith.constant 0 : index
    %34 = vector.load %arg6[%c0_13, %c0_14, %c0_15] : memref<1x32x96xbf16, #tpu.memory_space<vmem>>, vector<1x32x96xbf16>
    %35 = vector.shape_cast %34 : vector<1x32x96xbf16> to vector<32x96xbf16>
    %cst_16 = arith.constant dense<0.000000e+00> : vector<16x96xf32>
    %36 = tpu.matmul %33, %35, %cst_16 {dimension_numbers = #tpu.dot_dimension_numbers<[1], [0], [0], [1], [0, 0, 1, 1], [], []>} : vector<16x32xbf16>, vector<32x96xbf16>, vector<16x96xf32> -> vector<16x96xf32>
    %c0_17 = arith.constant 0 : index
    %c0_18 = arith.constant 0 : index
    %c0_19 = arith.constant 0 : index
    %37 = vector.load %arg7[%c0_17, %c0_18, %c0_19] : memref<1x1x96xf32, #tpu.memory_space<vmem>>, vector<1x1x96xf32>
    %38 = vector.shape_cast %37 : vector<1x1x96xf32> to vector<1x96xf32>
    %39 = vector.broadcast %38 : vector<1x96xf32> to vector<16x96xf32>
    %40 = arith.addf %36, %39 : vector<16x96xf32>
    %41 = vector.extract_strided_slice %40 {offsets = [0, 0], sizes = [16, 32], strides = [1, 1]} : vector<16x96xf32> to vector<16x32xf32>
    %cst_20 = arith.constant 2.500000e-01 : f32
    %42 = vector.broadcast %cst_20 : f32 to vector<16x32xf32>
    %43 = arith.mulf %41, %42 : vector<16x32xf32>
    %44 = vector.extract_strided_slice %40 {offsets = [0, 32], sizes = [16, 32], strides = [1, 1]} : vector<16x96xf32> to vector<16x32xf32>
    %45 = vector.extract_strided_slice %40 {offsets = [0, 64], sizes = [16, 32], strides = [1, 1]} : vector<16x96xf32> to vector<16x32xf32>
    %46 = vector.extract_strided_slice %43 {offsets = [0, 0], sizes = [8, 16], strides = [1, 1]} : vector<16x32xf32> to vector<8x16xf32>
    %47 = vector.extract_strided_slice %43 {offsets = [0, 16], sizes = [8, 16], strides = [1, 1]} : vector<16x32xf32> to vector<8x16xf32>
    %48 = vector.extract_strided_slice %43 {offsets = [8, 0], sizes = [8, 16], strides = [1, 1]} : vector<16x32xf32> to vector<8x16xf32>
    %49 = vector.extract_strided_slice %43 {offsets = [8, 16], sizes = [8, 16], strides = [1, 1]} : vector<16x32xf32> to vector<8x16xf32>
    %50 = vector.shape_cast %46 : vector<8x16xf32> to vector<1x8x16xf32>
    %51 = vector.shape_cast %47 : vector<8x16xf32> to vector<1x8x16xf32>
    %52 = vector.shape_cast %48 : vector<8x16xf32> to vector<1x8x16xf32>
    %53 = vector.shape_cast %49 : vector<8x16xf32> to vector<1x8x16xf32>
    %54 = tpu.concatenate %50, %51, %52, %53 in 0 : vector<1x8x16xf32>, vector<1x8x16xf32>, vector<1x8x16xf32>, vector<1x8x16xf32> -> vector<4x8x16xf32>
    %55 = arith.truncf %54 : vector<4x8x16xf32> to vector<4x8x16xbf16>
    %56 = vector.extract_strided_slice %44 {offsets = [0, 0], sizes = [8, 16], strides = [1, 1]} : vector<16x32xf32> to vector<8x16xf32>
    %57 = vector.extract_strided_slice %44 {offsets = [0, 16], sizes = [8, 16], strides = [1, 1]} : vector<16x32xf32> to vector<8x16xf32>
    %58 = vector.extract_strided_slice %44 {offsets = [8, 0], sizes = [8, 16], strides = [1, 1]} : vector<16x32xf32> to vector<8x16xf32>
    %59 = vector.extract_strided_slice %44 {offsets = [8, 16], sizes = [8, 16], strides = [1, 1]} : vector<16x32xf32> to vector<8x16xf32>
    %60 = vector.shape_cast %56 : vector<8x16xf32> to vector<1x8x16xf32>
    %61 = vector.shape_cast %57 : vector<8x16xf32> to vector<1x8x16xf32>
    %62 = vector.shape_cast %58 : vector<8x16xf32> to vector<1x8x16xf32>
    %63 = vector.shape_cast %59 : vector<8x16xf32> to vector<1x8x16xf32>
    %64 = tpu.concatenate %60, %61, %62, %63 in 0 : vector<1x8x16xf32>, vector<1x8x16xf32>, vector<1x8x16xf32>, vector<1x8x16xf32> -> vector<4x8x16xf32>
    %65 = arith.truncf %64 : vector<4x8x16xf32> to vector<4x8x16xbf16>
    %66 = vector.extract_strided_slice %45 {offsets = [0, 0], sizes = [8, 16], strides = [1, 1]} : vector<16x32xf32> to vector<8x16xf32>
    %67 = vector.extract_strided_slice %45 {offsets = [0, 16], sizes = [8, 16], strides = [1, 1]} : vector<16x32xf32> to vector<8x16xf32>
    %68 = vector.extract_strided_slice %45 {offsets = [8, 0], sizes = [8, 16], strides = [1, 1]} : vector<16x32xf32> to vector<8x16xf32>
    %69 = vector.extract_strided_slice %45 {offsets = [8, 16], sizes = [8, 16], strides = [1, 1]} : vector<16x32xf32> to vector<8x16xf32>
    %70 = vector.shape_cast %66 : vector<8x16xf32> to vector<1x8x16xf32>
    %71 = vector.shape_cast %67 : vector<8x16xf32> to vector<1x8x16xf32>
    %72 = vector.shape_cast %68 : vector<8x16xf32> to vector<1x8x16xf32>
    %73 = vector.shape_cast %69 : vector<8x16xf32> to vector<1x8x16xf32>
    %74 = tpu.concatenate %70, %71, %72, %73 in 0 : vector<1x8x16xf32>, vector<1x8x16xf32>, vector<1x8x16xf32>, vector<1x8x16xf32> -> vector<4x8x16xf32>
    %75 = arith.truncf %74 : vector<4x8x16xf32> to vector<4x8x16xbf16>
    "tpu.trace_start"() <{level = 10 : i32, message = "hqd,hkd->hqk"}> : () -> ()
    %cst_21 = arith.constant dense<0.000000e+00> : vector<4x8x8xf32>
    %76 = tpu.matmul %55, %65, %cst_21 {dimension_numbers = #tpu.dot_dimension_numbers<[2], [2], [1], [1], [0, 0, 0, 1, 1, 1], [0], [0]>} : vector<4x8x16xbf16>, vector<4x8x16xbf16>, vector<4x8x8xf32> -> vector<4x8x8xf32>
    "tpu.trace_stop"() : () -> ()
    %77 = vector.shape_cast %55 : vector<4x8x16xbf16> to vector<32x16xbf16>
    %c0_22 = arith.constant 0 : index
    %c0_23 = arith.constant 0 : index
    %c0_24 = arith.constant 0 : index
    %78 = vector.load %arg8[%c0_22, %c0_23, %c0_24] : memref<1x16x8xbf16, #tpu.memory_space<vmem>>, vector<1x16x8xbf16>
    %79 = vector.shape_cast %78 : vector<1x16x8xbf16> to vector<16x8xbf16>
    %cst_25 = arith.constant dense<0.000000e+00> : vector<32x8xf32>
    %80 = tpu.matmul %77, %79, %cst_25 {dimension_numbers = #tpu.dot_dimension_numbers<[1], [0], [0], [1], [0, 0, 1, 1], [], []>} : vector<32x16xbf16>, vector<16x8xbf16>, vector<32x8xf32> -> vector<32x8xf32>
    %81 = tpu.iota {dimensions = array<i32: 0>} : vector<32x1xi32>
    %c8_i32 = arith.constant 8 : i32
    %c0_i32_26 = arith.constant 0 : i32
    %82 = arith.cmpi eq, %c8_i32, %c0_i32_26 : i32
    %c1_i32 = arith.constant 1 : i32
    %83 = arith.select %82, %c1_i32, %c8_i32 : i32
    %84 = vector.broadcast %83 : i32 to vector<32x1xi32>
    %85 = arith.remsi %81, %84 : vector<32x1xi32>
    %c0_i32_27 = arith.constant 0 : i32
    %86 = vector.broadcast %c0_i32_27 : i32 to vector<32x1xi32>
    %87 = arith.cmpi ne, %85, %86 : vector<32x1xi32>
    %c0_i32_28 = arith.constant 0 : i32
    %88 = vector.broadcast %c0_i32_28 : i32 to vector<32x1xi32>
    %89 = arith.cmpi slt, %85, %88 : vector<32x1xi32>
    %c0_i32_29 = arith.constant 0 : i32
    %90 = arith.cmpi slt, %83, %c0_i32_29 : i32
    %91 = vector.broadcast %90 : i1 to vector<32x1xi1>
    %92 = vector.broadcast %91 : vector<32x1xi1> to vector<32x1xi1>
    %93 = arith.xori %89, %92 : vector<32x1xi1>
    %94 = arith.andi %93, %87 : vector<32x1xi1>
    %95 = vector.broadcast %83 : i32 to vector<32x1xi32>
    %96 = arith.addi %85, %95 : vector<32x1xi32>
    %97 = arith.select %94, %96, %85 : vector<32x1xi1>, vector<32x1xi32>
    %c7_i32 = arith.constant 7 : i32
    %98 = vector.broadcast %c7_i32 : i32 to vector<32x1xi32>
    %99 = arith.subi %98, %97 : vector<32x1xi32>
    %100 = vector.extract_strided_slice %80 {offsets = [0, 1], sizes = [32, 7], strides = [1, 1]} : vector<32x8xf32> to vector<32x7xf32>
    %101 = vector.extract_strided_slice %80 {offsets = [0, 0], sizes = [32, 1], strides = [1, 1]} : vector<32x8xf32> to vector<32x1xf32>
    %102 = tpu.concatenate %100, %101 in 1 : vector<32x7xf32>, vector<32x1xf32> -> vector<32x8xf32>
    %c0_i32_30 = arith.constant 0 : i32
    %103 = vector.broadcast %c0_i32_30 : i32 to vector<32x1xi32>
    %104 = arith.shrsi %99, %103 : vector<32x1xi32>
    %c1_i32_31 = arith.constant 1 : i32
    %105 = vector.broadcast %c1_i32_31 : i32 to vector<32x1xi32>
    %106 = arith.andi %104, %105 : vector<32x1xi32>
    %c1_i32_32 = arith.constant 1 : i32
    %107 = vector.broadcast %c1_i32_32 : i32 to vector<32x1xi32>
    %108 = arith.cmpi eq, %106, %107 : vector<32x1xi32>
    %109 = vector.shape_cast %108 : vector<32x1xi1> to vector<32x1xi1>
    %110 = vector.broadcast %109 : vector<32x1xi1> to vector<32x8xi1>
    %111 = arith.select %110, %102, %80 : vector<32x8xi1>, vector<32x8xf32>
    %112 = vector.extract_strided_slice %111 {offsets = [0, 2], sizes = [32, 6], strides = [1, 1]} : vector<32x8xf32> to vector<32x6xf32>
    %113 = vector.extract_strided_slice %111 {offsets = [0, 0], sizes = [32, 2], strides = [1, 1]} : vector<32x8xf32> to vector<32x2xf32>
    %114 = tpu.concatenate %112, %113 in 1 : vector<32x6xf32>, vector<32x2xf32> -> vector<32x8xf32>
    %c1_i32_33 = arith.constant 1 : i32
    %115 = vector.broadcast %c1_i32_33 : i32 to vector<32x1xi32>
    %116 = arith.shrsi %99, %115 : vector<32x1xi32>
    %c1_i32_34 = arith.constant 1 : i32
    %117 = vector.broadcast %c1_i32_34 : i32 to vector<32x1xi32>
    %118 = arith.andi %116, %117 : vector<32x1xi32>
    %c1_i32_35 = arith.constant 1 : i32
    %119 = vector.broadcast %c1_i32_35 : i32 to vector<32x1xi32>
    %120 = arith.cmpi eq, %118, %119 : vector<32x1xi32>
    %121 = vector.shape_cast %120 : vector<32x1xi1> to vector<32x1xi1>
    %122 = vector.broadcast %121 : vector<32x1xi1> to vector<32x8xi1>
    %123 = arith.select %122, %114, %111 : vector<32x8xi1>, vector<32x8xf32>
    %124 = vector.extract_strided_slice %123 {offsets = [0, 4], sizes = [32, 4], strides = [1, 1]} : vector<32x8xf32> to vector<32x4xf32>
    %125 = vector.extract_strided_slice %123 {offsets = [0, 0], sizes = [32, 4], strides = [1, 1]} : vector<32x8xf32> to vector<32x4xf32>
    %126 = tpu.concatenate %124, %125 in 1 : vector<32x4xf32>, vector<32x4xf32> -> vector<32x8xf32>
    %c2_i32 = arith.constant 2 : i32
    %127 = vector.broadcast %c2_i32 : i32 to vector<32x1xi32>
    %128 = arith.shrsi %99, %127 : vector<32x1xi32>
    %c1_i32_36 = arith.constant 1 : i32
    %129 = vector.broadcast %c1_i32_36 : i32 to vector<32x1xi32>
    %130 = arith.andi %128, %129 : vector<32x1xi32>
    %c1_i32_37 = arith.constant 1 : i32
    %131 = vector.broadcast %c1_i32_37 : i32 to vector<32x1xi32>
    %132 = arith.cmpi eq, %130, %131 : vector<32x1xi32>
    %133 = vector.shape_cast %132 : vector<32x1xi1> to vector<32x1xi1>
    %134 = vector.broadcast %133 : vector<32x1xi1> to vector<32x8xi1>
    %135 = arith.select %134, %126, %123 : vector<32x8xi1>, vector<32x8xf32>
    %136 = vector.shape_cast %135 : vector<32x8xf32> to vector<4x8x8xf32>
    %137 = arith.addf %76, %136 : vector<4x8x8xf32>
    %c0_38 = arith.constant 0 : index
    %c0_39 = arith.constant 0 : index
    %138 = vector.load %arg3[%c0_38, %c0_39] : memref<8x8xf32, #tpu.memory_space<vmem>>, vector<8x8xf32>
    %139 = vector.shape_cast %138 : vector<8x8xf32> to vector<1x8x8xf32>
    %140 = vector.broadcast %139 : vector<1x8x8xf32> to vector<4x8x8xf32>
    %141 = arith.addf %137, %140 : vector<4x8x8xf32>
    %cst_40 = arith.constant dense<0xFF800000> : vector<4x8xf32>
    %142 = vector.multi_reduction <maximumf>, %141, %cst_40 [2] : vector<4x8x8xf32> to vector<4x8xf32>
    %143 = vector.shape_cast %142 : vector<4x8xf32> to vector<4x8x1xf32>
    %144 = vector.broadcast %143 : vector<4x8x1xf32> to vector<4x8x8xf32>
    %145 = arith.subf %141, %144 : vector<4x8x8xf32>
    %146 = math.exp %145 : vector<4x8x8xf32>
    %cst_41 = arith.constant dense<0.000000e+00> : vector<4x8xf32>
    %147 = vector.multi_reduction <add>, %146, %cst_41 [2] : vector<4x8x8xf32> to vector<4x8xf32>
    %148 = vector.shape_cast %147 : vector<4x8xf32> to vector<4x8x1xf32>
    %149 = arith.truncf %146 : vector<4x8x8xf32> to vector<4x8x8xbf16>
    "tpu.trace_start"() <{level = 10 : i32, message = "hqk,hkd->hqd"}> : () -> ()
    %cst_42 = arith.constant dense<0.000000e+00> : vector<4x8x16xf32>
    %150 = tpu.matmul %149, %75, %cst_42 {dimension_numbers = #tpu.dot_dimension_numbers<[2], [1], [1], [2], [0, 0, 0, 1, 1, 2], [0], [0]>} : vector<4x8x8xbf16>, vector<4x8x16xbf16>, vector<4x8x16xf32> -> vector<4x8x16xf32>
    "tpu.trace_stop"() : () -> ()
    %151 = tpu.reciprocal %148 {approx = true} : vector<4x8x1xf32> -> vector<4x8x1xf32>
    %152 = vector.broadcast %151 : vector<4x8x1xf32> to vector<4x8x16xf32>
    %153 = arith.mulf %150, %152 : vector<4x8x16xf32>
    %154 = arith.truncf %153 : vector<4x8x16xf32> to vector<4x8x16xbf16>
    %155 = vector.extract_strided_slice %154 {offsets = [0, 0, 0], sizes = [1, 8, 16], strides = [1, 1, 1]} : vector<4x8x16xbf16> to vector<1x8x16xbf16>
    %156 = vector.shape_cast %155 : vector<1x8x16xbf16> to vector<8x16xbf16>
    %157 = vector.extract_strided_slice %154 {offsets = [1, 0, 0], sizes = [1, 8, 16], strides = [1, 1, 1]} : vector<4x8x16xbf16> to vector<1x8x16xbf16>
    %158 = vector.shape_cast %157 : vector<1x8x16xbf16> to vector<8x16xbf16>
    %159 = tpu.concatenate %156, %158 in 1 : vector<8x16xbf16>, vector<8x16xbf16> -> vector<8x32xbf16>
    %160 = vector.extract_strided_slice %154 {offsets = [2, 0, 0], sizes = [1, 8, 16], strides = [1, 1, 1]} : vector<4x8x16xbf16> to vector<1x8x16xbf16>
    %161 = vector.shape_cast %160 : vector<1x8x16xbf16> to vector<8x16xbf16>
    %162 = vector.extract_strided_slice %154 {offsets = [3, 0, 0], sizes = [1, 8, 16], strides = [1, 1, 1]} : vector<4x8x16xbf16> to vector<1x8x16xbf16>
    %163 = vector.shape_cast %162 : vector<1x8x16xbf16> to vector<8x16xbf16>
    %164 = tpu.concatenate %161, %163 in 1 : vector<8x16xbf16>, vector<8x16xbf16> -> vector<8x32xbf16>
    %165 = tpu.concatenate %159, %164 in 0 : vector<8x32xbf16>, vector<8x32xbf16> -> vector<16x32xbf16>
    %c0_43 = arith.constant 0 : index
    %c0_44 = arith.constant 0 : index
    %c0_45 = arith.constant 0 : index
    %166 = vector.load %arg9[%c0_43, %c0_44, %c0_45] : memref<1x32x32xbf16, #tpu.memory_space<vmem>>, vector<1x32x32xbf16>
    %167 = vector.shape_cast %166 : vector<1x32x32xbf16> to vector<32x32xbf16>
    %cst_46 = arith.constant dense<0.000000e+00> : vector<16x32xf32>
    %168 = tpu.matmul %165, %167, %cst_46 {dimension_numbers = #tpu.dot_dimension_numbers<[1], [0], [0], [1], [0, 0, 1, 1], [], []>} : vector<16x32xbf16>, vector<32x32xbf16>, vector<16x32xf32> -> vector<16x32xf32>
    %c0_47 = arith.constant 0 : index
    %c0_48 = arith.constant 0 : index
    %c0_49 = arith.constant 0 : index
    %169 = vector.load %arg10[%c0_47, %c0_48, %c0_49] : memref<1x1x32xf32, #tpu.memory_space<vmem>>, vector<1x1x32xf32>
    %170 = vector.shape_cast %169 : vector<1x1x32xf32> to vector<1x32xf32>
    %171 = vector.broadcast %170 : vector<1x32xf32> to vector<16x32xf32>
    %172 = arith.addf %168, %171 : vector<16x32xf32>
    %173 = vector.shape_cast %172 : vector<16x32xf32> to vector<2x8x32xf32>
    %174 = arith.addf %3, %173 : vector<2x8x32xf32>
    %c0_50 = arith.constant 0 : index
    %c0_51 = arith.constant 0 : index
    %c0_52 = arith.constant 0 : index
    %175 = vector.load %arg11[%c0_50, %c0_51, %c0_52] : memref<1x1x32xf32, #tpu.memory_space<vmem>>, vector<1x1x32xf32>
    %176 = vector.shape_cast %175 : vector<1x1x32xf32> to vector<1x32xf32>
    %c0_53 = arith.constant 0 : index
    %c0_54 = arith.constant 0 : index
    %c0_55 = arith.constant 0 : index
    %177 = vector.load %arg12[%c0_53, %c0_54, %c0_55] : memref<1x1x32xf32, #tpu.memory_space<vmem>>, vector<1x1x32xf32>
    %178 = vector.shape_cast %177 : vector<1x1x32xf32> to vector<1x32xf32>
    %cst_56 = arith.constant dense<0.000000e+00> : vector<2x8xf32>
    %179 = vector.multi_reduction <add>, %174, %cst_56 [2] : vector<2x8x32xf32> to vector<2x8xf32>
    %180 = vector.shape_cast %179 : vector<2x8xf32> to vector<2x8x1xf32>
    %cst_57 = arith.constant 3.200000e+01 : f32
    %181 = vector.broadcast %cst_57 : f32 to vector<2x8x1xf32>
    %182 = arith.divf %180, %181 : vector<2x8x1xf32>
    %183 = vector.broadcast %182 : vector<2x8x1xf32> to vector<2x8x32xf32>
    %184 = arith.subf %174, %183 : vector<2x8x32xf32>
    %185 = arith.mulf %184, %184 : vector<2x8x32xf32>
    %cst_58 = arith.constant dense<0.000000e+00> : vector<2x8xf32>
    %186 = vector.multi_reduction <add>, %185, %cst_58 [2] : vector<2x8x32xf32> to vector<2x8xf32>
    %187 = vector.shape_cast %186 : vector<2x8xf32> to vector<2x8x1xf32>
    %cst_59 = arith.constant 3.200000e+01 : f32
    %188 = vector.broadcast %cst_59 : f32 to vector<2x8x1xf32>
    %189 = arith.divf %187, %188 : vector<2x8x1xf32>
    %190 = vector.broadcast %182 : vector<2x8x1xf32> to vector<2x8x32xf32>
    %191 = arith.subf %174, %190 : vector<2x8x32xf32>
    %cst_60 = arith.constant 9.99999974E-6 : f32
    %192 = vector.broadcast %cst_60 : f32 to vector<2x8x1xf32>
    %193 = arith.addf %189, %192 : vector<2x8x1xf32>
    %194 = math.rsqrt %193 : vector<2x8x1xf32>
    %195 = vector.broadcast %194 : vector<2x8x1xf32> to vector<2x8x32xf32>
    %196 = arith.mulf %191, %195 : vector<2x8x32xf32>
    %197 = vector.shape_cast %176 : vector<1x32xf32> to vector<1x1x32xf32>
    %198 = vector.broadcast %197 : vector<1x1x32xf32> to vector<2x8x32xf32>
    %199 = arith.mulf %196, %198 : vector<2x8x32xf32>
    %200 = vector.shape_cast %178 : vector<1x32xf32> to vector<1x1x32xf32>
    %201 = vector.broadcast %200 : vector<1x1x32xf32> to vector<2x8x32xf32>
    %202 = arith.addf %199, %201 : vector<2x8x32xf32>
    %203 = vector.shape_cast %202 : vector<2x8x32xf32> to vector<16x32xf32>
    %204 = arith.truncf %203 : vector<16x32xf32> to vector<16x32xbf16>
    %c0_61 = arith.constant 0 : index
    %c0_62 = arith.constant 0 : index
    %c0_63 = arith.constant 0 : index
    %205 = vector.load %arg13[%c0_61, %c0_62, %c0_63] : memref<1x32x128xbf16, #tpu.memory_space<vmem>>, vector<1x32x128xbf16>
    %206 = vector.shape_cast %205 : vector<1x32x128xbf16> to vector<32x128xbf16>
    %cst_64 = arith.constant dense<0.000000e+00> : vector<16x128xf32>
    %207 = tpu.matmul %204, %206, %cst_64 {dimension_numbers = #tpu.dot_dimension_numbers<[1], [0], [0], [1], [0, 0, 1, 1], [], []>} : vector<16x32xbf16>, vector<32x128xbf16>, vector<16x128xf32> -> vector<16x128xf32>
    %c0_65 = arith.constant 0 : index
    %c0_66 = arith.constant 0 : index
    %c0_67 = arith.constant 0 : index
    %208 = vector.load %arg14[%c0_65, %c0_66, %c0_67] : memref<1x1x128xf32, #tpu.memory_space<vmem>>, vector<1x1x128xf32>
    %209 = vector.shape_cast %208 : vector<1x1x128xf32> to vector<1x128xf32>
    %210 = vector.broadcast %209 : vector<1x128xf32> to vector<16x128xf32>
    %211 = arith.addf %207, %210 : vector<16x128xf32>
    %cst_68 = arith.constant 5.000000e-01 : f32
    %212 = vector.broadcast %cst_68 : f32 to vector<16x128xf32>
    %213 = arith.mulf %212, %211 : vector<16x128xf32>
    %cst_69 = arith.constant 0.707106769 : f32
    %214 = vector.broadcast %cst_69 : f32 to vector<16x128xf32>
    %215 = arith.mulf %211, %214 : vector<16x128xf32>
    %cst_70 = arith.constant 0.000000e+00 : f32
    %216 = vector.broadcast %cst_70 : f32 to vector<16x128xf32>
    %217 = arith.cmpf oge, %215, %216 : vector<16x128xf32>
    %cst_71 = arith.constant 1.000000e+00 : f32
    %cst_72 = arith.constant -1.000000e+00 : f32
    %218 = vector.broadcast %cst_71 : f32 to vector<16x128xf32>
    %219 = vector.broadcast %cst_72 : f32 to vector<16x128xf32>
    %220 = arith.select %217, %218, %219 : vector<16x128xi1>, vector<16x128xf32>
    %221 = math.absf %215 : vector<16x128xf32>
    %cst_73 = arith.constant 0.327591091 : f32
    %222 = vector.broadcast %cst_73 : f32 to vector<16x128xf32>
    %223 = arith.mulf %222, %221 : vector<16x128xf32>
    %cst_74 = arith.constant 1.000000e+00 : f32
    %224 = vector.broadcast %cst_74 : f32 to vector<16x128xf32>
    %225 = arith.addf %224, %223 : vector<16x128xf32>
    %226 = tpu.reciprocal %225 {approx = true} : vector<16x128xf32> -> vector<16x128xf32>
    %cst_75 = arith.constant 1.06140542 : f32
    %227 = vector.broadcast %cst_75 : f32 to vector<16x128xf32>
    %228 = arith.mulf %227, %226 : vector<16x128xf32>
    %cst_76 = arith.constant -1.45315206 : f32
    %229 = vector.broadcast %cst_76 : f32 to vector<16x128xf32>
    %230 = arith.addf %228, %229 : vector<16x128xf32>
    %231 = arith.mulf %230, %226 : vector<16x128xf32>
    %cst_77 = arith.constant 1.42141378 : f32
    %232 = vector.broadcast %cst_77 : f32 to vector<16x128xf32>
    %233 = arith.addf %231, %232 : vector<16x128xf32>
    %234 = arith.mulf %233, %226 : vector<16x128xf32>
    %cst_78 = arith.constant -0.284496725 : f32
    %235 = vector.broadcast %cst_78 : f32 to vector<16x128xf32>
    %236 = arith.addf %234, %235 : vector<16x128xf32>
    %237 = arith.mulf %236, %226 : vector<16x128xf32>
    %cst_79 = arith.constant 0.254829586 : f32
    %238 = vector.broadcast %cst_79 : f32 to vector<16x128xf32>
    %239 = arith.addf %237, %238 : vector<16x128xf32>
    %240 = arith.mulf %239, %226 : vector<16x128xf32>
    %cst_80 = arith.constant 0.000000e+00 : f32
    %241 = vector.broadcast %cst_80 : f32 to vector<16x128xf32>
    %242 = arith.subf %241, %221 : vector<16x128xf32>
    %243 = arith.mulf %242, %221 : vector<16x128xf32>
    %244 = math.exp %243 : vector<16x128xf32>
    %245 = arith.mulf %240, %244 : vector<16x128xf32>
    %cst_81 = arith.constant 1.000000e+00 : f32
    %246 = vector.broadcast %cst_81 : f32 to vector<16x128xf32>
    %247 = arith.subf %246, %245 : vector<16x128xf32>
    %248 = arith.mulf %220, %247 : vector<16x128xf32>
    %cst_82 = arith.constant 1.000000e+00 : f32
    %249 = vector.broadcast %cst_82 : f32 to vector<16x128xf32>
    %250 = arith.addf %249, %248 : vector<16x128xf32>
    %251 = arith.mulf %213, %250 : vector<16x128xf32>
    %252 = arith.truncf %251 : vector<16x128xf32> to vector<16x128xbf16>
    %c0_83 = arith.constant 0 : index
    %c0_84 = arith.constant 0 : index
    %c0_85 = arith.constant 0 : index
    %253 = vector.load %arg15[%c0_83, %c0_84, %c0_85] : memref<1x128x32xbf16, #tpu.memory_space<vmem>>, vector<1x128x32xbf16>
    %254 = vector.shape_cast %253 : vector<1x128x32xbf16> to vector<128x32xbf16>
    %cst_86 = arith.constant dense<0.000000e+00> : vector<16x32xf32>
    %255 = tpu.matmul %252, %254, %cst_86 {dimension_numbers = #tpu.dot_dimension_numbers<[1], [0], [0], [1], [0, 0, 1, 1], [], []>} : vector<16x128xbf16>, vector<128x32xbf16>, vector<16x32xf32> -> vector<16x32xf32>
    %c0_87 = arith.constant 0 : index
    %c0_88 = arith.constant 0 : index
    %c0_89 = arith.constant 0 : index
    %256 = vector.load %arg16[%c0_87, %c0_88, %c0_89] : memref<1x1x32xf32, #tpu.memory_space<vmem>>, vector<1x1x32xf32>
    %257 = vector.shape_cast %256 : vector<1x1x32xf32> to vector<1x32xf32>
    %258 = vector.broadcast %257 : vector<1x32xf32> to vector<16x32xf32>
    %259 = arith.addf %255, %258 : vector<16x32xf32>
    %260 = vector.shape_cast %259 : vector<16x32xf32> to vector<2x8x32xf32>
    %261 = arith.addf %174, %260 : vector<2x8x32xf32>
    %c0_90 = arith.constant 0 : index
    %c0_91 = arith.constant 0 : index
    %c0_92 = arith.constant 0 : index
    %262 = vector.load %arg18[%c0_90, %c0_91, %c0_92] : memref<2x8x32xf32, #tpu.memory_space<vmem>>, vector<2x8x32xf32>
    tpu.vector_store %arg18[%c0_90, %c0_91, %c0_92], %261 {strides = array<i32>} : memref<2x8x32xf32, #tpu.memory_space<vmem>>, vector<2x8x32xf32>,
    %c4_i32 = arith.constant 4 : i32
    %263 = arith.cmpi eq, %arg1, %c4_i32 : i32
    %264 = arith.extui %263 : i1 to i32
    %c0_i32_93 = arith.constant 0 : i32
    %265 = arith.cmpi ne, %264, %c0_i32_93 : i32
    scf.if %265 {
      %266 = arith.truncf %261 : vector<2x8x32xf32> to vector<2x8x32xbf16>
      %c0_94 = arith.constant 0 : index
      %c0_95 = arith.constant 0 : index
      %c0_96 = arith.constant 0 : index
      %267 = vector.load %arg17[%c0_94, %c0_95, %c0_96] : memref<2x8x32xbf16, #tpu.memory_space<vmem>>, vector<2x8x32xbf16>
      tpu.vector_store %arg17[%c0_94, %c0_95, %c0_96], %266 {strides = array<i32>} : memref<2x8x32xbf16, #tpu.memory_space<vmem>>, vector<2x8x32xbf16>,
    } else {
    }
    return
  }
  func.func @transform_0(%arg0: i32, %arg1: i32) -> (i32, i32, i32) {
    %c0_i32 = arith.constant 0 : i32
    %c0_i32_0 = arith.constant 0 : i32
    %c0_i32_1 = arith.constant 0 : i32
    return %arg0, %c0_i32, %c0_i32_0 : i32, i32, i32
  }
  func.func @transform_1(%arg0: i32, %arg1: i32) -> (i32, i32) {
    %c0_i32 = arith.constant 0 : i32
    %c0_i32_0 = arith.constant 0 : i32
    %c0_i32_1 = arith.constant 0 : i32
    return %c0_i32, %c0_i32_0 : i32, i32
  }
  func.func @transform_2(%arg0: i32, %arg1: i32) -> (i32, i32, i32) {
    %c0_i32 = arith.constant 0 : i32
    %c0_i32_0 = arith.constant 0 : i32
    %c0_i32_1 = arith.constant 0 : i32
    return %arg1, %c0_i32, %c0_i32_0 : i32, i32, i32
  }
  func.func @transform_3(%arg0: i32, %arg1: i32) -> (i32, i32, i32) {
    %c0_i32 = arith.constant 0 : i32
    %c0_i32_0 = arith.constant 0 : i32
    %c0_i32_1 = arith.constant 0 : i32
    return %arg1, %c0_i32, %c0_i32_0 : i32, i32, i32
  }
  func.func @transform_4(%arg0: i32, %arg1: i32) -> (i32, i32, i32) {
    %c0_i32 = arith.constant 0 : i32
    %c0_i32_0 = arith.constant 0 : i32
    %c0_i32_1 = arith.constant 0 : i32
    return %arg1, %c0_i32, %c0_i32_0 : i32, i32, i32
  }
  func.func @transform_5(%arg0: i32, %arg1: i32) -> (i32, i32, i32) {
    %c0_i32 = arith.constant 0 : i32
    %c0_i32_0 = arith.constant 0 : i32
    %c0_i32_1 = arith.constant 0 : i32
    return %arg1, %c0_i32, %c0_i32_0 : i32, i32, i32
  }
  func.func @transform_6(%arg0: i32, %arg1: i32) -> (i32, i32, i32) {
    %c0_i32 = arith.constant 0 : i32
    %c0_i32_0 = arith.constant 0 : i32
    %c0_i32_1 = arith.constant 0 : i32
    return %arg1, %c0_i32, %c0_i32_0 : i32, i32, i32
  }
  func.func @transform_7(%arg0: i32, %arg1: i32) -> (i32, i32, i32) {
    %c0_i32 = arith.constant 0 : i32
    %c0_i32_0 = arith.constant 0 : i32
    %c0_i32_1 = arith.constant 0 : i32
    return %arg1, %c0_i32, %c0_i32_0 : i32, i32, i32
  }
  func.func @transform_8(%arg0: i32, %arg1: i32) -> (i32, i32, i32) {
    %c0_i32 = arith.constant 0 : i32
    %c0_i32_0 = arith.constant 0 : i32
    %c0_i32_1 = arith.constant 0 : i32
    return %arg1, %c0_i32, %c0_i32_0 : i32, i32, i32
  }
  func.func @transform_9(%arg0: i32, %arg1: i32) -> (i32, i32, i32) {
    %c0_i32 = arith.constant 0 : i32
    %c0_i32_0 = arith.constant 0 : i32
    %c0_i32_1 = arith.constant 0 : i32
    return %arg1, %c0_i32, %c0_i32_0 : i32, i32, i32
  }
  func.func @transform_10(%arg0: i32, %arg1: i32) -> (i32, i32, i32) {
    %c0_i32 = arith.constant 0 : i32
    %c0_i32_0 = arith.constant 0 : i32
    %c0_i32_1 = arith.constant 0 : i32
    return %arg1, %c0_i32, %c0_i32_0 : i32, i32, i32
  }
  func.func @transform_11(%arg0: i32, %arg1: i32) -> (i32, i32, i32) {
    %c0_i32 = arith.constant 0 : i32
    %c0_i32_0 = arith.constant 0 : i32
    %c0_i32_1 = arith.constant 0 : i32
    return %arg1, %c0_i32, %c0_i32_0 : i32, i32, i32
  }
  func.func @transform_12(%arg0: i32, %arg1: i32) -> (i32, i32, i32) {
    %c0_i32 = arith.constant 0 : i32
    %c0_i32_0 = arith.constant 0 : i32
    %c0_i32_1 = arith.constant 0 : i32
    return %arg1, %c0_i32, %c0_i32_0 : i32, i32, i32
  }
  func.func @transform_13(%arg0: i32, %arg1: i32) -> (i32, i32, i32) {
    %c0_i32 = arith.constant 0 : i32
    %c0_i32_0 = arith.constant 0 : i32
    %c0_i32_1 = arith.constant 0 : i32
    return %arg1, %c0_i32, %c0_i32_0 : i32, i32, i32
  }
  func.func @transform_14(%arg0: i32, %arg1: i32) -> (i32, i32, i32) {
    %c0_i32 = arith.constant 0 : i32
    %c0_i32_0 = arith.constant 0 : i32
    %c0_i32_1 = arith.constant 0 : i32
    return %arg1, %c0_i32, %c0_i32_0 : i32, i32, i32
  }
  func.func @transform_15(%arg0: i32, %arg1: i32) -> (i32, i32, i32) {
    %c0_i32 = arith.constant 0 : i32
    %c0_i32_0 = arith.constant 0 : i32
    %c0_i32_1 = arith.constant 0 : i32
    return %arg0, %c0_i32, %c0_i32_0 : i32, i32, i32
  }
}

</mosaic_0001>

<llo_original>
// kernel: rel_emb_transformer_forward.3
$region0: #{rel_emb_transformer_forward.3}
  #allocation0 [shape = 'u32[]', space=smem, size = 0x4, offset = 0x4, fixed_abs, tag = 'smem constant byte address 0x4 - core index']
  #allocation1 [shape = 'u32[144,128]{1,0:T(1,128)}', space=vmem, size = 0x12000, scoped, tag = 'internal scratch']
  %s0 = inlined_call_operand.vmem [shape: bf16[2,8,32], index: 0, kind: input, shape index: {}]
  %s1 = inlined_call_operand.vmem [shape: bf16[32,64], index: 1, kind: input, shape index: {}]
  %s2 = inlined_call_operand.vmem [shape: f32[1,64], index: 2, kind: input, shape index: {}]
  %s3 = inlined_call_operand.hbm [shape: bf16[2,8,64], index: 3, kind: output, shape index: {}]
  %s4 = sld [smem:[#allocation0]]
  $region45: #{rel_emb_transformer_forward.3} parent=0
    _
  %s6 = ssub.s32 1, %s4
  %s7 = scalar_select 0, %s6, %s4
  $region1: #{rel_emb_transformer_forward.3} parent=0
    #allocation2 [shape = 'u8[4096]{0}', space=vmem, size = 0x1000, scoped, tag = 'output window, operand 0']
    #allocation3 [shape = 's32[2]{0}', space=sflag, size = 0x8, scoped, tag = 'scoped memory for rel_emb_transformer_forward.3']
    %8 = vsyncpa [#allocation3], 0
    %s9 = scalar_lea.sflag [#allocation3], 1
    %10 = vsyncpa %s9, 0
    loop: start=0, step=1, limit=4
    $region2: #{rel_emb_transformer_forward.3} parent=1 // loop_pre_header
      _
    $region3: #{rel_emb_transformer_forward.3} parent=1 // loop_header
      %s12 = sphi 0, %s16
      %p13 = scmp.ge.s32.totalorder %s12, 4
      %s19 = sphi 0, %s31
      %s20 = sphi 0, %s27
      %s21 = sphi 0, %s19
      %s22 = sphi 0, %s20
      %s23 = sphi 0, %s21
      %s24 = sphi 0, %s22
      %s34 = sphi 0, %s36
      %s37 = sphi 0, %s34
      %s38 = sphi 0, %s37
      %s54 = sphi 0, %s38
      %s60 = sphi 0, %s62
      %s63 = sphi 0, %s60
      %s64 = sphi 0, %s63
      %s80 = sphi 0, %s64
      %s86 = sphi 0, %s88
      %s89 = sphi 0, %s86
      %s90 = sphi 0, %s89
      %s106 = sphi 0, %s90
      %s114 = sphi 0, %s116
      %s117 = sphi 0, %s114
      %s118 = sphi 0, %s117
      %s134 = sphi 0, %s118
    $region4: #{rel_emb_transformer_forward.3} parent=1 // loop_header_branch
      %15 = sbr.rel (%p13) target = $region8
    $region5: #{rel_emb_transformer_forward.3} parent=1 // loop_body
      %s17 = ssub.s32 %s12, 1
      %s18 = ssub.s32 %s12, 2
      %s25 = sadd.s32 1, %s20
      %p26 = scmp.ge.s32.totalorder %s25, 1
      %s27 = scalar_select %p26, 0, %s25
      %s28 = sadd.s32 1, %s19
      %s29 = scalar_select %p26, %s28, %s19
      %p30 = scmp.ge.s32.totalorder %s29, 2
      %s31 = scalar_select %p30, 0, %s29
      %s32 = ssub.s32 %s19, %s31
      %p33 = scmp.eq.s32.totalorder %s32, 0
      %s35 = sadd.s32 %s34, 1
      %s36 = scalar_select %p33, %s34, %s35
      %p39 = pneg %p33
      %p40 = scmp.eq.s32.totalorder %s12, 1
      %p41 = por %p39, %p40
      %p42 = scmp.ne.s32.totalorder %s34, %s37
      %p43 = scmp.eq.s32.totalorder %s12, 0
      %p44 = por %p42, %p43
      %p45 = scmp.ne.s32.totalorder %s34, %s37
      %p46 = scmp.eq.s32.totalorder %s17, 1
      %p47 = por %p45, %p46
      %p48 = scmp.ne.s32.totalorder %s37, %s38
      %p49 = scmp.eq.s32.totalorder %s17, 0
      %p50 = por %p48, %p49
      %p51 = scmp.ne.s32.totalorder %s37, %s38
      %p52 = scmp.eq.s32.totalorder %s18, 1
      %p53 = por %p51, %p52
      %p55 = scmp.ne.s32.totalorder %s38, %s54
      %p56 = scmp.eq.s32.totalorder %s18, 0
      %p57 = por %p55, %p56
      %s58 = ssub.s32 %s20, %s27
      %p59 = scmp.eq.s32.totalorder %s58, 0
      %s61 = sadd.s32 %s60, 1
      %s62 = scalar_select %p59, %s60, %s61
      %p65 = pneg %p59
      %p66 = scmp.eq.s32.totalorder %s12, 1
      %p67 = por %p65, %p66
      %p68 = scmp.ne.s32.totalorder %s60, %s63
      %p69 = scmp.eq.s32.totalorder %s12, 0
      %p70 = por %p68, %p69
      %p71 = scmp.ne.s32.totalorder %s60, %s63
      %p72 = scmp.eq.s32.totalorder %s17, 1
      %p73 = por %p71, %p72
      %p74 = scmp.ne.s32.totalorder %s63, %s64
      %p75 = scmp.eq.s32.totalorder %s17, 0
      %p76 = por %p74, %p75
      %p77 = scmp.ne.s32.totalorder %s63, %s64
      %p78 = scmp.eq.s32.totalorder %s18, 1
      %p79 = por %p77, %p78
      %p81 = scmp.ne.s32.totalorder %s64, %s80
      %p82 = scmp.eq.s32.totalorder %s18, 0
      %p83 = por %p81, %p82
      %s84 = ssub.s32 %s20, %s27
      %p85 = scmp.eq.s32.totalorder %s84, 0
      %s87 = sadd.s32 %s86, 1
      %s88 = scalar_select %p85, %s86, %s87
      %p91 = pneg %p85
      %p92 = scmp.eq.s32.totalorder %s12, 1
      %p93 = por %p91, %p92
      %p94 = scmp.ne.s32.totalorder %s86, %s89
      %p95 = scmp.eq.s32.totalorder %s12, 0
      %p96 = por %p94, %p95
      %p97 = scmp.ne.s32.totalorder %s86, %s89
      %p98 = scmp.eq.s32.totalorder %s17, 1
      %p99 = por %p97, %p98
      %p100 = scmp.ne.s32.totalorder %s89, %s90
      %p101 = scmp.eq.s32.totalorder %s17, 0
      %p102 = por %p100, %p101
      %p103 = scmp.ne.s32.totalorder %s89, %s90
      %p104 = scmp.eq.s32.totalorder %s18, 1
      %p105 = por %p103, %p104
      %p107 = scmp.ne.s32.totalorder %s90, %s106
      %p108 = scmp.eq.s32.totalorder %s18, 0
      %p109 = por %p107, %p108
      %s110 = ssub.s32 %s19, %s31
      %s111 = ssub.s32 %s20, %s27
      %s112 = sor.u32 %s110, %s111
      %p113 = scmp.eq.s32.totalorder %s112, 0
      %s115 = sadd.s32 %s114, 1
      %s116 = scalar_select %p113, %s114, %s115
      %p119 = pneg %p113
      %p120 = scmp.eq.s32.totalorder %s12, 1
      %p121 = por %p119, %p120
      %p122 = scmp.ne.s32.totalorder %s114, %s117
      %p123 = scmp.eq.s32.totalorder %s12, 0
      %p124 = por %p122, %p123
      %p125 = scmp.ne.s32.totalorder %s114, %s117
      %p126 = scmp.eq.s32.totalorder %s17, 1
      %p127 = por %p125, %p126
      %p128 = scmp.ne.s32.totalorder %s117, %s118
      %p129 = scmp.eq.s32.totalorder %s17, 0
      %p130 = por %p128, %p129
      %p131 = scmp.ne.s32.totalorder %s117, %s118
      %p132 = scmp.eq.s32.totalorder %s18, 1
      %p133 = por %p131, %p132
      %p135 = scmp.ne.s32.totalorder %s118, %s134
      %p136 = scmp.eq.s32.totalorder %s18, 0
      %p137 = por %p135, %p136
      %p138 = scmp.le.s32.totalorder 1, %s12
      %p139 = scmp.lt.s32.totalorder %s12, 3
      %p140 = pnand %p138, %p139
      %p141 = pneg %p140
      // Predicated region
      $region9: #{rel_emb_transformer_forward.3} parent=5 // pred_check
        _
      $region10: #{rel_emb_transformer_forward.3} parent=5 // pred_check_branch
        %143 = sbr.rel (%p140) target = $region12
      $region11: #{rel_emb_transformer_forward.3} parent=5 // pred_region
        %s144 = ssub.s32 %s12, 1
        // Predicated region
        $region13: #{rel_emb_transformer_forward.3} parent=11 // pred_check
          %p145 = pneg %p76
        $region14: #{rel_emb_transformer_forward.3} parent=11 // pred_check_branch
          %147 = sbr.rel (%p145) target = $region16
        $region15: #{rel_emb_transformer_forward.3} parent=11 // pred_region
          %p148 = scmp.lt.s32.totalorder %s22, 0
          %s149 = scalar_select %p148, %s22, 0
          %s150 = smul.addr %s149, 4
          %s151 = scalar_lea.vmem %s1, %s150
        $region16: #{rel_emb_transformer_forward.3} parent=11 // pred_fallthru
          _
        // Predicated region
        $region17: #{rel_emb_transformer_forward.3} parent=11 // pred_check
          %p152 = pneg %p102
        $region18: #{rel_emb_transformer_forward.3} parent=11 // pred_check_branch
          %154 = sbr.rel (%p152) target = $region20
        $region19: #{rel_emb_transformer_forward.3} parent=11 // pred_region
          %p155 = scmp.lt.s32.totalorder %s22, 0
          %s156 = scalar_select %p155, %s22, 0
          %s157 = scalar_lea.vmem %s2, %s156
        $region20: #{rel_emb_transformer_forward.3} parent=11 // pred_fallthru
          _
      $region12: #{rel_emb_transformer_forward.3} parent=5 // pred_fallthru
        _
      %p158 = scmp.lt.s32.totalorder %s12, 2
      // Predicated region
      $region21: #{rel_emb_transformer_forward.3} parent=5 // pred_check
        %p159 = pneg %p158
      $region22: #{rel_emb_transformer_forward.3} parent=5 // pred_check_branch
        %161 = sbr.rel (%p159) target = $region24
      $region23: #{rel_emb_transformer_forward.3} parent=5 // pred_region
        // Predicated region
        $region25: #{rel_emb_transformer_forward.3} parent=23 // pred_check
          %p162 = pneg %p44
        $region26: #{rel_emb_transformer_forward.3} parent=23 // pred_check_branch
          %164 = sbr.rel (%p162) target = $region28
        $region27: #{rel_emb_transformer_forward.3} parent=23 // pred_region
          %p165 = scmp.lt.s32.totalorder %s19, 1
          %s166 = scalar_select %p165, %s19, 1
          %s167 = smul.addr %s166, 4
          %s168 = scalar_lea.vmem %s0, %s167
        $region28: #{rel_emb_transformer_forward.3} parent=23 // pred_fallthru
          _
      $region24: #{rel_emb_transformer_forward.3} parent=5 // pred_fallthru
        _
      %p169 = scmp.le.s32.totalorder 1, %s12
      %p170 = scmp.lt.s32.totalorder %s12, 3
      %p171 = pnand %p169, %p170
      %p172 = pneg %p171
      // Predicated region
      $region29: #{rel_emb_transformer_forward.3} parent=5 // pred_check
        _
      $region30: #{rel_emb_transformer_forward.3} parent=5 // pred_check_branch
        %174 = sbr.rel (%p171) target = $region32
      $region31: #{rel_emb_transformer_forward.3} parent=5 // pred_region
        %s175 = ssub.s32 %s12, 1
        %p176 = scmp.lt.s32.totalorder %s21, 1
        %s177 = scalar_select %p176, %s21, 1
        %s178 = smul.addr %s177, 4
        %s179 = scalar_lea.vmem %s0, %s178
        %p180 = pneg %p50
        %p181 = pneg %p47
        %p182 = scmp.lt.s32.totalorder %s22, 0
        %s183 = scalar_select %p182, %s22, 0
        %s184 = smul.addr %s183, 4
        %s185 = scalar_lea.vmem %s1, %s184
        %p186 = pneg %p76
        %p187 = pneg %p73
        %p188 = scmp.lt.s32.totalorder %s22, 0
        %s189 = scalar_select %p188, %s22, 0
        %s190 = scalar_lea.vmem %s2, %s189
        %p191 = pneg %p102
        %p192 = pneg %p99
        %p193 = pneg %p130
        %p194 = pneg %p127
        %s195 = sand.u32 %s117, 1
        %s196 = scalar_lea.sflag [#allocation3], %s195
        %s197 = sand.u32 %s117, 1
        %s198 = smul.addr %s197, 4
        %s199 = scalar_lea.vmem [#allocation2], %s198
        %p200 = scmp.lt.s32.totalorder %s21, 1
        %s201 = scalar_select %p200, %s21, 1
        %s202 = smul.addr %s201, 4
        %s203 = scalar_lea.vmem %s0, %s202
        %p204 = scmp.lt.s32.totalorder %s22, 0
        %s205 = scalar_select %p204, %s22, 0
        %s206 = smul.addr %s205, 4
        %s207 = scalar_lea.vmem %s1, %s206
        %p208 = scmp.lt.s32.totalorder %s22, 0
        %s209 = scalar_select %p208, %s22, 0
        %s210 = scalar_lea.vmem %s2, %s209
        %v212 = vld [vmem:[%s203] sm:$0xf]
        %v213 = vld [vmem:[%s207] sm:$0xf]
        %v214 = vld [vmem:[%s207 + $0x4] sm:$0xf]
        %v215 = vld [vmem:[%s207 + $0x8] sm:$0xf]
        %v216 = vld [vmem:[%s207 + $0xc] sm:$0xf]
        %v217 = vld [vmem:[%s210] sm:$0x1]
        %v219 = vlaneseq
        %v220 = vshrl.u32 %v219, 7
        %v221 = vsub.s32 0, %v220
        %v222 = vrot.slane %v217, %v221
        %v228 = vunpack.c.l.b16 %v213
        %v229 = vunpack.c.l.b16 %v214
        %v230 = vunpack.c.l.b16 %v215
        %v231 = vunpack.c.l.b16 %v216
        %v232 = vpack.c.b16 %v229, %v228
        %v233 = vpack.c.b16 %v231, %v230
        %vm236 = vcmask 261120
        %v238 = vsel %vm236, %v212, 0
        %240 = vmatprep.subr.bf16.mxu0 0
        %241 = vmatpush1.bf16.msra.mxu0 %v232
        %242 = vmatprep.subr.bf16.mxu0 0
        %243 = vmatpush1.bf16.msra.mxu0 %v233
        %244 = vmatprep.subr.bf16.mxu0 0
        %245 = vmatpush1.bf16.msra.mxu0 0
        %246 = vmatprep.subr.bf16.mxu0 0
        %247 = vmatpush1.bf16.msra.mxu0 0
        %248 = vmatprep.subr.bf16.mxu0 0
        %249 = vmatpush1.bf16.msra.mxu0 0
        %250 = vmatprep.subr.bf16.mxu0 0
        %251 = vmatpush1.bf16.msra.mxu0 0
        %252 = vmatprep.subr.bf16.mxu0 0
        %253 = vmatpush1.bf16.msra.mxu0 0
        %254 = vmatprep.subr.bf16.mxu0 0
        %255 = vmatpush1.bf16.msra.mxu0 0
        %256 = vmatprep.subr.bf16.mxu0 0
        %257 = vmatpush1.bf16.msra.mxu0 0
        %258 = vmatprep.subr.bf16.mxu0 0
        %259 = vmatpush1.bf16.msra.mxu0 0
        %260 = vmatprep.subr.bf16.mxu0 0
        %261 = vmatpush1.bf16.msra.mxu0 0
        %262 = vmatprep.subr.bf16.mxu0 0
        %263 = vmatpush1.bf16.msra.mxu0 0
        %264 = vmatprep.subr.bf16.mxu0 0
        %265 = vmatpush1.bf16.msra.mxu0 0
        %266 = vmatprep.subr.bf16.mxu0 0
        %267 = vmatpush1.bf16.msra.mxu0 0
        %268 = vmatprep.subr.bf16.mxu0 0
        %269 = vmatpush1.bf16.msra.mxu0 0
        %270 = vmatprep.subr.bf16.mxu0 0
        %271 = vmatpush1.bf16.msra.mxu0 0
        %272 = vmatprep.mubr.bf16.mxu0 0
        %273 = vmatmul.mubr.bf16.gmra.mrb[0].mxu0 %v238
        %v274 = vpop.f32.mrb[0].mxu0
        %v275 = vadd.f32 %v222, %v274
        %v276 = vpop.f32.mrb[0].mxu0
        %v277 = vpop.f32.mrb[0].mxu0
        %v278 = vpop.f32.mrb[0].mxu0
        %279 = vdwg.mxu0
        %v280 = vpack.c.bf16 %v275, %v275
        %vm281 = vcmask 519168
        %282 = vst.msk [vmem:[%s199] sm:$0xf] %vm281, %v280
        %s283 = sand.u32 %s117, 1
        %s284 = scalar_lea.sflag [#allocation3], %s283
        %s285 = sand.u32 %s117, 1
        %s286 = smul.addr %s285, 4
        %s287 = scalar_lea.vmem [#allocation2], %s286
        // Predicated region
        $region33: #{rel_emb_transformer_forward.3} parent=31 // pred_check
          %p288 = pneg %p127
        $region34: #{rel_emb_transformer_forward.3} parent=31 // pred_check_branch
          %290 = sbr.rel (%p288) target = $region36
        $region35: #{rel_emb_transformer_forward.3} parent=31 // pred_region
          %s292 = ssub.s32 64, 64
          %293 = vsyncadd %s284, %s292
          %s294 = sadd.s32 %s22, %s21
          %s295 = smul.addr %s294, 64
          %s296 = scalar_lea.hbm %s3, %s295
          %s298 = sshll.u32 %s287, 4
          %s299 = int_to_ptr.vmem [resolvable:$true] %s298
          %301 = dma.vmem_to_hbm [thread:$0]  %s299, 64, %s296, %s284
        $region36: #{rel_emb_transformer_forward.3} parent=31 // pred_fallthru
          _
      $region32: #{rel_emb_transformer_forward.3} parent=5 // pred_fallthru
        _
      %p302 = scmp.le.s32.totalorder 2, %s12
      // Predicated region
      $region37: #{rel_emb_transformer_forward.3} parent=5 // pred_check
        %p303 = pneg %p302
      $region38: #{rel_emb_transformer_forward.3} parent=5 // pred_check_branch
        %305 = sbr.rel (%p303) target = $region40
      $region39: #{rel_emb_transformer_forward.3} parent=5 // pred_region
        %s306 = ssub.s32 %s12, 2
        // Predicated region
        $region41: #{rel_emb_transformer_forward.3} parent=39 // pred_check
          %p307 = pneg %p133
        $region42: #{rel_emb_transformer_forward.3} parent=39 // pred_check_branch
          %309 = sbr.rel (%p307) target = $region44
        $region43: #{rel_emb_transformer_forward.3} parent=39 // pred_region
          %s310 = sand.u32 %s118, 1
          %s311 = scalar_lea.sflag [#allocation3], %s310
          %s312 = sand.u32 %s118, 1
          %s313 = smul.addr %s312, 4
          %s314 = scalar_lea.vmem [#allocation2], %s313
          %315 = dma.done %s311, 64
        $region44: #{rel_emb_transformer_forward.3} parent=39 // pred_fallthru
          _
      $region40: #{rel_emb_transformer_forward.3} parent=5 // pred_fallthru
        _
    $region6: #{rel_emb_transformer_forward.3} parent=1 // loop_footer
      %s16 = sadd.s32 1, %s12
    $region7: #{rel_emb_transformer_forward.3} parent=1 // loop_footer_branch
      %11 = sbr.rel target = $region3
    $region8: #{rel_emb_transformer_forward.3} parent=1 // loop_exit
      _
    %316 = vsyncpa [#allocation3], 1
    %s317 = scalar_lea.sflag [#allocation3], 1
    %318 = vsyncpa %s317, 1

// kernel: rel_emb_transformer_forward.2
$region0: #{rel_emb_transformer_forward.2}
  #allocation0 [shape = 'u32[]', space=smem, size = 0x4, offset = 0x4, fixed_abs, tag = 'smem constant byte address 0x4 - core index']
  #allocation1 [shape = 'u32[144,128]{1,0:T(1,128)}', space=vmem, size = 0x12000, scoped, tag = 'internal scratch']
  #allocation2 [shape = 'f32[2,8,32]{2,1,0:T(8,128)}', space=vmem, size = 0x2000, scoped, tag = 'scratch operand']
  %s0 = inlined_call_operand.vmem [shape: f32[2,8,32], index: 0, kind: input, shape index: {}]
  %s1 = inlined_call_operand.vmem [shape: f32[8,8], index: 1, kind: input, shape index: {}]
  %s2 = inlined_call_operand.vmem [shape: f32[5,1,32], index: 2, kind: input, shape index: {}]
  %s3 = inlined_call_operand.vmem [shape: f32[5,1,32], index: 3, kind: input, shape index: {}]
  %s4 = inlined_call_operand.vmem [shape: bf16[5,32,96], index: 4, kind: input, shape index: {}]
  %s5 = inlined_call_operand.vmem [shape: f32[5,1,96], index: 5, kind: input, shape index: {}]
  %s6 = inlined_call_operand.vmem [shape: bf16[5,16,8], index: 6, kind: input, shape index: {}]
  %s7 = inlined_call_operand.vmem [shape: bf16[5,32,32], index: 7, kind: input, shape index: {}]
  %s8 = inlined_call_operand.vmem [shape: f32[5,1,32], index: 8, kind: input, shape index: {}]
  %s9 = inlined_call_operand.vmem [shape: f32[5,1,32], index: 9, kind: input, shape index: {}]
  %s10 = inlined_call_operand.vmem [shape: f32[5,1,32], index: 10, kind: input, shape index: {}]
  %s11 = inlined_call_operand.vmem [shape: bf16[5,32,128], index: 11, kind: input, shape index: {}]
  %s12 = inlined_call_operand.vmem [shape: f32[5,1,128], index: 12, kind: input, shape index: {}]
  %s13 = inlined_call_operand.vmem [shape: bf16[5,128,32], index: 13, kind: input, shape index: {}]
  %s14 = inlined_call_operand.vmem [shape: f32[5,1,32], index: 14, kind: input, shape index: {}]
  %s15 = inlined_call_operand.vmem [shape: bf16[2,8,32], index: 15, kind: output, shape index: {}]
  %s16 = sld [smem:[#allocation0]]
  $region101: #{rel_emb_transformer_forward.2} parent=0
    _
  %s18 = ssub.s32 1, %s16
  %s19 = scalar_select 0, %s18, %s16
  loop: start=0, step=1, limit=7
  $region2: #{rel_emb_transformer_forward.2} parent=0 // loop_pre_header
    _
  $region3: #{rel_emb_transformer_forward.2} parent=0 // loop_header
    %s21 = sphi 0, %s25
    %p22 = scmp.ge.s32.totalorder %s21, 7
    %s28 = sphi 0, %s40
    %s29 = sphi 0, %s36
    %s30 = sphi 0, %s28
    %s31 = sphi 0, %s29
    %s32 = sphi 0, %s30
    %s33 = sphi 0, %s31
    %s43 = sphi 0, %s45
    %s46 = sphi 0, %s43
    %s47 = sphi 0, %s46
    %s63 = sphi 0, %s47
    %s67 = sphi 0, %s67
    %s69 = sphi 0, %s67
    %s70 = sphi 0, %s69
    %s84 = sphi 0, %s70
    %s90 = sphi 0, %s92
    %s93 = sphi 0, %s90
    %s94 = sphi 0, %s93
    %s110 = sphi 0, %s94
    %s116 = sphi 0, %s118
    %s119 = sphi 0, %s116
    %s120 = sphi 0, %s119
    %s136 = sphi 0, %s120
    %s142 = sphi 0, %s144
    %s145 = sphi 0, %s142
    %s146 = sphi 0, %s145
    %s162 = sphi 0, %s146
    %s168 = sphi 0, %s170
    %s171 = sphi 0, %s168
    %s172 = sphi 0, %s171
    %s188 = sphi 0, %s172
    %s194 = sphi 0, %s196
    %s197 = sphi 0, %s194
    %s198 = sphi 0, %s197
    %s214 = sphi 0, %s198
    %s220 = sphi 0, %s222
    %s223 = sphi 0, %s220
    %s224 = sphi 0, %s223
    %s240 = sphi 0, %s224
    %s246 = sphi 0, %s248
    %s249 = sphi 0, %s246
    %s250 = sphi 0, %s249
    %s266 = sphi 0, %s250
    %s272 = sphi 0, %s274
    %s275 = sphi 0, %s272
    %s276 = sphi 0, %s275
    %s292 = sphi 0, %s276
    %s298 = sphi 0, %s300
    %s301 = sphi 0, %s298
    %s302 = sphi 0, %s301
    %s318 = sphi 0, %s302
    %s324 = sphi 0, %s326
    %s327 = sphi 0, %s324
    %s328 = sphi 0, %s327
    %s344 = sphi 0, %s328
    %s350 = sphi 0, %s352
    %s353 = sphi 0, %s350
    %s354 = sphi 0, %s353
    %s370 = sphi 0, %s354
    %s376 = sphi 0, %s378
    %s379 = sphi 0, %s376
    %s380 = sphi 0, %s379
    %s396 = sphi 0, %s380
    %s402 = sphi 0, %s404
    %s405 = sphi 0, %s402
    %s406 = sphi 0, %s405
    %s422 = sphi 0, %s406
    %s428 = sphi 0, %s430
    %s431 = sphi 0, %s428
    %s432 = sphi 0, %s431
    %s448 = sphi 0, %s432
  $region4: #{rel_emb_transformer_forward.2} parent=0 // loop_header_branch
    %24 = sbr.rel (%p22) target = $region8
  $region5: #{rel_emb_transformer_forward.2} parent=0 // loop_body
    %s26 = ssub.s32 %s21, 1
    %s27 = ssub.s32 %s21, 2
    %s34 = sadd.s32 1, %s29
    %p35 = scmp.ge.s32.totalorder %s34, 5
    %s36 = scalar_select %p35, 0, %s34
    %s37 = sadd.s32 1, %s28
    %s38 = scalar_select %p35, %s37, %s28
    %p39 = scmp.ge.s32.totalorder %s38, 1
    %s40 = scalar_select %p39, 0, %s38
    %s41 = ssub.s32 %s28, %s40
    %p42 = scmp.eq.s32.totalorder %s41, 0
    %s44 = sadd.s32 %s43, 1
    %s45 = scalar_select %p42, %s43, %s44
    %p48 = pneg %p42
    %p49 = scmp.eq.s32.totalorder %s21, 4
    %p50 = por %p48, %p49
    %p51 = scmp.ne.s32.totalorder %s43, %s46
    %p52 = scmp.eq.s32.totalorder %s21, 0
    %p53 = por %p51, %p52
    %p54 = scmp.ne.s32.totalorder %s43, %s46
    %p55 = scmp.eq.s32.totalorder %s26, 4
    %p56 = por %p54, %p55
    %p57 = scmp.ne.s32.totalorder %s46, %s47
    %p58 = scmp.eq.s32.totalorder %s26, 0
    %p59 = por %p57, %p58
    %p60 = scmp.ne.s32.totalorder %s46, %s47
    %p61 = scmp.eq.s32.totalorder %s27, 4
    %p62 = por %p60, %p61
    %p64 = scmp.ne.s32.totalorder %s47, %s63
    %p65 = scmp.eq.s32.totalorder %s27, 0
    %p66 = por %p64, %p65
    %s68 = sadd.s32 %s67, 1
    %p71 = scmp.eq.s32.totalorder %s21, 4
    %p72 = scmp.ne.s32.totalorder %s67, %s69
    %p73 = scmp.eq.s32.totalorder %s21, 0
    %p74 = por %p72, %p73
    %p75 = scmp.ne.s32.totalorder %s67, %s69
    %p76 = scmp.eq.s32.totalorder %s26, 4
    %p77 = por %p75, %p76
    %p78 = scmp.ne.s32.totalorder %s69, %s70
    %p79 = scmp.eq.s32.totalorder %s26, 0
    %p80 = por %p78, %p79
    %p81 = scmp.ne.s32.totalorder %s69, %s70
    %p82 = scmp.eq.s32.totalorder %s27, 4
    %p83 = por %p81, %p82
    %p85 = scmp.ne.s32.totalorder %s70, %s84
    %p86 = scmp.eq.s32.totalorder %s27, 0
    %p87 = por %p85, %p86
    %s88 = ssub.s32 %s29, %s36
    %p89 = scmp.eq.s32.totalorder %s88, 0
    %s91 = sadd.s32 %s90, 1
    %s92 = scalar_select %p89, %s90, %s91
    %p95 = pneg %p89
    %p96 = scmp.eq.s32.totalorder %s21, 4
    %p97 = por %p95, %p96
    %p98 = scmp.ne.s32.totalorder %s90, %s93
    %p99 = scmp.eq.s32.totalorder %s21, 0
    %p100 = por %p98, %p99
    %p101 = scmp.ne.s32.totalorder %s90, %s93
    %p102 = scmp.eq.s32.totalorder %s26, 4
    %p103 = por %p101, %p102
    %p104 = scmp.ne.s32.totalorder %s93, %s94
    %p105 = scmp.eq.s32.totalorder %s26, 0
    %p106 = por %p104, %p105
    %p107 = scmp.ne.s32.totalorder %s93, %s94
    %p108 = scmp.eq.s32.totalorder %s27, 4
    %p109 = por %p107, %p108
    %p111 = scmp.ne.s32.totalorder %s94, %s110
    %p112 = scmp.eq.s32.totalorder %s27, 0
    %p113 = por %p111, %p112
    %s114 = ssub.s32 %s29, %s36
    %p115 = scmp.eq.s32.totalorder %s114, 0
    %s117 = sadd.s32 %s116, 1
    %s118 = scalar_select %p115, %s116, %s117
    %p121 = pneg %p115
    %p122 = scmp.eq.s32.totalorder %s21, 4
    %p123 = por %p121, %p122
    %p124 = scmp.ne.s32.totalorder %s116, %s119
    %p125 = scmp.eq.s32.totalorder %s21, 0
    %p126 = por %p124, %p125
    %p127 = scmp.ne.s32.totalorder %s116, %s119
    %p128 = scmp.eq.s32.totalorder %s26, 4
    %p129 = por %p127, %p128
    %p130 = scmp.ne.s32.totalorder %s119, %s120
    %p131 = scmp.eq.s32.totalorder %s26, 0
    %p132 = por %p130, %p131
    %p133 = scmp.ne.s32.totalorder %s119, %s120
    %p134 = scmp.eq.s32.totalorder %s27, 4
    %p135 = por %p133, %p134
    %p137 = scmp.ne.s32.totalorder %s120, %s136
    %p138 = scmp.eq.s32.totalorder %s27, 0
    %p139 = por %p137, %p138
    %s140 = ssub.s32 %s29, %s36
    %p141 = scmp.eq.s32.totalorder %s140, 0
    %s143 = sadd.s32 %s142, 1
    %s144 = scalar_select %p141, %s142, %s143
    %p147 = pneg %p141
    %p148 = scmp.eq.s32.totalorder %s21, 4
    %p149 = por %p147, %p148
    %p150 = scmp.ne.s32.totalorder %s142, %s145
    %p151 = scmp.eq.s32.totalorder %s21, 0
    %p152 = por %p150, %p151
    %p153 = scmp.ne.s32.totalorder %s142, %s145
    %p154 = scmp.eq.s32.totalorder %s26, 4
    %p155 = por %p153, %p154
    %p156 = scmp.ne.s32.totalorder %s145, %s146
    %p157 = scmp.eq.s32.totalorder %s26, 0
    %p158 = por %p156, %p157
    %p159 = scmp.ne.s32.totalorder %s145, %s146
    %p160 = scmp.eq.s32.totalorder %s27, 4
    %p161 = por %p159, %p160
    %p163 = scmp.ne.s32.totalorder %s146, %s162
    %p164 = scmp.eq.s32.totalorder %s27, 0
    %p165 = por %p163, %p164
    %s166 = ssub.s32 %s29, %s36
    %p167 = scmp.eq.s32.totalorder %s166, 0
    %s169 = sadd.s32 %s168, 1
    %s170 = scalar_select %p167, %s168, %s169
    %p173 = pneg %p167
    %p174 = scmp.eq.s32.totalorder %s21, 4
    %p175 = por %p173, %p174
    %p176 = scmp.ne.s32.totalorder %s168, %s171
    %p177 = scmp.eq.s32.totalorder %s21, 0
    %p178 = por %p176, %p177
    %p179 = scmp.ne.s32.totalorder %s168, %s171
    %p180 = scmp.eq.s32.totalorder %s26, 4
    %p181 = por %p179, %p180
    %p182 = scmp.ne.s32.totalorder %s171, %s172
    %p183 = scmp.eq.s32.totalorder %s26, 0
    %p184 = por %p182, %p183
    %p185 = scmp.ne.s32.totalorder %s171, %s172
    %p186 = scmp.eq.s32.totalorder %s27, 4
    %p187 = por %p185, %p186
    %p189 = scmp.ne.s32.totalorder %s172, %s188
    %p190 = scmp.eq.s32.totalorder %s27, 0
    %p191 = por %p189, %p190
    %s192 = ssub.s32 %s29, %s36
    %p193 = scmp.eq.s32.totalorder %s192, 0
    %s195 = sadd.s32 %s194, 1
    %s196 = scalar_select %p193, %s194, %s195
    %p199 = pneg %p193
    %p200 = scmp.eq.s32.totalorder %s21, 4
    %p201 = por %p199, %p200
    %p202 = scmp.ne.s32.totalorder %s194, %s197
    %p203 = scmp.eq.s32.totalorder %s21, 0
    %p204 = por %p202, %p203
    %p205 = scmp.ne.s32.totalorder %s194, %s197
    %p206 = scmp.eq.s32.totalorder %s26, 4
    %p207 = por %p205, %p206
    %p208 = scmp.ne.s32.totalorder %s197, %s198
    %p209 = scmp.eq.s32.totalorder %s26, 0
    %p210 = por %p208, %p209
    %p211 = scmp.ne.s32.totalorder %s197, %s198
    %p212 = scmp.eq.s32.totalorder %s27, 4
    %p213 = por %p211, %p212
    %p215 = scmp.ne.s32.totalorder %s198, %s214
    %p216 = scmp.eq.s32.totalorder %s27, 0
    %p217 = por %p215, %p216
    %s218 = ssub.s32 %s29, %s36
    %p219 = scmp.eq.s32.totalorder %s218, 0
    %s221 = sadd.s32 %s220, 1
    %s222 = scalar_select %p219, %s220, %s221
    %p225 = pneg %p219
    %p226 = scmp.eq.s32.totalorder %s21, 4
    %p227 = por %p225, %p226
    %p228 = scmp.ne.s32.totalorder %s220, %s223
    %p229 = scmp.eq.s32.totalorder %s21, 0
    %p230 = por %p228, %p229
    %p231 = scmp.ne.s32.totalorder %s220, %s223
    %p232 = scmp.eq.s32.totalorder %s26, 4
    %p233 = por %p231, %p232
    %p234 = scmp.ne.s32.totalorder %s223, %s224
    %p235 = scmp.eq.s32.totalorder %s26, 0
    %p236 = por %p234, %p235
    %p237 = scmp.ne.s32.totalorder %s223, %s224
    %p238 = scmp.eq.s32.totalorder %s27, 4
    %p239 = por %p237, %p238
    %p241 = scmp.ne.s32.totalorder %s224, %s240
    %p242 = scmp.eq.s32.totalorder %s27, 0
    %p243 = por %p241, %p242
    %s244 = ssub.s32 %s29, %s36
    %p245 = scmp.eq.s32.totalorder %s244, 0
    %s247 = sadd.s32 %s246, 1
    %s248 = scalar_select %p245, %s246, %s247
    %p251 = pneg %p245
    %p252 = scmp.eq.s32.totalorder %s21, 4
    %p253 = por %p251, %p252
    %p254 = scmp.ne.s32.totalorder %s246, %s249
    %p255 = scmp.eq.s32.totalorder %s21, 0
    %p256 = por %p254, %p255
    %p257 = scmp.ne.s32.totalorder %s246, %s249
    %p258 = scmp.eq.s32.totalorder %s26, 4
    %p259 = por %p257, %p258
    %p260 = scmp.ne.s32.totalorder %s249, %s250
    %p261 = scmp.eq.s32.totalorder %s26, 0
    %p262 = por %p260, %p261
    %p263 = scmp.ne.s32.totalorder %s249, %s250
    %p264 = scmp.eq.s32.totalorder %s27, 4
    %p265 = por %p263, %p264
    %p267 = scmp.ne.s32.totalorder %s250, %s266
    %p268 = scmp.eq.s32.totalorder %s27, 0
    %p269 = por %p267, %p268
    %s270 = ssub.s32 %s29, %s36
    %p271 = scmp.eq.s32.totalorder %s270, 0
    %s273 = sadd.s32 %s272, 1
    %s274 = scalar_select %p271, %s272, %s273
    %p277 = pneg %p271
    %p278 = scmp.eq.s32.totalorder %s21, 4
    %p279 = por %p277, %p278
    %p280 = scmp.ne.s32.totalorder %s272, %s275
    %p281 = scmp.eq.s32.totalorder %s21, 0
    %p282 = por %p280, %p281
    %p283 = scmp.ne.s32.totalorder %s272, %s275
    %p284 = scmp.eq.s32.totalorder %s26, 4
    %p285 = por %p283, %p284
    %p286 = scmp.ne.s32.totalorder %s275, %s276
    %p287 = scmp.eq.s32.totalorder %s26, 0
    %p288 = por %p286, %p287
    %p289 = scmp.ne.s32.totalorder %s275, %s276
    %p290 = scmp.eq.s32.totalorder %s27, 4
    %p291 = por %p289, %p290
    %p293 = scmp.ne.s32.totalorder %s276, %s292
    %p294 = scmp.eq.s32.totalorder %s27, 0
    %p295 = por %p293, %p294
    %s296 = ssub.s32 %s29, %s36
    %p297 = scmp.eq.s32.totalorder %s296, 0
    %s299 = sadd.s32 %s298, 1
    %s300 = scalar_select %p297, %s298, %s299
    %p303 = pneg %p297
    %p304 = scmp.eq.s32.totalorder %s21, 4
    %p305 = por %p303, %p304
    %p306 = scmp.ne.s32.totalorder %s298, %s301
    %p307 = scmp.eq.s32.totalorder %s21, 0
    %p308 = por %p306, %p307
    %p309 = scmp.ne.s32.totalorder %s298, %s301
    %p310 = scmp.eq.s32.totalorder %s26, 4
    %p311 = por %p309, %p310
    %p312 = scmp.ne.s32.totalorder %s301, %s302
    %p313 = scmp.eq.s32.totalorder %s26, 0
    %p314 = por %p312, %p313
    %p315 = scmp.ne.s32.totalorder %s301, %s302
    %p316 = scmp.eq.s32.totalorder %s27, 4
    %p317 = por %p315, %p316
    %p319 = scmp.ne.s32.totalorder %s302, %s318
    %p320 = scmp.eq.s32.totalorder %s27, 0
    %p321 = por %p319, %p320
    %s322 = ssub.s32 %s29, %s36
    %p323 = scmp.eq.s32.totalorder %s322, 0
    %s325 = sadd.s32 %s324, 1
    %s326 = scalar_select %p323, %s324, %s325
    %p329 = pneg %p323
    %p330 = scmp.eq.s32.totalorder %s21, 4
    %p331 = por %p329, %p330
    %p332 = scmp.ne.s32.totalorder %s324, %s327
    %p333 = scmp.eq.s32.totalorder %s21, 0
    %p334 = por %p332, %p333
    %p335 = scmp.ne.s32.totalorder %s324, %s327
    %p336 = scmp.eq.s32.totalorder %s26, 4
    %p337 = por %p335, %p336
    %p338 = scmp.ne.s32.totalorder %s327, %s328
    %p339 = scmp.eq.s32.totalorder %s26, 0
    %p340 = por %p338, %p339
    %p341 = scmp.ne.s32.totalorder %s327, %s328
    %p342 = scmp.eq.s32.totalorder %s27, 4
    %p343 = por %p341, %p342
    %p345 = scmp.ne.s32.totalorder %s328, %s344
    %p346 = scmp.eq.s32.totalorder %s27, 0
    %p347 = por %p345, %p346
    %s348 = ssub.s32 %s29, %s36
    %p349 = scmp.eq.s32.totalorder %s348, 0
    %s351 = sadd.s32 %s350, 1
    %s352 = scalar_select %p349, %s350, %s351
    %p355 = pneg %p349
    %p356 = scmp.eq.s32.totalorder %s21, 4
    %p357 = por %p355, %p356
    %p358 = scmp.ne.s32.totalorder %s350, %s353
    %p359 = scmp.eq.s32.totalorder %s21, 0
    %p360 = por %p358, %p359
    %p361 = scmp.ne.s32.totalorder %s350, %s353
    %p362 = scmp.eq.s32.totalorder %s26, 4
    %p363 = por %p361, %p362
    %p364 = scmp.ne.s32.totalorder %s353, %s354
    %p365 = scmp.eq.s32.totalorder %s26, 0
    %p366 = por %p364, %p365
    %p367 = scmp.ne.s32.totalorder %s353, %s354
    %p368 = scmp.eq.s32.totalorder %s27, 4
    %p369 = por %p367, %p368
    %p371 = scmp.ne.s32.totalorder %s354, %s370
    %p372 = scmp.eq.s32.totalorder %s27, 0
    %p373 = por %p371, %p372
    %s374 = ssub.s32 %s29, %s36
    %p375 = scmp.eq.s32.totalorder %s374, 0
    %s377 = sadd.s32 %s376, 1
    %s378 = scalar_select %p375, %s376, %s377
    %p381 = pneg %p375
    %p382 = scmp.eq.s32.totalorder %s21, 4
    %p383 = por %p381, %p382
    %p384 = scmp.ne.s32.totalorder %s376, %s379
    %p385 = scmp.eq.s32.totalorder %s21, 0
    %p386 = por %p384, %p385
    %p387 = scmp.ne.s32.totalorder %s376, %s379
    %p388 = scmp.eq.s32.totalorder %s26, 4
    %p389 = por %p387, %p388
    %p390 = scmp.ne.s32.totalorder %s379, %s380
    %p391 = scmp.eq.s32.totalorder %s26, 0
    %p392 = por %p390, %p391
    %p393 = scmp.ne.s32.totalorder %s379, %s380
    %p394 = scmp.eq.s32.totalorder %s27, 4
    %p395 = por %p393, %p394
    %p397 = scmp.ne.s32.totalorder %s380, %s396
    %p398 = scmp.eq.s32.totalorder %s27, 0
    %p399 = por %p397, %p398
    %s400 = ssub.s32 %s29, %s36
    %p401 = scmp.eq.s32.totalorder %s400, 0
    %s403 = sadd.s32 %s402, 1
    %s404 = scalar_select %p401, %s402, %s403
    %p407 = pneg %p401
    %p408 = scmp.eq.s32.totalorder %s21, 4
    %p409 = por %p407, %p408
    %p410 = scmp.ne.s32.totalorder %s402, %s405
    %p411 = scmp.eq.s32.totalorder %s21, 0
    %p412 = por %p410, %p411
    %p413 = scmp.ne.s32.totalorder %s402, %s405
    %p414 = scmp.eq.s32.totalorder %s26, 4
    %p415 = por %p413, %p414
    %p416 = scmp.ne.s32.totalorder %s405, %s406
    %p417 = scmp.eq.s32.totalorder %s26, 0
    %p418 = por %p416, %p417
    %p419 = scmp.ne.s32.totalorder %s405, %s406
    %p420 = scmp.eq.s32.totalorder %s27, 4
    %p421 = por %p419, %p420
    %p423 = scmp.ne.s32.totalorder %s406, %s422
    %p424 = scmp.eq.s32.totalorder %s27, 0
    %p425 = por %p423, %p424
    %s426 = ssub.s32 %s28, %s40
    %p427 = scmp.eq.s32.totalorder %s426, 0
    %s429 = sadd.s32 %s428, 1
    %s430 = scalar_select %p427, %s428, %s429
    %p433 = pneg %p427
    %p434 = scmp.eq.s32.totalorder %s21, 4
    %p435 = por %p433, %p434
    %p436 = scmp.ne.s32.totalorder %s428, %s431
    %p437 = scmp.eq.s32.totalorder %s21, 0
    %p438 = por %p436, %p437
    %p439 = scmp.ne.s32.totalorder %s428, %s431
    %p440 = scmp.eq.s32.totalorder %s26, 4
    %p441 = por %p439, %p440
    %p442 = scmp.ne.s32.totalorder %s431, %s432
    %p443 = scmp.eq.s32.totalorder %s26, 0
    %p444 = por %p442, %p443
    %p445 = scmp.ne.s32.totalorder %s431, %s432
    %p446 = scmp.eq.s32.totalorder %s27, 4
    %p447 = por %p445, %p446
    %p449 = scmp.ne.s32.totalorder %s432, %s448
    %p450 = scmp.eq.s32.totalorder %s27, 0
    %p451 = por %p449, %p450
    %p452 = scmp.le.s32.totalorder 1, %s21
    %p453 = scmp.lt.s32.totalorder %s21, 6
    %p454 = pnand %p452, %p453
    %p455 = pneg %p454
    // Predicated region
    $region9: #{rel_emb_transformer_forward.2} parent=5 // pred_check
      _
    $region10: #{rel_emb_transformer_forward.2} parent=5 // pred_check_branch
      %457 = sbr.rel (%p454) target = $region12
    $region11: #{rel_emb_transformer_forward.2} parent=5 // pred_region
      %s458 = ssub.s32 %s21, 1
      // Predicated region
      $region13: #{rel_emb_transformer_forward.2} parent=11 // pred_check
        %p459 = pneg %p59
      $region14: #{rel_emb_transformer_forward.2} parent=11 // pred_check_branch
        %461 = sbr.rel (%p459) target = $region16
      $region15: #{rel_emb_transformer_forward.2} parent=11 // pred_region
        %s462 = smul.u32 2, %s30
        %p463 = scmp.lt.s32.totalorder %s462, 1
        %s464 = scalar_select %p463, %s462, 1
        %s465 = smul.addr %s464, 8
        %s466 = scalar_lea.vmem %s0, %s465
        %s467 = smul.u32 2, %s30
      $region16: #{rel_emb_transformer_forward.2} parent=11 // pred_fallthru
        _
      // Predicated region
      $region17: #{rel_emb_transformer_forward.2} parent=11 // pred_check
        %p468 = pneg %p80
      $region18: #{rel_emb_transformer_forward.2} parent=11 // pred_check_branch
        %470 = sbr.rel (%p468) target = $region20
      $region19: #{rel_emb_transformer_forward.2} parent=11 // pred_region
        _
      $region20: #{rel_emb_transformer_forward.2} parent=11 // pred_fallthru
        _
    $region12: #{rel_emb_transformer_forward.2} parent=5 // pred_fallthru
      _
    %p471 = scmp.lt.s32.totalorder %s21, 5
    // Predicated region
    $region21: #{rel_emb_transformer_forward.2} parent=5 // pred_check
      %p472 = pneg %p471
    $region22: #{rel_emb_transformer_forward.2} parent=5 // pred_check_branch
      %474 = sbr.rel (%p472) target = $region24
    $region23: #{rel_emb_transformer_forward.2} parent=5 // pred_region
      // Predicated region
      $region25: #{rel_emb_transformer_forward.2} parent=23 // pred_check
        %p475 = pneg %p100
      $region26: #{rel_emb_transformer_forward.2} parent=23 // pred_check_branch
        %477 = sbr.rel (%p475) target = $region28
      $region27: #{rel_emb_transformer_forward.2} parent=23 // pred_region
        %p478 = scmp.lt.s32.totalorder %s29, 4
        %s479 = scalar_select %p478, %s29, 4
        %s480 = scalar_lea.vmem %s2, %s479
      $region28: #{rel_emb_transformer_forward.2} parent=23 // pred_fallthru
        _
      // Predicated region
      $region29: #{rel_emb_transformer_forward.2} parent=23 // pred_check
        %p481 = pneg %p126
      $region30: #{rel_emb_transformer_forward.2} parent=23 // pred_check_branch
        %483 = sbr.rel (%p481) target = $region32
      $region31: #{rel_emb_transformer_forward.2} parent=23 // pred_region
        %p484 = scmp.lt.s32.totalorder %s29, 4
        %s485 = scalar_select %p484, %s29, 4
        %s486 = scalar_lea.vmem %s3, %s485
      $region32: #{rel_emb_transformer_forward.2} parent=23 // pred_fallthru
        _
      // Predicated region
      $region33: #{rel_emb_transformer_forward.2} parent=23 // pred_check
        %p487 = pneg %p152
      $region34: #{rel_emb_transformer_forward.2} parent=23 // pred_check_branch
        %489 = sbr.rel (%p487) target = $region36
      $region35: #{rel_emb_transformer_forward.2} parent=23 // pred_region
        %p490 = scmp.lt.s32.totalorder %s29, 4
        %s491 = scalar_select %p490, %s29, 4
        %s492 = smul.addr %s491, 4
        %s493 = smul.addr %s492, 4
        %s494 = scalar_lea.vmem %s4, %s493
      $region36: #{rel_emb_transformer_forward.2} parent=23 // pred_fallthru
        _
      // Predicated region
      $region37: #{rel_emb_transformer_forward.2} parent=23 // pred_check
        %p495 = pneg %p178
      $region38: #{rel_emb_transformer_forward.2} parent=23 // pred_check_branch
        %497 = sbr.rel (%p495) target = $region40
      $region39: #{rel_emb_transformer_forward.2} parent=23 // pred_region
        %p498 = scmp.lt.s32.totalorder %s29, 4
        %s499 = scalar_select %p498, %s29, 4
        %s500 = scalar_lea.vmem %s5, %s499
      $region40: #{rel_emb_transformer_forward.2} parent=23 // pred_fallthru
        _
      // Predicated region
      $region41: #{rel_emb_transformer_forward.2} parent=23 // pred_check
        %p501 = pneg %p204
      $region42: #{rel_emb_transformer_forward.2} parent=23 // pred_check_branch
        %503 = sbr.rel (%p501) target = $region44
      $region43: #{rel_emb_transformer_forward.2} parent=23 // pred_region
        %p504 = scmp.lt.s32.totalorder %s29, 4
        %s505 = scalar_select %p504, %s29, 4
        %s506 = smul.addr %s505, 2
        %s507 = smul.addr %s506, 4
        %s508 = scalar_lea.vmem %s6, %s507
      $region44: #{rel_emb_transformer_forward.2} parent=23 // pred_fallthru
        _
      // Predicated region
      $region45: #{rel_emb_transformer_forward.2} parent=23 // pred_check
        %p509 = pneg %p230
      $region46: #{rel_emb_transformer_forward.2} parent=23 // pred_check_branch
        %511 = sbr.rel (%p509) target = $region48
      $region47: #{rel_emb_transformer_forward.2} parent=23 // pred_region
        %p512 = scmp.lt.s32.totalorder %s29, 4
        %s513 = scalar_select %p512, %s29, 4
        %s514 = smul.addr %s513, 4
        %s515 = smul.addr %s514, 4
        %s516 = scalar_lea.vmem %s7, %s515
      $region48: #{rel_emb_transformer_forward.2} parent=23 // pred_fallthru
        _
      // Predicated region
      $region49: #{rel_emb_transformer_forward.2} parent=23 // pred_check
        %p517 = pneg %p256
      $region50: #{rel_emb_transformer_forward.2} parent=23 // pred_check_branch
        %519 = sbr.rel (%p517) target = $region52
      $region51: #{rel_emb_transformer_forward.2} parent=23 // pred_region
        %p520 = scmp.lt.s32.totalorder %s29, 4
        %s521 = scalar_select %p520, %s29, 4
        %s522 = scalar_lea.vmem %s8, %s521
      $region52: #{rel_emb_transformer_forward.2} parent=23 // pred_fallthru
        _
      // Predicated region
      $region53: #{rel_emb_transformer_forward.2} parent=23 // pred_check
        %p523 = pneg %p282
      $region54: #{rel_emb_transformer_forward.2} parent=23 // pred_check_branch
        %525 = sbr.rel (%p523) target = $region56
      $region55: #{rel_emb_transformer_forward.2} parent=23 // pred_region
        %p526 = scmp.lt.s32.totalorder %s29, 4
        %s527 = scalar_select %p526, %s29, 4
        %s528 = scalar_lea.vmem %s9, %s527
      $region56: #{rel_emb_transformer_forward.2} parent=23 // pred_fallthru
        _
      // Predicated region
      $region57: #{rel_emb_transformer_forward.2} parent=23 // pred_check
        %p529 = pneg %p308
      $region58: #{rel_emb_transformer_forward.2} parent=23 // pred_check_branch
        %531 = sbr.rel (%p529) target = $region60
      $region59: #{rel_emb_transformer_forward.2} parent=23 // pred_region
        %p532 = scmp.lt.s32.totalorder %s29, 4
        %s533 = scalar_select %p532, %s29, 4
        %s534 = scalar_lea.vmem %s10, %s533
      $region60: #{rel_emb_transformer_forward.2} parent=23 // pred_fallthru
        _
      // Predicated region
      $region61: #{rel_emb_transformer_forward.2} parent=23 // pred_check
        %p535 = pneg %p334
      $region62: #{rel_emb_transformer_forward.2} parent=23 // pred_check_branch
        %537 = sbr.rel (%p535) target = $region64
      $region63: #{rel_emb_transformer_forward.2} parent=23 // pred_region
        %p538 = scmp.lt.s32.totalorder %s29, 4
        %s539 = scalar_select %p538, %s29, 4
        %s540 = smul.addr %s539, 4
        %s541 = smul.addr %s540, 4
        %s542 = scalar_lea.vmem %s11, %s541
      $region64: #{rel_emb_transformer_forward.2} parent=23 // pred_fallthru
        _
      // Predicated region
      $region65: #{rel_emb_transformer_forward.2} parent=23 // pred_check
        %p543 = pneg %p360
      $region66: #{rel_emb_transformer_forward.2} parent=23 // pred_check_branch
        %545 = sbr.rel (%p543) target = $region68
      $region67: #{rel_emb_transformer_forward.2} parent=23 // pred_region
        %p546 = scmp.lt.s32.totalorder %s29, 4
        %s547 = scalar_select %p546, %s29, 4
        %s548 = scalar_lea.vmem %s12, %s547
      $region68: #{rel_emb_transformer_forward.2} parent=23 // pred_fallthru
        _
      // Predicated region
      $region69: #{rel_emb_transformer_forward.2} parent=23 // pred_check
        %p549 = pneg %p386
      $region70: #{rel_emb_transformer_forward.2} parent=23 // pred_check_branch
        %551 = sbr.rel (%p549) target = $region72
      $region71: #{rel_emb_transformer_forward.2} parent=23 // pred_region
        %p552 = scmp.lt.s32.totalorder %s29, 4
        %s553 = scalar_select %p552, %s29, 4
        %s554 = smul.addr %s553, 16
        %s555 = smul.addr %s554, 4
        %s556 = scalar_lea.vmem %s13, %s555
      $region72: #{rel_emb_transformer_forward.2} parent=23 // pred_fallthru
        _
      // Predicated region
      $region73: #{rel_emb_transformer_forward.2} parent=23 // pred_check
        %p557 = pneg %p412
      $region74: #{rel_emb_transformer_forward.2} parent=23 // pred_check_branch
        %559 = sbr.rel (%p557) target = $region76
      $region75: #{rel_emb_transformer_forward.2} parent=23 // pred_region
        %p560 = scmp.lt.s32.totalorder %s29, 4
        %s561 = scalar_select %p560, %s29, 4
        %s562 = scalar_lea.vmem %s14, %s561
      $region76: #{rel_emb_transformer_forward.2} parent=23 // pred_fallthru
        _
    $region24: #{rel_emb_transformer_forward.2} parent=5 // pred_fallthru
      _
    %p563 = scmp.le.s32.totalorder 1, %s21
    %p564 = scmp.lt.s32.totalorder %s21, 6
    %p565 = pnand %p563, %p564
    %p566 = pneg %p565
    // Predicated region
    $region77: #{rel_emb_transformer_forward.2} parent=5 // pred_check
      _
    $region78: #{rel_emb_transformer_forward.2} parent=5 // pred_check_branch
      %568 = sbr.rel (%p565) target = $region80
    $region79: #{rel_emb_transformer_forward.2} parent=5 // pred_region
      %s569 = ssub.s32 %s21, 1
      %s570 = smul.u32 2, %s30
      %p571 = scmp.lt.s32.totalorder %s570, 1
      %s572 = scalar_select %p571, %s570, 1
      %s573 = smul.addr %s572, 8
      %s574 = scalar_lea.vmem %s0, %s573
      %p575 = pneg %p59
      %p576 = pneg %p56
      %p577 = pneg %p80
      %p578 = pneg %p77
      %p579 = scmp.lt.s32.totalorder %s31, 4
      %s580 = scalar_select %p579, %s31, 4
      %s581 = scalar_lea.vmem %s2, %s580
      %p582 = pneg %p106
      %p583 = pneg %p103
      %p584 = scmp.lt.s32.totalorder %s31, 4
      %s585 = scalar_select %p584, %s31, 4
      %s586 = scalar_lea.vmem %s3, %s585
      %p587 = pneg %p132
      %p588 = pneg %p129
      %p589 = scmp.lt.s32.totalorder %s31, 4
      %s590 = scalar_select %p589, %s31, 4
      %s591 = smul.addr %s590, 4
      %s592 = smul.addr %s591, 4
      %s593 = scalar_lea.vmem %s4, %s592
      %p594 = pneg %p158
      %p595 = pneg %p155
      %p596 = scmp.lt.s32.totalorder %s31, 4
      %s597 = scalar_select %p596, %s31, 4
      %s598 = scalar_lea.vmem %s5, %s597
      %p599 = pneg %p184
      %p600 = pneg %p181
      %p601 = scmp.lt.s32.totalorder %s31, 4
      %s602 = scalar_select %p601, %s31, 4
      %s603 = smul.addr %s602, 2
      %s604 = smul.addr %s603, 4
      %s605 = scalar_lea.vmem %s6, %s604
      %p606 = pneg %p210
      %p607 = pneg %p207
      %p608 = scmp.lt.s32.totalorder %s31, 4
      %s609 = scalar_select %p608, %s31, 4
      %s610 = smul.addr %s609, 4
      %s611 = smul.addr %s610, 4
      %s612 = scalar_lea.vmem %s7, %s611
      %p613 = pneg %p236
      %p614 = pneg %p233
      %p615 = scmp.lt.s32.totalorder %s31, 4
      %s616 = scalar_select %p615, %s31, 4
      %s617 = scalar_lea.vmem %s8, %s616
      %p618 = pneg %p262
      %p619 = pneg %p259
      %p620 = scmp.lt.s32.totalorder %s31, 4
      %s621 = scalar_select %p620, %s31, 4
      %s622 = scalar_lea.vmem %s9, %s621
      %p623 = pneg %p288
      %p624 = pneg %p285
      %p625 = scmp.lt.s32.totalorder %s31, 4
      %s626 = scalar_select %p625, %s31, 4
      %s627 = scalar_lea.vmem %s10, %s626
      %p628 = pneg %p314
      %p629 = pneg %p311
      %p630 = scmp.lt.s32.totalorder %s31, 4
      %s631 = scalar_select %p630, %s31, 4
      %s632 = smul.addr %s631, 4
      %s633 = smul.addr %s632, 4
      %s634 = scalar_lea.vmem %s11, %s633
      %p635 = pneg %p340
      %p636 = pneg %p337
      %p637 = scmp.lt.s32.totalorder %s31, 4
      %s638 = scalar_select %p637, %s31, 4
      %s639 = scalar_lea.vmem %s12, %s638
      %p640 = pneg %p366
      %p641 = pneg %p363
      %p642 = scmp.lt.s32.totalorder %s31, 4
      %s643 = scalar_select %p642, %s31, 4
      %s644 = smul.addr %s643, 16
      %s645 = smul.addr %s644, 4
      %s646 = scalar_lea.vmem %s13, %s645
      %p647 = pneg %p392
      %p648 = pneg %p389
      %p649 = scmp.lt.s32.totalorder %s31, 4
      %s650 = scalar_select %p649, %s31, 4
      %s651 = scalar_lea.vmem %s14, %s650
      %p652 = pneg %p418
      %p653 = pneg %p415
      %p654 = pneg %p444
      %p655 = pneg %p441
      %s656 = smul.u32 2, %s30
      %p657 = scmp.lt.s32.totalorder %s656, 1
      %s658 = scalar_select %p657, %s656, 1
      %s659 = smul.addr %s658, 4
      %s660 = scalar_lea.vmem %s15, %s659
      %s661 = smul.u32 2, %s30
      %p662 = scmp.lt.s32.totalorder %s661, 1
      %s663 = scalar_select %p662, %s661, 1
      %s664 = smul.addr %s663, 8
      %s665 = scalar_lea.vmem %s0, %s664
      %s666 = smul.u32 2, %s30
      %p667 = scmp.lt.s32.totalorder %s31, 4
      %s668 = scalar_select %p667, %s31, 4
      %s669 = scalar_lea.vmem %s2, %s668
      %p670 = scmp.lt.s32.totalorder %s31, 4
      %s671 = scalar_select %p670, %s31, 4
      %s672 = scalar_lea.vmem %s3, %s671
      %p673 = scmp.lt.s32.totalorder %s31, 4
      %s674 = scalar_select %p673, %s31, 4
      %s675 = smul.addr %s674, 4
      %s676 = smul.addr %s675, 4
      %s677 = scalar_lea.vmem %s4, %s676
      %p678 = scmp.lt.s32.totalorder %s31, 4
      %s679 = scalar_select %p678, %s31, 4
      %s680 = scalar_lea.vmem %s5, %s679
      %p681 = scmp.lt.s32.totalorder %s31, 4
      %s682 = scalar_select %p681, %s31, 4
      %s683 = smul.addr %s682, 2
      %s684 = smul.addr %s683, 4
      %s685 = scalar_lea.vmem %s6, %s684
      %p686 = scmp.lt.s32.totalorder %s31, 4
      %s687 = scalar_select %p686, %s31, 4
      %s688 = smul.addr %s687, 4
      %s689 = smul.addr %s688, 4
      %s690 = scalar_lea.vmem %s7, %s689
      %p691 = scmp.lt.s32.totalorder %s31, 4
      %s692 = scalar_select %p691, %s31, 4
      %s693 = scalar_lea.vmem %s8, %s692
      %p694 = scmp.lt.s32.totalorder %s31, 4
      %s695 = scalar_select %p694, %s31, 4
      %s696 = scalar_lea.vmem %s9, %s695
      %p697 = scmp.lt.s32.totalorder %s31, 4
      %s698 = scalar_select %p697, %s31, 4
      %s699 = scalar_lea.vmem %s10, %s698
      %p700 = scmp.lt.s32.totalorder %s31, 4
      %s701 = scalar_select %p700, %s31, 4
      %s702 = smul.addr %s701, 4
      %s703 = smul.addr %s702, 4
      %s704 = scalar_lea.vmem %s11, %s703
      %p705 = scmp.lt.s32.totalorder %s31, 4
      %s706 = scalar_select %p705, %s31, 4
      %s707 = scalar_lea.vmem %s12, %s706
      %p708 = scmp.lt.s32.totalorder %s31, 4
      %s709 = scalar_select %p708, %s31, 4
      %s710 = smul.addr %s709, 16
      %s711 = smul.addr %s710, 4
      %s712 = scalar_lea.vmem %s13, %s711
      %p713 = scmp.lt.s32.totalorder %s31, 4
      %s714 = scalar_select %p713, %s31, 4
      %s715 = scalar_lea.vmem %s14, %s714
      %s716 = smul.u32 2, %s30
      %p717 = scmp.lt.s32.totalorder %s716, 1
      %s718 = scalar_select %p717, %s716, 1
      %s719 = smul.addr %s718, 4
      %s720 = scalar_lea.vmem %s15, %s719
      %s721 = smul.u32 2, %s30
      %p723 = scmp.eq.s32.totalorder %s31, 0
      // Predicated region
      $region81: #{rel_emb_transformer_forward.2} parent=79 // pred_check
        %p724 = pneg %p723
      $region82: #{rel_emb_transformer_forward.2} parent=79 // pred_check_branch
        %726 = sbr.rel (%p724) target = $region84
      $region83: #{rel_emb_transformer_forward.2} parent=79 // pred_region
        %v727 = vld [vmem:[%s665] sm:$0xff]
        %v728 = vld [vmem:[%s665 + $0x8] sm:$0xff]
        %vm729 = vcmask 261120
        %730 = vst.msk [vmem:[#allocation2] sm:$0xff] %vm729, %v727
        %731 = vst.msk [vmem:[#allocation2 + $0x8] sm:$0xff] %vm729, %v728
      $region84: #{rel_emb_transformer_forward.2} parent=79 // pred_fallthru
        _
      %v732 = vld [vmem:[#allocation2] sm:$0xff]
      %v733 = vld [vmem:[#allocation2 + $0x8] sm:$0xff]
      %v734 = vld [vmem:[%s669] sm:$0x1]
      %v735 = vld [vmem:[%s672] sm:$0x1]
      %vm736 = vcmask 261120
      %v737 = vsel %vm736, %v732, 0.0
      %738 = vadd.xlane.f32.xlu0 %v737
      %v739 = vpop.xlane.xlu0 %738
      %v740 = vsel %vm736, %v733, 0.0
      %741 = vadd.xlane.f32.xlu0 %v740
      %v742 = vpop.xlane.xlu0 %741
      %v743 = vrcp.pop 32.0
      %v744 = vmul.f32 %v739, %v743
      %v745 = vmul.f32 %v742, %v743
      %v746 = vsub.f32 %v732, %v744
      %v747 = vsub.f32 %v733, %v745
      %v748 = vmul.f32 %v746, %v746
      %v749 = vmul.f32 %v747, %v747
      %v750 = vsel %vm736, %v748, 0.0
      %751 = vadd.xlane.f32.xlu0 %v750
      %v752 = vpop.xlane.xlu0 %751
      %v753 = vsel %vm736, %v749, 0.0
      %754 = vadd.xlane.f32.xlu0 %v753
      %v755 = vpop.xlane.xlu0 %754
      %v756 = vmul.f32 %v752, %v743
      %v757 = vmul.f32 %v755, %v743
      %v758 = vadd.f32 %v756, 1e-05
      %v759 = vadd.f32 %v757, 1e-05
      %v760 = vrsqrt.pop %v758
      %v761 = vrsqrt.pop %v759
      %v762 = vmul.f32 %v746, %v760
      %v763 = vmul.f32 %v747, %v761
      %v765 = vlaneseq
      %v766 = vshrl.u32 %v765, 7
      %v767 = vsub.s32 0, %v766
      %v768 = vrot.slane %v734, %v767
      %v770 = vmul.f32 %v762, %v768
      %v771 = vmul.f32 %v763, %v768
      %v773 = vlaneseq
      %v774 = vshrl.u32 %v773, 7
      %v775 = vsub.s32 0, %v774
      %v776 = vrot.slane %v735, %v775
      %v778 = vadd.f32 %v770, %v776
      %v779 = vadd.f32 %v771, %v776
      %v780 = vpack.c.bf16 %v779, %v778
      %v781 = vld [vmem:[%s677] sm:$0xf]
      %v782 = vld [vmem:[%s677 + $0x4] sm:$0xf]
      %v783 = vld [vmem:[%s677 + $0x8] sm:$0xf]
      %v784 = vld [vmem:[%s677 + $0xc] sm:$0xf]
      %v785 = vld [vmem:[%s680] sm:$0x1]
      %v787 = vlaneseq
      %v788 = vshrl.u32 %v787, 7
      %v789 = vsub.s32 0, %v788
      %v790 = vrot.slane %v785, %v789
      %v796 = vunpack.c.l.b16 %v781
      %v797 = vunpack.c.l.b16 %v782
      %v798 = vunpack.c.l.b16 %v783
      %v799 = vunpack.c.l.b16 %v784
      %v800 = vpack.c.b16 %v797, %v796
      %v801 = vpack.c.b16 %v799, %v798
      %v805 = vsel %vm736, %v780, 0
      %807 = vmatprep.subr.bf16.mxu0 0
      %808 = vmatpush1.bf16.msra.mxu0 %v800
      %809 = vmatprep.subr.bf16.mxu0 0
      %810 = vmatpush1.bf16.msra.mxu0 %v801
      %811 = vmatprep.subr.bf16.mxu0 0
      %812 = vmatpush1.bf16.msra.mxu0 0
      %813 = vmatprep.subr.bf16.mxu0 0
      %814 = vmatpush1.bf16.msra.mxu0 0
      %815 = vmatprep.subr.bf16.mxu0 0
      %816 = vmatpush1.bf16.msra.mxu0 0
      %817 = vmatprep.subr.bf16.mxu0 0
      %818 = vmatpush1.bf16.msra.mxu0 0
      %819 = vmatprep.subr.bf16.mxu0 0
      %820 = vmatpush1.bf16.msra.mxu0 0
      %821 = vmatprep.subr.bf16.mxu0 0
      %822 = vmatpush1.bf16.msra.mxu0 0
      %823 = vmatprep.subr.bf16.mxu0 0
      %824 = vmatpush1.bf16.msra.mxu0 0
      %825 = vmatprep.subr.bf16.mxu0 0
      %826 = vmatpush1.bf16.msra.mxu0 0
      %827 = vmatprep.subr.bf16.mxu0 0
      %828 = vmatpush1.bf16.msra.mxu0 0
      %829 = vmatprep.subr.bf16.mxu0 0
      %830 = vmatpush1.bf16.msra.mxu0 0
      %831 = vmatprep.subr.bf16.mxu0 0
      %832 = vmatpush1.bf16.msra.mxu0 0
      %833 = vmatprep.subr.bf16.mxu0 0
      %834 = vmatpush1.bf16.msra.mxu0 0
      %835 = vmatprep.subr.bf16.mxu0 0
      %836 = vmatpush1.bf16.msra.mxu0 0
      %837 = vmatprep.subr.bf16.mxu0 0
      %838 = vmatpush1.bf16.msra.mxu0 0
      %839 = vmatprep.mubr.bf16.mxu0 0
      %840 = vmatmul.mubr.bf16.gmra.mrb[0].mxu0 %v805
      %v841 = vpop.f32.mrb[0].mxu0
      %v842 = vadd.f32 %v790, %v841
      %v843 = vpop.f32.mrb[0].mxu0
      %v844 = vpop.f32.mrb[0].mxu0
      %v845 = vadd.f32 %v790, %v844
      %v846 = vpop.f32.mrb[0].mxu0
      %847 = vdwg.mxu0
      %v848 = vmul.f32 %v842, 0.25
      %v849 = vmul.f32 %v845, 0.25
      %851 = vrot.lane.b32.xlu0 %v848, 112
      %v852 = vpop.permute.xlu0 %851
      %855 = vrot.lane.b32.xlu0 %v849, 112
      %v856 = vpop.permute.xlu0 %855
      %v858 = vpack.c.bf16 %v848, %v848
      %v859 = vpack.c.bf16 %v852, %v852
      %v860 = vpack.c.bf16 %v849, %v849
      %v861 = vpack.c.bf16 %v856, %v856
      %863 = vrot.lane.b32.xlu0 %v842, 112
      %v864 = vpop.permute.xlu0 %863
      %867 = vrot.lane.b32.xlu0 %v845, 112
      %v868 = vpop.permute.xlu0 %867
      %v870 = vpack.c.bf16 %v842, %v842
      %v871 = vpack.c.bf16 %v864, %v864
      %v872 = vpack.c.bf16 %v845, %v845
      %v873 = vpack.c.bf16 %v868, %v868
      %v874 = vld [vmem:[%s685] sm:$0xf]
      %v875 = vld [vmem:[%s685 + $0x4] sm:$0xf]
      %v880 = vunpack.c.l.b16 %v858
      %v881 = vunpack.c.l.b16 %v859
      %v882 = vunpack.c.l.b16 %v860
      %v883 = vunpack.c.l.b16 %v861
      %v884 = vpack.c.b16 %v881, %v880
      %v885 = vpack.c.b16 %v883, %v882
      %v888 = vunpack.c.l.b16 %v874
      %v889 = vunpack.c.l.b16 %v875
      %v890 = vpack.c.b16 %v889, %v888
      %vm892 = vcmask 130048
      %v894 = vsel %vm892, %v884, 0
      %v897 = vsel %vm892, %v885, 0
      %899 = vmatprep.subr.bf16.mxu0 0
      %900 = vmatpush1.bf16.msra.mxu0 %v890
      %901 = vmatprep.subr.bf16.mxu0 0
      %902 = vmatpush1.bf16.msra.mxu0 0
      %903 = vmatprep.subr.bf16.mxu0 0
      %904 = vmatpush1.bf16.msra.mxu0 0
      %905 = vmatprep.subr.bf16.mxu0 0
      %906 = vmatpush1.bf16.msra.mxu0 0
      %907 = vmatprep.subr.bf16.mxu0 0
      %908 = vmatpush1.bf16.msra.mxu0 0
      %909 = vmatprep.subr.bf16.mxu0 0
      %910 = vmatpush1.bf16.msra.mxu0 0
      %911 = vmatprep.subr.bf16.mxu0 0
      %912 = vmatpush1.bf16.msra.mxu0 0
      %913 = vmatprep.subr.bf16.mxu0 0
      %914 = vmatpush1.bf16.msra.mxu0 0
      %915 = vmatprep.subr.bf16.mxu0 0
      %916 = vmatpush1.bf16.msra.mxu0 0
      %917 = vmatprep.subr.bf16.mxu0 0
      %918 = vmatpush1.bf16.msra.mxu0 0
      %919 = vmatprep.subr.bf16.mxu0 0
      %920 = vmatpush1.bf16.msra.mxu0 0
      %921 = vmatprep.subr.bf16.mxu0 0
      %922 = vmatpush1.bf16.msra.mxu0 0
      %923 = vmatprep.subr.bf16.mxu0 0
      %924 = vmatpush1.bf16.msra.mxu0 0
      %925 = vmatprep.subr.bf16.mxu0 0
      %926 = vmatpush1.bf16.msra.mxu0 0
      %927 = vmatprep.subr.bf16.mxu0 0
      %928 = vmatpush1.bf16.msra.mxu0 0
      %929 = vmatprep.subr.bf16.mxu0 0
      %930 = vmatpush1.bf16.msra.mxu0 0
      %931 = vmatprep.mubr.bf16.mxu0 0
      %932 = vmatmul.mubr.bf16.gmra.mrb[0].mxu0 %v894
      %v933 = vpop.f32.mrb[0].mxu0
      %v934 = vadd.f32 0.0, %v933
      %v935 = vpop.f32.mrb[0].mxu0
      %v936 = vpop.f32.mrb[0].mxu0
      %v937 = vadd.f32 0.0, %v936
      %v938 = vpop.f32.mrb[0].mxu0
      %939 = vmatprep.mubr.bf16.mxu0 0
      %940 = vmatmul.mubr.bf16.gmra.mrb[0].mxu0 %v897
      %v941 = vpop.f32.mrb[0].mxu0
      %v942 = vadd.f32 0.0, %v941
      %v943 = vpop.f32.mrb[0].mxu0
      %v944 = vpop.f32.mrb[0].mxu0
      %v945 = vadd.f32 0.0, %v944
      %v946 = vpop.f32.mrb[0].mxu0
      %947 = vdwg.mxu0
      %v948 = vlaneseq
      %v949 = vshrl.u32 %v948, 7
      %v950 = vadd.s32 %v949, 8
      %v951 = vadd.s32 %v949, 16
      %v952 = vadd.s32 %v949, 24
      %vm953 = vcmp.lt.s32.totalorder %v949, 0
      %v954 = vsub.s32 0, %v949
      %v955 = vsel %vm953, %v954, %v949
      %v956 = vshrl.u32 %v955, 3
      %v957 = vand.u32 %v955, 7
      %v958 = vsub.s32 0, %v957
      %v959 = vsel %vm953, %v958, %v957
      %vm960 = vcmp.lt.s32.totalorder %v950, 0
      %v961 = vsub.s32 0, %v950
      %v962 = vsel %vm960, %v961, %v950
      %v963 = vshrl.u32 %v962, 3
      %v964 = vand.u32 %v962, 7
      %v965 = vsub.s32 0, %v964
      %v966 = vsel %vm960, %v965, %v964
      %vm967 = vcmp.lt.s32.totalorder %v951, 0
      %v968 = vsub.s32 0, %v951
      %v969 = vsel %vm967, %v968, %v951
      %v970 = vshrl.u32 %v969, 3
      %v971 = vand.u32 %v969, 7
      %v972 = vsub.s32 0, %v971
      %v973 = vsel %vm967, %v972, %v971
      %vm974 = vcmp.lt.s32.totalorder %v952, 0
      %v975 = vsub.s32 0, %v952
      %v976 = vsel %vm974, %v975, %v952
      %v977 = vshrl.u32 %v976, 3
      %v978 = vand.u32 %v976, 7
      %v979 = vsub.s32 0, %v978
      %v980 = vsel %vm974, %v979, %v978
      %vm981 = vcmp.ne.s32.totalorder %v959, 0
      %vm982 = vcmp.ne.s32.totalorder %v966, 0
      %vm983 = vcmp.ne.s32.totalorder %v973, 0
      %vm984 = vcmp.ne.s32.totalorder %v980, 0
      %vm985 = vcmp.lt.s32.totalorder %v959, 0
      %vm986 = vcmp.lt.s32.totalorder %v966, 0
      %vm987 = vcmp.lt.s32.totalorder %v973, 0
      %vm988 = vcmp.lt.s32.totalorder %v980, 0
      %vm989 = vmand %vm985, %vm981
      %vm990 = vmand %vm986, %vm982
      %vm991 = vmand %vm987, %vm983
      %vm992 = vmand %vm988, %vm984
      %v993 = vadd.s32 %v959, 8
      %v994 = vadd.s32 %v966, 8
      %v995 = vadd.s32 %v973, 8
      %v996 = vadd.s32 %v980, 8
      %v997 = vsel %vm989, %v993, %v959
      %v998 = vsel %vm990, %v994, %v966
      %v999 = vsel %vm991, %v995, %v973
      %v1000 = vsel %vm992, %v996, %v980
      %v1001 = vsub.s32 7, %v997
      %v1002 = vsub.s32 7, %v998
      %v1003 = vsub.s32 7, %v999
      %v1004 = vsub.s32 7, %v1000
      %1009 = vrot.lane.b32.xlu0 %v934, 127
      %v1010 = vpop.permute.xlu0 %1009
      %1011 = vrot.lane.b32.xlu0 %v937, 127
      %v1012 = vpop.permute.xlu0 %1011
      %1013 = vrot.lane.b32.xlu0 %v942, 127
      %v1014 = vpop.permute.xlu0 %1013
      %1015 = vrot.lane.b32.xlu0 %v945, 127
      %v1016 = vpop.permute.xlu0 %1015
      %1021 = vrot.lane.b32.xlu0 %v934, 7
      %v1022 = vpop.permute.xlu0 %1021
      %1023 = vrot.lane.b32.xlu0 %v937, 7
      %v1024 = vpop.permute.xlu0 %1023
      %1025 = vrot.lane.b32.xlu0 %v942, 7
      %v1026 = vpop.permute.xlu0 %1025
      %1027 = vrot.lane.b32.xlu0 %v945, 7
      %v1028 = vpop.permute.xlu0 %1027
      %vm1033 = vcmask 56320
      %v1034 = vsel %vm1033, %v1010, %v1022
      %v1035 = vsel %vm1033, %v1012, %v1024
      %v1036 = vsel %vm1033, %v1014, %v1026
      %v1037 = vsel %vm1033, %v1016, %v1028
      %v1038 = vand.u32 %v1001, 1
      %v1039 = vand.u32 %v1002, 1
      %v1040 = vand.u32 %v1003, 1
      %v1041 = vand.u32 %v1004, 1
      %vm1042 = vcmp.eq.s32.totalorder %v1038, 1
      %vm1043 = vcmp.eq.s32.totalorder %v1039, 1
      %vm1044 = vcmp.eq.s32.totalorder %v1040, 1
      %vm1045 = vcmp.eq.s32.totalorder %v1041, 1
      %v1046 = vsel %vm1042, 1, 0
      %v1047 = vsel %vm1043, 1, 0
      %v1048 = vsel %vm1044, 1, 0
      %v1049 = vsel %vm1045, 1, 0
      %vm1050 = vcmp.eq.s32.totalorder %v1046, 1
      %vm1051 = vcmp.eq.s32.totalorder %v1047, 1
      %vm1052 = vcmp.eq.s32.totalorder %v1048, 1
      %vm1053 = vcmp.eq.s32.totalorder %v1049, 1
      %v1054 = vsel %vm1050, %v1034, %v934
      %v1055 = vsel %vm1051, %v1035, %v937
      %v1056 = vsel %vm1052, %v1036, %v942
      %v1057 = vsel %vm1053, %v1037, %v945
      %1062 = vrot.lane.b32.xlu0 %v1054, 126
      %v1063 = vpop.permute.xlu0 %1062
      %1064 = vrot.lane.b32.xlu0 %v1055, 126
      %v1065 = vpop.permute.xlu0 %1064
      %1066 = vrot.lane.b32.xlu0 %v1056, 126
      %v1067 = vpop.permute.xlu0 %1066
      %1068 = vrot.lane.b32.xlu0 %v1057, 126
      %v1069 = vpop.permute.xlu0 %1068
      %1074 = vrot.lane.b32.xlu0 %v1054, 6
      %v1075 = vpop.permute.xlu0 %1074
      %1076 = vrot.lane.b32.xlu0 %v1055, 6
      %v1077 = vpop.permute.xlu0 %1076
      %1078 = vrot.lane.b32.xlu0 %v1056, 6
      %v1079 = vpop.permute.xlu0 %1078
      %1080 = vrot.lane.b32.xlu0 %v1057, 6
      %v1081 = vpop.permute.xlu0 %1080
      %vm1086 = vcmask 48128
      %v1087 = vsel %vm1086, %v1063, %v1075
      %v1088 = vsel %vm1086, %v1065, %v1077
      %v1089 = vsel %vm1086, %v1067, %v1079
      %v1090 = vsel %vm1086, %v1069, %v1081
      %v1091 = vshra.s32 %v1001, 1
      %v1092 = vshra.s32 %v1002, 1
      %v1093 = vshra.s32 %v1003, 1
      %v1094 = vshra.s32 %v1004, 1
      %v1095 = vand.u32 %v1091, 1
      %v1096 = vand.u32 %v1092, 1
      %v1097 = vand.u32 %v1093, 1
      %v1098 = vand.u32 %v1094, 1
      %vm1099 = vcmp.eq.s32.totalorder %v1095, 1
      %vm1100 = vcmp.eq.s32.totalorder %v1096, 1
      %vm1101 = vcmp.eq.s32.totalorder %v1097, 1
      %vm1102 = vcmp.eq.s32.totalorder %v1098, 1
      %v1103 = vsel %vm1099, 1, 0
      %v1104 = vsel %vm1100, 1, 0
      %v1105 = vsel %vm1101, 1, 0
      %v1106 = vsel %vm1102, 1, 0
      %vm1107 = vcmp.eq.s32.totalorder %v1103, 1
      %vm1108 = vcmp.eq.s32.totalorder %v1104, 1
      %vm1109 = vcmp.eq.s32.totalorder %v1105, 1
      %vm1110 = vcmp.eq.s32.totalorder %v1106, 1
      %v1111 = vsel %vm1107, %v1087, %v1054
      %v1112 = vsel %vm1108, %v1088, %v1055
      %v1113 = vsel %vm1109, %v1089, %v1056
      %v1114 = vsel %vm1110, %v1090, %v1057
      %1119 = vrot.lane.b32.xlu0 %v1111, 124
      %v1120 = vpop.permute.xlu0 %1119
      %1121 = vrot.lane.b32.xlu0 %v1112, 124
      %v1122 = vpop.permute.xlu0 %1121
      %1123 = vrot.lane.b32.xlu0 %v1113, 124
      %v1124 = vpop.permute.xlu0 %1123
      %1125 = vrot.lane.b32.xlu0 %v1114, 124
      %v1126 = vpop.permute.xlu0 %1125
      %1131 = vrot.lane.b32.xlu0 %v1111, 4
      %v1132 = vpop.permute.xlu0 %1131
      %1133 = vrot.lane.b32.xlu0 %v1112, 4
      %v1134 = vpop.permute.xlu0 %1133
      %1135 = vrot.lane.b32.xlu0 %v1113, 4
      %v1136 = vpop.permute.xlu0 %1135
      %1137 = vrot.lane.b32.xlu0 %v1114, 4
      %v1138 = vpop.permute.xlu0 %1137
      %vm1143 = vcmask 31744
      %v1144 = vsel %vm1143, %v1120, %v1132
      %v1145 = vsel %vm1143, %v1122, %v1134
      %v1146 = vsel %vm1143, %v1124, %v1136
      %v1147 = vsel %vm1143, %v1126, %v1138
      %v1148 = vshra.s32 %v1001, 2
      %v1149 = vshra.s32 %v1002, 2
      %v1150 = vshra.s32 %v1003, 2
      %v1151 = vshra.s32 %v1004, 2
      %v1152 = vand.u32 %v1148, 1
      %v1153 = vand.u32 %v1149, 1
      %v1154 = vand.u32 %v1150, 1
      %v1155 = vand.u32 %v1151, 1
      %vm1156 = vcmp.eq.s32.totalorder %v1152, 1
      %vm1157 = vcmp.eq.s32.totalorder %v1153, 1
      %vm1158 = vcmp.eq.s32.totalorder %v1154, 1
      %vm1159 = vcmp.eq.s32.totalorder %v1155, 1
      %v1160 = vsel %vm1156, 1, 0
      %v1161 = vsel %vm1157, 1, 0
      %v1162 = vsel %vm1158, 1, 0
      %v1163 = vsel %vm1159, 1, 0
      %vm1164 = vcmp.eq.s32.totalorder %v1160, 1
      %vm1165 = vcmp.eq.s32.totalorder %v1161, 1
      %vm1166 = vcmp.eq.s32.totalorder %v1162, 1
      %vm1167 = vcmp.eq.s32.totalorder %v1163, 1
      %v1168 = vsel %vm1164, %v1144, %v1111
      %v1169 = vsel %vm1165, %v1145, %v1112
      %v1170 = vsel %vm1166, %v1146, %v1113
      %v1171 = vsel %vm1167, %v1147, %v1114
      %1173 = vrot.lane.b32.xlu0 %v870, 96
      %v1174 = vpop.permute.xlu0 %1173
      %v1176 = vsel %vm892, %v858, 0
      %v1179 = vsel %vm892, %v1174, 0
      %1181 = vmatprep.subr.bf16.mxu0 0
      %1182 = vmatpush1.bf16.xpose.msra.mxu0 %v1179
      %1183 = vmatprep.subr.bf16.mxu0 0
      %1184 = vmatpush1.bf16.xpose.msra.mxu0 0
      %1185 = vmatprep.subr.bf16.mxu0 0
      %1186 = vmatpush1.bf16.xpose.msra.mxu0 0
      %1187 = vmatprep.subr.bf16.mxu0 0
      %1188 = vmatpush1.bf16.xpose.msra.mxu0 0
      %1189 = vmatprep.subr.bf16.mxu0 0
      %1190 = vmatpush1.bf16.xpose.msra.mxu0 0
      %1191 = vmatprep.subr.bf16.mxu0 0
      %1192 = vmatpush1.bf16.xpose.msra.mxu0 0
      %1193 = vmatprep.subr.bf16.mxu0 0
      %1194 = vmatpush1.bf16.xpose.msra.mxu0 0
      %1195 = vmatprep.subr.bf16.mxu0 0
      %1196 = vmatpush1.bf16.xpose.msra.mxu0 0
      %1197 = vmatprep.subr.bf16.mxu0 0
      %1198 = vmatpush1.bf16.xpose.msra.mxu0 0
      %1199 = vmatprep.subr.bf16.mxu0 0
      %1200 = vmatpush1.bf16.xpose.msra.mxu0 0
      %1201 = vmatprep.subr.bf16.mxu0 0
      %1202 = vmatpush1.bf16.xpose.msra.mxu0 0
      %1203 = vmatprep.subr.bf16.mxu0 0
      %1204 = vmatpush1.bf16.xpose.msra.mxu0 0
      %1205 = vmatprep.subr.bf16.mxu0 0
      %1206 = vmatpush1.bf16.xpose.msra.mxu0 0
      %1207 = vmatprep.subr.bf16.mxu0 0
      %1208 = vmatpush1.bf16.xpose.msra.mxu0 0
      %1209 = vmatprep.subr.bf16.mxu0 0
      %1210 = vmatpush1.bf16.xpose.msra.mxu0 0
      %1211 = vmatprep.subr.bf16.mxu0 0
      %1212 = vmatpush1.bf16.xpose.msra.mxu0 0
      %1213 = vmatprep.mubr.bf16.mxu0 0
      %1214 = vmatmul.mubr.bf16.gmra.mrb[0].mxu0 %v1176
      %v1215 = vpop.f32.mrb[0].mxu0
      %v1216 = vadd.f32 %v1168, %v1215
      %v1217 = vpop.f32.mrb[0].mxu0
      %v1218 = vpop.f32.mrb[0].mxu0
      %v1219 = vpop.f32.mrb[0].mxu0
      %1220 = vdwg.mxu0
      %1222 = vrot.lane.b32.xlu0 %v871, 96
      %v1223 = vpop.permute.xlu0 %1222
      %v1225 = vsel %vm892, %v859, 0
      %v1228 = vsel %vm892, %v1223, 0
      %1230 = vmatprep.subr.bf16.mxu0 0
      %1231 = vmatpush1.bf16.xpose.msra.mxu0 %v1228
      %1232 = vmatprep.subr.bf16.mxu0 0
      %1233 = vmatpush1.bf16.xpose.msra.mxu0 0
      %1234 = vmatprep.subr.bf16.mxu0 0
      %1235 = vmatpush1.bf16.xpose.msra.mxu0 0
      %1236 = vmatprep.subr.bf16.mxu0 0
      %1237 = vmatpush1.bf16.xpose.msra.mxu0 0
      %1238 = vmatprep.subr.bf16.mxu0 0
      %1239 = vmatpush1.bf16.xpose.msra.mxu0 0
      %1240 = vmatprep.subr.bf16.mxu0 0
      %1241 = vmatpush1.bf16.xpose.msra.mxu0 0
      %1242 = vmatprep.subr.bf16.mxu0 0
      %1243 = vmatpush1.bf16.xpose.msra.mxu0 0
      %1244 = vmatprep.subr.bf16.mxu0 0
      %1245 = vmatpush1.bf16.xpose.msra.mxu0 0
      %1246 = vmatprep.subr.bf16.mxu0 0
      %1247 = vmatpush1.bf16.xpose.msra.mxu0 0
      %1248 = vmatprep.subr.bf16.mxu0 0
      %1249 = vmatpush1.bf16.xpose.msra.mxu0 0
      %1250 = vmatprep.subr.bf16.mxu0 0
      %1251 = vmatpush1.bf16.xpose.msra.mxu0 0
      %1252 = vmatprep.subr.bf16.mxu0 0
      %1253 = vmatpush1.bf16.xpose.msra.mxu0 0
      %1254 = vmatprep.subr.bf16.mxu0 0
      %1255 = vmatpush1.bf16.xpose.msra.mxu0 0
      %1256 = vmatprep.subr.bf16.mxu0 0
      %1257 = vmatpush1.bf16.xpose.msra.mxu0 0
      %1258 = vmatprep.subr.bf16.mxu0 0
      %1259 = vmatpush1.bf16.xpose.msra.mxu0 0
      %1260 = vmatprep.subr.bf16.mxu0 0
      %1261 = vmatpush1.bf16.xpose.msra.mxu0 0
      %1262 = vmatprep.mubr.bf16.mxu0 0
      %1263 = vmatmul.mubr.bf16.gmra.mrb[0].mxu0 %v1225
      %v1264 = vpop.f32.mrb[0].mxu0
      %v1265 = vadd.f32 %v1169, %v1264
      %v1266 = vpop.f32.mrb[0].mxu0
      %v1267 = vpop.f32.mrb[0].mxu0
      %v1268 = vpop.f32.mrb[0].mxu0
      %1269 = vdwg.mxu0
      %1271 = vrot.lane.b32.xlu0 %v872, 96
      %v1272 = vpop.permute.xlu0 %1271
      %v1274 = vsel %vm892, %v860, 0
      %v1277 = vsel %vm892, %v1272, 0
      %1279 = vmatprep.subr.bf16.mxu0 0
      %1280 = vmatpush1.bf16.xpose.msra.mxu0 %v1277
      %1281 = vmatprep.subr.bf16.mxu0 0
      %1282 = vmatpush1.bf16.xpose.msra.mxu0 0
      %1283 = vmatprep.subr.bf16.mxu0 0
      %1284 = vmatpush1.bf16.xpose.msra.mxu0 0
      %1285 = vmatprep.subr.bf16.mxu0 0
      %1286 = vmatpush1.bf16.xpose.msra.mxu0 0
      %1287 = vmatprep.subr.bf16.mxu0 0
      %1288 = vmatpush1.bf16.xpose.msra.mxu0 0
      %1289 = vmatprep.subr.bf16.mxu0 0
      %1290 = vmatpush1.bf16.xpose.msra.mxu0 0
      %1291 = vmatprep.subr.bf16.mxu0 0
      %1292 = vmatpush1.bf16.xpose.msra.mxu0 0
      %1293 = vmatprep.subr.bf16.mxu0 0
      %1294 = vmatpush1.bf16.xpose.msra.mxu0 0
      %1295 = vmatprep.subr.bf16.mxu0 0
      %1296 = vmatpush1.bf16.xpose.msra.mxu0 0
      %1297 = vmatprep.subr.bf16.mxu0 0
      %1298 = vmatpush1.bf16.xpose.msra.mxu0 0
      %1299 = vmatprep.subr.bf16.mxu0 0
      %1300 = vmatpush1.bf16.xpose.msra.mxu0 0
      %1301 = vmatprep.subr.bf16.mxu0 0
      %1302 = vmatpush1.bf16.xpose.msra.mxu0 0
      %1303 = vmatprep.subr.bf16.mxu0 0
      %1304 = vmatpush1.bf16.xpose.msra.mxu0 0
      %1305 = vmatprep.subr.bf16.mxu0 0
      %1306 = vmatpush1.bf16.xpose.msra.mxu0 0
      %1307 = vmatprep.subr.bf16.mxu0 0
      %1308 = vmatpush1.bf16.xpose.msra.mxu0 0
      %1309 = vmatprep.subr.bf16.mxu0 0
      %1310 = vmatpush1.bf16.xpose.msra.mxu0 0
      %1311 = vmatprep.mubr.bf16.mxu0 0
      %1312 = vmatmul.mubr.bf16.gmra.mrb[0].mxu0 %v1274
      %v1313 = vpop.f32.mrb[0].mxu0
      %v1314 = vadd.f32 %v1170, %v1313
      %v1315 = vpop.f32.mrb[0].mxu0
      %v1316 = vpop.f32.mrb[0].mxu0
      %v1317 = vpop.f32.mrb[0].mxu0
      %1318 = vdwg.mxu0
      %1320 = vrot.lane.b32.xlu0 %v873, 96
      %v1321 = vpop.permute.xlu0 %1320
      %v1323 = vsel %vm892, %v861, 0
      %v1326 = vsel %vm892, %v1321, 0
      %1328 = vmatprep.subr.bf16.mxu0 0
      %1329 = vmatpush1.bf16.xpose.msra.mxu0 %v1326
      %1330 = vmatprep.subr.bf16.mxu0 0
      %1331 = vmatpush1.bf16.xpose.msra.mxu0 0
      %1332 = vmatprep.subr.bf16.mxu0 0
      %1333 = vmatpush1.bf16.xpose.msra.mxu0 0
      %1334 = vmatprep.subr.bf16.mxu0 0
      %1335 = vmatpush1.bf16.xpose.msra.mxu0 0
      %1336 = vmatprep.subr.bf16.mxu0 0
      %1337 = vmatpush1.bf16.xpose.msra.mxu0 0
      %1338 = vmatprep.subr.bf16.mxu0 0
      %1339 = vmatpush1.bf16.xpose.msra.mxu0 0
      %1340 = vmatprep.subr.bf16.mxu0 0
      %1341 = vmatpush1.bf16.xpose.msra.mxu0 0
      %1342 = vmatprep.subr.bf16.mxu0 0
      %1343 = vmatpush1.bf16.xpose.msra.mxu0 0
      %1344 = vmatprep.subr.bf16.mxu0 0
      %1345 = vmatpush1.bf16.xpose.msra.mxu0 0
      %1346 = vmatprep.subr.bf16.mxu0 0
      %1347 = vmatpush1.bf16.xpose.msra.mxu0 0
      %1348 = vmatprep.subr.bf16.mxu0 0
      %1349 = vmatpush1.bf16.xpose.msra.mxu0 0
      %1350 = vmatprep.subr.bf16.mxu0 0
      %1351 = vmatpush1.bf16.xpose.msra.mxu0 0
      %1352 = vmatprep.subr.bf16.mxu0 0
      %1353 = vmatpush1.bf16.xpose.msra.mxu0 0
      %1354 = vmatprep.subr.bf16.mxu0 0
      %1355 = vmatpush1.bf16.xpose.msra.mxu0 0
      %1356 = vmatprep.subr.bf16.mxu0 0
      %1357 = vmatpush1.bf16.xpose.msra.mxu0 0
      %1358 = vmatprep.subr.bf16.mxu0 0
      %1359 = vmatpush1.bf16.xpose.msra.mxu0 0
      %1360 = vmatprep.mubr.bf16.mxu0 0
      %1361 = vmatmul.mubr.bf16.gmra.mrb[0].mxu0 %v1323
      %v1362 = vpop.f32.mrb[0].mxu0
      %v1363 = vadd.f32 %v1171, %v1362
      %v1364 = vpop.f32.mrb[0].mxu0
      %v1365 = vpop.f32.mrb[0].mxu0
      %v1366 = vpop.f32.mrb[0].mxu0
      %1367 = vdwg.mxu0
      %v1368 = vld [vmem:[%s1] sm:$0xff]
      %v1369 = vadd.f32 %v1216, %v1368
      %v1370 = vadd.f32 %v1265, %v1368
      %v1371 = vadd.f32 %v1314, %v1368
      %v1372 = vadd.f32 %v1363, %v1368
      %vm1373 = vcmask 64512
      %v1374 = vsel %vm1373, %v1369, -inf
      %1375 = vmax.xlane.f32.xlu0 %v1374
      %v1376 = vpop.xlane.xlu0 %1375
      %v1377 = vsel %vm1373, %v1370, -inf
      %1378 = vmax.xlane.f32.xlu0 %v1377
      %v1379 = vpop.xlane.xlu0 %1378
      %v1380 = vsel %vm1373, %v1371, -inf
      %1381 = vmax.xlane.f32.xlu0 %v1380
      %v1382 = vpop.xlane.xlu0 %1381
      %v1383 = vsel %vm1373, %v1372, -inf
      %1384 = vmax.xlane.f32.xlu0 %v1383
      %v1385 = vpop.xlane.xlu0 %1384
      %v1386 = vsub.f32 %v1369, %v1376
      %v1387 = vsub.f32 %v1370, %v1379
      %v1388 = vsub.f32 %v1371, %v1382
      %v1389 = vsub.f32 %v1372, %v1385
      %v1390 = vmul.f32 %v1386, 1.442695
      %v1391 = vpow.pop %v1390
      %v1392 = vmul.f32 %v1387, 1.442695
      %v1393 = vpow.pop %v1392
      %v1394 = vmul.f32 %v1388, 1.442695
      %v1395 = vpow.pop %v1394
      %v1396 = vmul.f32 %v1389, 1.442695
      %v1397 = vpow.pop %v1396
      %v1398 = vsel %vm1373, %v1391, 0.0
      %1399 = vadd.xlane.f32.xlu0 %v1398
      %v1400 = vpop.xlane.xlu0 %1399
      %v1401 = vsel %vm1373, %v1393, 0.0
      %1402 = vadd.xlane.f32.xlu0 %v1401
      %v1403 = vpop.xlane.xlu0 %1402
      %v1404 = vsel %vm1373, %v1395, 0.0
      %1405 = vadd.xlane.f32.xlu0 %v1404
      %v1406 = vpop.xlane.xlu0 %1405
      %v1407 = vsel %vm1373, %v1397, 0.0
      %1408 = vadd.xlane.f32.xlu0 %v1407
      %v1409 = vpop.xlane.xlu0 %1408
      %v1410 = vpack.c.bf16 %v1391, %v1391
      %v1411 = vpack.c.bf16 %v1393, %v1393
      %v1412 = vpack.c.bf16 %v1395, %v1395
      %v1413 = vpack.c.bf16 %v1397, %v1397
      %1414 = vrot.lane.b32.xlu0 %v870, 64
      %v1415 = vpop.permute.xlu0 %1414
      %v1417 = vsel %vm1373, %v1410, 0
      %vm1419 = vcmask 1043456
      %v1421 = vsel %vm1419, %v1415, 0
      %1423 = vmatprep.subr.bf16.mxu0 0
      %1424 = vmatpush1.bf16.msra.mxu0 %v1421
      %1425 = vmatprep.subr.bf16.mxu0 0
      %1426 = vmatpush1.bf16.msra.mxu0 0
      %1427 = vmatprep.subr.bf16.mxu0 0
      %1428 = vmatpush1.bf16.msra.mxu0 0
      %1429 = vmatprep.subr.bf16.mxu0 0
      %1430 = vmatpush1.bf16.msra.mxu0 0
      %1431 = vmatprep.subr.bf16.mxu0 0
      %1432 = vmatpush1.bf16.msra.mxu0 0
      %1433 = vmatprep.subr.bf16.mxu0 0
      %1434 = vmatpush1.bf16.msra.mxu0 0
      %1435 = vmatprep.subr.bf16.mxu0 0
      %1436 = vmatpush1.bf16.msra.mxu0 0
      %1437 = vmatprep.subr.bf16.mxu0 0
      %1438 = vmatpush1.bf16.msra.mxu0 0
      %1439 = vmatprep.subr.bf16.mxu0 0
      %1440 = vmatpush1.bf16.msra.mxu0 0
      %1441 = vmatprep.subr.bf16.mxu0 0
      %1442 = vmatpush1.bf16.msra.mxu0 0
      %1443 = vmatprep.subr.bf16.mxu0 0
      %1444 = vmatpush1.bf16.msra.mxu0 0
      %1445 = vmatprep.subr.bf16.mxu0 0
      %1446 = vmatpush1.bf16.msra.mxu0 0
      %1447 = vmatprep.subr.bf16.mxu0 0
      %1448 = vmatpush1.bf16.msra.mxu0 0
      %1449 = vmatprep.subr.bf16.mxu0 0
      %1450 = vmatpush1.bf16.msra.mxu0 0
      %1451 = vmatprep.subr.bf16.mxu0 0
      %1452 = vmatpush1.bf16.msra.mxu0 0
      %1453 = vmatprep.subr.bf16.mxu0 0
      %1454 = vmatpush1.bf16.msra.mxu0 0
      %1455 = vmatprep.mubr.bf16.mxu0 0
      %1456 = vmatmul.mubr.bf16.gmra.mrb[0].mxu0 %v1417
      %v1457 = vpop.f32.mrb[0].mxu0
      %v1458 = vadd.f32 0.0, %v1457
      %v1459 = vpop.f32.mrb[0].mxu0
      %v1460 = vpop.f32.mrb[0].mxu0
      %v1461 = vpop.f32.mrb[0].mxu0
      %1462 = vdwg.mxu0
      %1463 = vrot.lane.b32.xlu0 %v871, 64
      %v1464 = vpop.permute.xlu0 %1463
      %v1466 = vsel %vm1373, %v1411, 0
      %v1469 = vsel %vm1419, %v1464, 0
      %1471 = vmatprep.subr.bf16.mxu0 0
      %1472 = vmatpush1.bf16.msra.mxu0 %v1469
      %1473 = vmatprep.subr.bf16.mxu0 0
      %1474 = vmatpush1.bf16.msra.mxu0 0
      %1475 = vmatprep.subr.bf16.mxu0 0
      %1476 = vmatpush1.bf16.msra.mxu0 0
      %1477 = vmatprep.subr.bf16.mxu0 0
      %1478 = vmatpush1.bf16.msra.mxu0 0
      %1479 = vmatprep.subr.bf16.mxu0 0
      %1480 = vmatpush1.bf16.msra.mxu0 0
      %1481 = vmatprep.subr.bf16.mxu0 0
      %1482 = vmatpush1.bf16.msra.mxu0 0
      %1483 = vmatprep.subr.bf16.mxu0 0
      %1484 = vmatpush1.bf16.msra.mxu0 0
      %1485 = vmatprep.subr.bf16.mxu0 0
      %1486 = vmatpush1.bf16.msra.mxu0 0
      %1487 = vmatprep.subr.bf16.mxu0 0
      %1488 = vmatpush1.bf16.msra.mxu0 0
      %1489 = vmatprep.subr.bf16.mxu0 0
      %1490 = vmatpush1.bf16.msra.mxu0 0
      %1491 = vmatprep.subr.bf16.mxu0 0
      %1492 = vmatpush1.bf16.msra.mxu0 0
      %1493 = vmatprep.subr.bf16.mxu0 0
      %1494 = vmatpush1.bf16.msra.mxu0 0
      %1495 = vmatprep.subr.bf16.mxu0 0
      %1496 = vmatpush1.bf16.msra.mxu0 0
      %1497 = vmatprep.subr.bf16.mxu0 0
      %1498 = vmatpush1.bf16.msra.mxu0 0
      %1499 = vmatprep.subr.bf16.mxu0 0
      %1500 = vmatpush1.bf16.msra.mxu0 0
      %1501 = vmatprep.subr.bf16.mxu0 0
      %1502 = vmatpush1.bf16.msra.mxu0 0
      %1503 = vmatprep.mubr.bf16.mxu0 0
      %1504 = vmatmul.mubr.bf16.gmra.mrb[0].mxu0 %v1466
      %v1505 = vpop.f32.mrb[0].mxu0
      %v1506 = vadd.f32 0.0, %v1505
      %v1507 = vpop.f32.mrb[0].mxu0
      %v1508 = vpop.f32.mrb[0].mxu0
      %v1509 = vpop.f32.mrb[0].mxu0
      %1510 = vdwg.mxu0
      %1511 = vrot.lane.b32.xlu0 %v872, 64
      %v1512 = vpop.permute.xlu0 %1511
      %v1514 = vsel %vm1373, %v1412, 0
      %v1517 = vsel %vm1419, %v1512, 0
      %1519 = vmatprep.subr.bf16.mxu0 0
      %1520 = vmatpush1.bf16.msra.mxu0 %v1517
      %1521 = vmatprep.subr.bf16.mxu0 0
      %1522 = vmatpush1.bf16.msra.mxu0 0
      %1523 = vmatprep.subr.bf16.mxu0 0
      %1524 = vmatpush1.bf16.msra.mxu0 0
      %1525 = vmatprep.subr.bf16.mxu0 0
      %1526 = vmatpush1.bf16.msra.mxu0 0
      %1527 = vmatprep.subr.bf16.mxu0 0
      %1528 = vmatpush1.bf16.msra.mxu0 0
      %1529 = vmatprep.subr.bf16.mxu0 0
      %1530 = vmatpush1.bf16.msra.mxu0 0
      %1531 = vmatprep.subr.bf16.mxu0 0
      %1532 = vmatpush1.bf16.msra.mxu0 0
      %1533 = vmatprep.subr.bf16.mxu0 0
      %1534 = vmatpush1.bf16.msra.mxu0 0
      %1535 = vmatprep.subr.bf16.mxu0 0
      %1536 = vmatpush1.bf16.msra.mxu0 0
      %1537 = vmatprep.subr.bf16.mxu0 0
      %1538 = vmatpush1.bf16.msra.mxu0 0
      %1539 = vmatprep.subr.bf16.mxu0 0
      %1540 = vmatpush1.bf16.msra.mxu0 0
      %1541 = vmatprep.subr.bf16.mxu0 0
      %1542 = vmatpush1.bf16.msra.mxu0 0
      %1543 = vmatprep.subr.bf16.mxu0 0
      %1544 = vmatpush1.bf16.msra.mxu0 0
      %1545 = vmatprep.subr.bf16.mxu0 0
      %1546 = vmatpush1.bf16.msra.mxu0 0
      %1547 = vmatprep.subr.bf16.mxu0 0
      %1548 = vmatpush1.bf16.msra.mxu0 0
      %1549 = vmatprep.subr.bf16.mxu0 0
      %1550 = vmatpush1.bf16.msra.mxu0 0
      %1551 = vmatprep.mubr.bf16.mxu0 0
      %1552 = vmatmul.mubr.bf16.gmra.mrb[0].mxu0 %v1514
      %v1553 = vpop.f32.mrb[0].mxu0
      %v1554 = vadd.f32 0.0, %v1553
      %v1555 = vpop.f32.mrb[0].mxu0
      %v1556 = vpop.f32.mrb[0].mxu0
      %v1557 = vpop.f32.mrb[0].mxu0
      %1558 = vdwg.mxu0
      %1559 = vrot.lane.b32.xlu0 %v873, 64
      %v1560 = vpop.permute.xlu0 %1559
      %v1562 = vsel %vm1373, %v1413, 0
      %v1565 = vsel %vm1419, %v1560, 0
      %1567 = vmatprep.subr.bf16.mxu0 0
      %1568 = vmatpush1.bf16.msra.mxu0 %v1565
      %1569 = vmatprep.subr.bf16.mxu0 0
      %1570 = vmatpush1.bf16.msra.mxu0 0
      %1571 = vmatprep.subr.bf16.mxu0 0
      %1572 = vmatpush1.bf16.msra.mxu0 0
      %1573 = vmatprep.subr.bf16.mxu0 0
      %1574 = vmatpush1.bf16.msra.mxu0 0
      %1575 = vmatprep.subr.bf16.mxu0 0
      %1576 = vmatpush1.bf16.msra.mxu0 0
      %1577 = vmatprep.subr.bf16.mxu0 0
      %1578 = vmatpush1.bf16.msra.mxu0 0
      %1579 = vmatprep.subr.bf16.mxu0 0
      %1580 = vmatpush1.bf16.msra.mxu0 0
      %1581 = vmatprep.subr.bf16.mxu0 0
      %1582 = vmatpush1.bf16.msra.mxu0 0
      %1583 = vmatprep.subr.bf16.mxu0 0
      %1584 = vmatpush1.bf16.msra.mxu0 0
      %1585 = vmatprep.subr.bf16.mxu0 0
      %1586 = vmatpush1.bf16.msra.mxu0 0
      %1587 = vmatprep.subr.bf16.mxu0 0
      %1588 = vmatpush1.bf16.msra.mxu0 0
      %1589 = vmatprep.subr.bf16.mxu0 0
      %1590 = vmatpush1.bf16.msra.mxu0 0
      %1591 = vmatprep.subr.bf16.mxu0 0
      %1592 = vmatpush1.bf16.msra.mxu0 0
      %1593 = vmatprep.subr.bf16.mxu0 0
      %1594 = vmatpush1.bf16.msra.mxu0 0
      %1595 = vmatprep.subr.bf16.mxu0 0
      %1596 = vmatpush1.bf16.msra.mxu0 0
      %1597 = vmatprep.subr.bf16.mxu0 0
      %1598 = vmatpush1.bf16.msra.mxu0 0
      %1599 = vmatprep.mubr.bf16.mxu0 0
      %1600 = vmatmul.mubr.bf16.gmra.mrb[0].mxu0 %v1562
      %v1601 = vpop.f32.mrb[0].mxu0
      %v1602 = vadd.f32 0.0, %v1601
      %v1603 = vpop.f32.mrb[0].mxu0
      %v1604 = vpop.f32.mrb[0].mxu0
      %v1605 = vpop.f32.mrb[0].mxu0
      %1606 = vdwg.mxu0
      %v1607 = vrcp.pop %v1400
      %v1608 = vrcp.pop %v1403
      %v1609 = vrcp.pop %v1406
      %v1610 = vrcp.pop %v1409
      %v1611 = vmul.f32 %v1458, %v1607
      %v1612 = vmul.f32 %v1506, %v1608
      %v1613 = vmul.f32 %v1554, %v1609
      %v1614 = vmul.f32 %v1602, %v1610
      %v1615 = vpack.c.bf16 %v1611, %v1611
      %v1616 = vpack.c.bf16 %v1612, %v1612
      %v1617 = vpack.c.bf16 %v1613, %v1613
      %v1618 = vpack.c.bf16 %v1614, %v1614
      %1620 = vrot.lane.b32.xlu0 %v1616, 16
      %v1621 = vpop.permute.xlu0 %1620
      %v1624 = vsel %vm892, %v1615, %v1621
      %1626 = vrot.lane.b32.xlu0 %v1618, 16
      %v1627 = vpop.permute.xlu0 %1626
      %v1630 = vsel %vm892, %v1617, %v1627
      %v1632 = vrot.slane %v1630, 4
      %v1634 = vsel %vm1419, %v1624, %v1632
      %v1635 = vld [vmem:[%s690] sm:$0xf]
      %v1636 = vld [vmem:[%s690 + $0x4] sm:$0xf]
      %v1637 = vld [vmem:[%s690 + $0x8] sm:$0xf]
      %v1638 = vld [vmem:[%s690 + $0xc] sm:$0xf]
      %v1639 = vld [vmem:[%s693] sm:$0x1]
      %v1641 = vlaneseq
      %v1642 = vshrl.u32 %v1641, 7
      %v1643 = vsub.s32 0, %v1642
      %v1644 = vrot.slane %v1639, %v1643
      %v1650 = vunpack.c.l.b16 %v1635
      %v1651 = vunpack.c.l.b16 %v1636
      %v1652 = vunpack.c.l.b16 %v1637
      %v1653 = vunpack.c.l.b16 %v1638
      %v1654 = vpack.c.b16 %v1651, %v1650
      %v1655 = vpack.c.b16 %v1653, %v1652
      %v1658 = vsel %vm736, %v1634, 0
      %1660 = vmatprep.subr.bf16.mxu0 0
      %1661 = vmatpush1.bf16.msra.mxu0 %v1654
      %1662 = vmatprep.subr.bf16.mxu0 0
      %1663 = vmatpush1.bf16.msra.mxu0 %v1655
      %1664 = vmatprep.subr.bf16.mxu0 0
      %1665 = vmatpush1.bf16.msra.mxu0 0
      %1666 = vmatprep.subr.bf16.mxu0 0
      %1667 = vmatpush1.bf16.msra.mxu0 0
      %1668 = vmatprep.subr.bf16.mxu0 0
      %1669 = vmatpush1.bf16.msra.mxu0 0
      %1670 = vmatprep.subr.bf16.mxu0 0
      %1671 = vmatpush1.bf16.msra.mxu0 0
      %1672 = vmatprep.subr.bf16.mxu0 0
      %1673 = vmatpush1.bf16.msra.mxu0 0
      %1674 = vmatprep.subr.bf16.mxu0 0
      %1675 = vmatpush1.bf16.msra.mxu0 0
      %1676 = vmatprep.subr.bf16.mxu0 0
      %1677 = vmatpush1.bf16.msra.mxu0 0
      %1678 = vmatprep.subr.bf16.mxu0 0
      %1679 = vmatpush1.bf16.msra.mxu0 0
      %1680 = vmatprep.subr.bf16.mxu0 0
      %1681 = vmatpush1.bf16.msra.mxu0 0
      %1682 = vmatprep.subr.bf16.mxu0 0
      %1683 = vmatpush1.bf16.msra.mxu0 0
      %1684 = vmatprep.subr.bf16.mxu0 0
      %1685 = vmatpush1.bf16.msra.mxu0 0
      %1686 = vmatprep.subr.bf16.mxu0 0
      %1687 = vmatpush1.bf16.msra.mxu0 0
      %1688 = vmatprep.subr.bf16.mxu0 0
      %1689 = vmatpush1.bf16.msra.mxu0 0
      %1690 = vmatprep.subr.bf16.mxu0 0
      %1691 = vmatpush1.bf16.msra.mxu0 0
      %1692 = vmatprep.mubr.bf16.mxu0 0
      %1693 = vmatmul.mubr.bf16.gmra.mrb[0].mxu0 %v1658
      %v1694 = vpop.f32.mrb[0].mxu0
      %v1695 = vadd.f32 %v1644, %v1694
      %v1696 = vpop.f32.mrb[0].mxu0
      %v1697 = vpop.f32.mrb[0].mxu0
      %v1698 = vadd.f32 %v1644, %v1697
      %v1699 = vpop.f32.mrb[0].mxu0
      %1700 = vdwg.mxu0
      %v1701 = vadd.f32 %v732, %v1695
      %v1702 = vadd.f32 %v733, %v1698
      %v1703 = vld [vmem:[%s696] sm:$0x1]
      %v1704 = vld [vmem:[%s699] sm:$0x1]
      %v1705 = vsel %vm736, %v1701, 0.0
      %1706 = vadd.xlane.f32.xlu0 %v1705
      %v1707 = vpop.xlane.xlu0 %1706
      %v1708 = vsel %vm736, %v1702, 0.0
      %1709 = vadd.xlane.f32.xlu0 %v1708
      %v1710 = vpop.xlane.xlu0 %1709
      %v1711 = vmul.f32 %v1707, %v743
      %v1712 = vmul.f32 %v1710, %v743
      %v1713 = vsub.f32 %v1701, %v1711
      %v1714 = vsub.f32 %v1702, %v1712
      %v1715 = vmul.f32 %v1713, %v1713
      %v1716 = vmul.f32 %v1714, %v1714
      %v1717 = vsel %vm736, %v1715, 0.0
      %1718 = vadd.xlane.f32.xlu0 %v1717
      %v1719 = vpop.xlane.xlu0 %1718
      %v1720 = vsel %vm736, %v1716, 0.0
      %1721 = vadd.xlane.f32.xlu0 %v1720
      %v1722 = vpop.xlane.xlu0 %1721
      %v1723 = vmul.f32 %v1719, %v743
      %v1724 = vmul.f32 %v1722, %v743
      %v1725 = vadd.f32 %v1723, 1e-05
      %v1726 = vadd.f32 %v1724, 1e-05
      %v1727 = vrsqrt.pop %v1725
      %v1728 = vrsqrt.pop %v1726
      %v1729 = vmul.f32 %v1713, %v1727
      %v1730 = vmul.f32 %v1714, %v1728
      %v1732 = vlaneseq
      %v1733 = vshrl.u32 %v1732, 7
      %v1734 = vsub.s32 0, %v1733
      %v1735 = vrot.slane %v1703, %v1734
      %v1737 = vmul.f32 %v1729, %v1735
      %v1738 = vmul.f32 %v1730, %v1735
      %v1740 = vlaneseq
      %v1741 = vshrl.u32 %v1740, 7
      %v1742 = vsub.s32 0, %v1741
      %v1743 = vrot.slane %v1704, %v1742
      %v1745 = vadd.f32 %v1737, %v1743
      %v1746 = vadd.f32 %v1738, %v1743
      %v1747 = vpack.c.bf16 %v1746, %v1745
      %v1748 = vld [vmem:[%s704] sm:$0xf]
      %v1749 = vld [vmem:[%s704 + $0x4] sm:$0xf]
      %v1750 = vld [vmem:[%s704 + $0x8] sm:$0xf]
      %v1751 = vld [vmem:[%s704 + $0xc] sm:$0xf]
      %v1752 = vld [vmem:[%s707] sm:$0x1]
      %v1754 = vlaneseq
      %v1755 = vshrl.u32 %v1754, 7
      %v1756 = vsub.s32 0, %v1755
      %v1757 = vrot.slane %v1752, %v1756
      %v1763 = vunpack.c.l.b16 %v1748
      %v1764 = vunpack.c.l.b16 %v1749
      %v1765 = vunpack.c.l.b16 %v1750
      %v1766 = vunpack.c.l.b16 %v1751
      %v1767 = vpack.c.b16 %v1764, %v1763
      %v1768 = vpack.c.b16 %v1766, %v1765
      %v1772 = vsel %vm736, %v1747, 0
      %1774 = vmatprep.subr.bf16.mxu0 0
      %1775 = vmatpush1.bf16.msra.mxu0 %v1767
      %1776 = vmatprep.subr.bf16.mxu0 0
      %1777 = vmatpush1.bf16.msra.mxu0 %v1768
      %1778 = vmatprep.subr.bf16.mxu0 0
      %1779 = vmatpush1.bf16.msra.mxu0 0
      %1780 = vmatprep.subr.bf16.mxu0 0
      %1781 = vmatpush1.bf16.msra.mxu0 0
      %1782 = vmatprep.subr.bf16.mxu0 0
      %1783 = vmatpush1.bf16.msra.mxu0 0
      %1784 = vmatprep.subr.bf16.mxu0 0
      %1785 = vmatpush1.bf16.msra.mxu0 0
      %1786 = vmatprep.subr.bf16.mxu0 0
      %1787 = vmatpush1.bf16.msra.mxu0 0
      %1788 = vmatprep.subr.bf16.mxu0 0
      %1789 = vmatpush1.bf16.msra.mxu0 0
      %1790 = vmatprep.subr.bf16.mxu0 0
      %1791 = vmatpush1.bf16.msra.mxu0 0
      %1792 = vmatprep.subr.bf16.mxu0 0
      %1793 = vmatpush1.bf16.msra.mxu0 0
      %1794 = vmatprep.subr.bf16.mxu0 0
      %1795 = vmatpush1.bf16.msra.mxu0 0
      %1796 = vmatprep.subr.bf16.mxu0 0
      %1797 = vmatpush1.bf16.msra.mxu0 0
      %1798 = vmatprep.subr.bf16.mxu0 0
      %1799 = vmatpush1.bf16.msra.mxu0 0
      %1800 = vmatprep.subr.bf16.mxu0 0
      %1801 = vmatpush1.bf16.msra.mxu0 0
      %1802 = vmatprep.subr.bf16.mxu0 0
      %1803 = vmatpush1.bf16.msra.mxu0 0
      %1804 = vmatprep.subr.bf16.mxu0 0
      %1805 = vmatpush1.bf16.msra.mxu0 0
      %1806 = vmatprep.mubr.bf16.mxu0 0
      %1807 = vmatmul.mubr.bf16.gmra.mrb[0].mxu0 %v1772
      %v1808 = vpop.f32.mrb[0].mxu0
      %v1809 = vadd.f32 %v1757, %v1808
      %v1810 = vpop.f32.mrb[0].mxu0
      %v1811 = vpop.f32.mrb[0].mxu0
      %v1812 = vadd.f32 %v1757, %v1811
      %v1813 = vpop.f32.mrb[0].mxu0
      %1814 = vdwg.mxu0
      %v1815 = vmul.f32 %v1809, 0.5
      %v1816 = vmul.f32 %v1812, 0.5
      %v1817 = vmul.f32 %v1809, 0.70710677
      %v1818 = vmul.f32 %v1812, 0.70710677
      %vm1819 = vcmp.ge.f32.partialorder %v1817, 0.0
      %vm1820 = vcmp.ge.f32.partialorder %v1818, 0.0
      %v1821 = vsel %vm1819, 1.0, -1.0
      %v1822 = vsel %vm1820, 1.0, -1.0
      %v1823 = vand.u32 2147483647, %v1817
      %v1824 = vand.u32 2147483647, %v1818
      %v1825 = vmul.f32 %v1823, 0.3275911
      %v1826 = vmul.f32 %v1824, 0.3275911
      %v1827 = vadd.f32 %v1825, 1.0
      %v1828 = vadd.f32 %v1826, 1.0
      %v1829 = vrcp.pop %v1827
      %v1830 = vrcp.pop %v1828
      %v1831 = vmul.f32 %v1829, 1.0614054
      %v1832 = vmul.f32 %v1830, 1.0614054
      %v1833 = vadd.f32 %v1831, -1.4531521
      %v1834 = vadd.f32 %v1832, -1.4531521
      %v1835 = vmul.f32 %v1833, %v1829
      %v1836 = vmul.f32 %v1834, %v1830
      %v1837 = vadd.f32 %v1835, 1.4214138
      %v1838 = vadd.f32 %v1836, 1.4214138
      %v1839 = vmul.f32 %v1837, %v1829
      %v1840 = vmul.f32 %v1838, %v1830
      %v1841 = vadd.f32 %v1839, -0.28449672
      %v1842 = vadd.f32 %v1840, -0.28449672
      %v1843 = vmul.f32 %v1841, %v1829
      %v1844 = vmul.f32 %v1842, %v1830
      %v1845 = vadd.f32 %v1843, 0.2548296
      %v1846 = vadd.f32 %v1844, 0.2548296
      %v1847 = vmul.f32 %v1845, %v1829
      %v1848 = vmul.f32 %v1846, %v1830
      %v1849 = vsub.f32 0.0, %v1823
      %v1850 = vsub.f32 0.0, %v1824
      %v1851 = vmul.f32 %v1849, %v1823
      %v1852 = vmul.f32 %v1850, %v1824
      %v1853 = vmul.f32 %v1851, 1.442695
      %v1854 = vpow.pop %v1853
      %v1855 = vmul.f32 %v1852, 1.442695
      %v1856 = vpow.pop %v1855
      %v1857 = vmul.f32 %v1847, %v1854
      %v1858 = vmul.f32 %v1848, %v1856
      %v1859 = vsub.f32 1.0, %v1857
      %v1860 = vsub.f32 1.0, %v1858
      %v1861 = vmul.f32 %v1821, %v1859
      %v1862 = vmul.f32 %v1822, %v1860
      %v1863 = vadd.f32 %v1861, 1.0
      %v1864 = vadd.f32 %v1862, 1.0
      %v1865 = vmul.f32 %v1815, %v1863
      %v1866 = vmul.f32 %v1816, %v1864
      %v1867 = vpack.c.bf16 %v1866, %v1865
      %v1868 = vld [vmem:[%s712] sm:$0xf]
      %v1869 = vld [vmem:[%s712 + $0x4] sm:$0xf]
      %v1870 = vld [vmem:[%s712 + $0x8] sm:$0xf]
      %v1871 = vld [vmem:[%s712 + $0xc] sm:$0xf]
      %v1872 = vld [vmem:[%s712 + $0x10] sm:$0xf]
      %v1873 = vld [vmem:[%s712 + $0x14] sm:$0xf]
      %v1874 = vld [vmem:[%s712 + $0x18] sm:$0xf]
      %v1875 = vld [vmem:[%s712 + $0x1c] sm:$0xf]
      %v1876 = vld [vmem:[%s712 + $0x20] sm:$0xf]
      %v1877 = vld [vmem:[%s712 + $0x24] sm:$0xf]
      %v1878 = vld [vmem:[%s712 + $0x28] sm:$0xf]
      %v1879 = vld [vmem:[%s712 + $0x2c] sm:$0xf]
      %v1880 = vld [vmem:[%s712 + $0x30] sm:$0xf]
      %v1881 = vld [vmem:[%s712 + $0x34] sm:$0xf]
      %v1882 = vld [vmem:[%s712 + $0x38] sm:$0xf]
      %v1883 = vld [vmem:[%s712 + $0x3c] sm:$0xf]
      %v1884 = vld [vmem:[%s715] sm:$0x1]
      %v1886 = vlaneseq
      %v1887 = vshrl.u32 %v1886, 7
      %v1888 = vsub.s32 0, %v1887
      %v1889 = vrot.slane %v1884, %v1888
      %v1907 = vunpack.c.l.b16 %v1868
      %v1908 = vunpack.c.l.b16 %v1869
      %v1909 = vunpack.c.l.b16 %v1870
      %v1910 = vunpack.c.l.b16 %v1871
      %v1911 = vunpack.c.l.b16 %v1872
      %v1912 = vunpack.c.l.b16 %v1873
      %v1913 = vunpack.c.l.b16 %v1874
      %v1914 = vunpack.c.l.b16 %v1875
      %v1915 = vunpack.c.l.b16 %v1876
      %v1916 = vunpack.c.l.b16 %v1877
      %v1917 = vunpack.c.l.b16 %v1878
      %v1918 = vunpack.c.l.b16 %v1879
      %v1919 = vunpack.c.l.b16 %v1880
      %v1920 = vunpack.c.l.b16 %v1881
      %v1921 = vunpack.c.l.b16 %v1882
      %v1922 = vunpack.c.l.b16 %v1883
      %v1923 = vpack.c.b16 %v1908, %v1907
      %v1924 = vpack.c.b16 %v1910, %v1909
      %v1925 = vpack.c.b16 %v1912, %v1911
      %v1926 = vpack.c.b16 %v1914, %v1913
      %v1927 = vpack.c.b16 %v1916, %v1915
      %v1928 = vpack.c.b16 %v1918, %v1917
      %v1929 = vpack.c.b16 %v1920, %v1919
      %v1930 = vpack.c.b16 %v1922, %v1921
      %1939 = vmatprep.subr.bf16.mxu0 0
      %1940 = vmatpush1.bf16.msra.mxu0 %v1923
      %1941 = vmatprep.subr.bf16.mxu0 0
      %1942 = vmatpush1.bf16.msra.mxu0 %v1924
      %1943 = vmatprep.subr.bf16.mxu0 0
      %1944 = vmatpush1.bf16.msra.mxu0 %v1925
      %1945 = vmatprep.subr.bf16.mxu0 0
      %1946 = vmatpush1.bf16.msra.mxu0 %v1926
      %1947 = vmatprep.subr.bf16.mxu0 0
      %1948 = vmatpush1.bf16.msra.mxu0 %v1927
      %1949 = vmatprep.subr.bf16.mxu0 0
      %1950 = vmatpush1.bf16.msra.mxu0 %v1928
      %1951 = vmatprep.subr.bf16.mxu0 0
      %1952 = vmatpush1.bf16.msra.mxu0 %v1929
      %1953 = vmatprep.subr.bf16.mxu0 0
      %1954 = vmatpush1.bf16.msra.mxu0 %v1930
      %1955 = vmatprep.subr.bf16.mxu0 0
      %1956 = vmatpush1.bf16.msra.mxu0 0
      %1957 = vmatprep.subr.bf16.mxu0 0
      %1958 = vmatpush1.bf16.msra.mxu0 0
      %1959 = vmatprep.subr.bf16.mxu0 0
      %1960 = vmatpush1.bf16.msra.mxu0 0
      %1961 = vmatprep.subr.bf16.mxu0 0
      %1962 = vmatpush1.bf16.msra.mxu0 0
      %1963 = vmatprep.subr.bf16.mxu0 0
      %1964 = vmatpush1.bf16.msra.mxu0 0
      %1965 = vmatprep.subr.bf16.mxu0 0
      %1966 = vmatpush1.bf16.msra.mxu0 0
      %1967 = vmatprep.subr.bf16.mxu0 0
      %1968 = vmatpush1.bf16.msra.mxu0 0
      %1969 = vmatprep.subr.bf16.mxu0 0
      %1970 = vmatpush1.bf16.msra.mxu0 0
      %1971 = vmatprep.mubr.bf16.mxu0 0
      %1972 = vmatmul.mubr.bf16.gmra.mrb[0].mxu0 %v1867
      %v1973 = vpop.f32.mrb[0].mxu0
      %v1974 = vadd.f32 %v1889, %v1973
      %v1975 = vpop.f32.mrb[0].mxu0
      %v1976 = vpop.f32.mrb[0].mxu0
      %v1977 = vadd.f32 %v1889, %v1976
      %v1978 = vpop.f32.mrb[0].mxu0
      %1979 = vdwg.mxu0
      %v1980 = vadd.f32 %v1701, %v1974
      %v1981 = vadd.f32 %v1702, %v1977
      %1982 = vst.msk [vmem:[#allocation2] sm:$0xff] %vm736, %v1980
      %1983 = vst.msk [vmem:[#allocation2 + $0x8] sm:$0xff] %vm736, %v1981
      %p1984 = scmp.eq.s32.totalorder %s31, 4
      // Predicated region
      $region85: #{rel_emb_transformer_forward.2} parent=79 // pred_check
        %p1985 = pneg %p1984
      $region86: #{rel_emb_transformer_forward.2} parent=79 // pred_check_branch
        %1987 = sbr.rel (%p1985) target = $region88
      $region87: #{rel_emb_transformer_forward.2} parent=79 // pred_region
        %v1988 = vpack.c.bf16 %v1980, %v1980
        %v1989 = vpack.c.bf16 %v1981, %v1981
        %vm1990 = vcmask 257024
        %1991 = vst.msk [vmem:[%s720] sm:$0xf] %vm1990, %v1988
        %1992 = vst.msk [vmem:[%s720 + $0x4] sm:$0xf] %vm1990, %v1989
      $region88: #{rel_emb_transformer_forward.2} parent=79 // pred_fallthru
        _
      %s1993 = smul.u32 2, %s30
      %p1994 = scmp.lt.s32.totalorder %s1993, 1
      %s1995 = scalar_select %p1994, %s1993, 1
      %s1996 = smul.addr %s1995, 4
      %s1997 = scalar_lea.vmem %s15, %s1996
      // Predicated region
      $region89: #{rel_emb_transformer_forward.2} parent=79 // pred_check
        %p1998 = pneg %p441
      $region90: #{rel_emb_transformer_forward.2} parent=79 // pred_check_branch
        %2000 = sbr.rel (%p1998) target = $region92
      $region91: #{rel_emb_transformer_forward.2} parent=79 // pred_region
        %s2001 = smul.u32 2, %s30
      $region92: #{rel_emb_transformer_forward.2} parent=79 // pred_fallthru
        _
      // Predicated region
      $region93: #{rel_emb_transformer_forward.2} parent=79 // pred_check
        %p2002 = pneg %p441
      $region94: #{rel_emb_transformer_forward.2} parent=79 // pred_check_branch
        %2004 = sbr.rel (%p2002) target = $region96
      $region95: #{rel_emb_transformer_forward.2} parent=79 // pred_region
        %s2005 = smul.u32 2, %s30
        %p2006 = scmp.lt.s32.totalorder %s2005, 1
        %s2007 = scalar_select %p2006, %s2005, 1
        %s2008 = smul.addr %s2007, 4
        %s2009 = scalar_lea.vmem %s15, %s2008
      $region96: #{rel_emb_transformer_forward.2} parent=79 // pred_fallthru
        _
    $region80: #{rel_emb_transformer_forward.2} parent=5 // pred_fallthru
      _
    %p2010 = scmp.le.s32.totalorder 2, %s21
    // Predicated region
    $region97: #{rel_emb_transformer_forward.2} parent=5 // pred_check
      %p2011 = pneg %p2010
    $region98: #{rel_emb_transformer_forward.2} parent=5 // pred_check_branch
      %2013 = sbr.rel (%p2011) target = $region100
    $region99: #{rel_emb_transformer_forward.2} parent=5 // pred_region
      %s2014 = ssub.s32 %s21, 2
    $region100: #{rel_emb_transformer_forward.2} parent=5 // pred_fallthru
      _
  $region6: #{rel_emb_transformer_forward.2} parent=0 // loop_footer
    %s25 = sadd.s32 1, %s21
  $region7: #{rel_emb_transformer_forward.2} parent=0 // loop_footer_branch
    %20 = sbr.rel target = $region3
  $region8: #{rel_emb_transformer_forward.2} parent=0 // loop_exit
    _

</llo_original>
